<compile_context>
chip_gen: v6e
topology: v6e:2x2x1
jax: 0.10.0
libtpu: 0.0.40
codegen_flags: <defaults>
</compile_context>

<pallas_src>
import jax
import jax.numpy as jnp
import numpy as np
from jax.experimental import pallas as pl
from jax.experimental.pallas import tpu as pltpu


def _fixup_block_kernel(params_ref, x_ref, w1_ref, w2_ref, o_ref,
                        pad1_ref, pad2_ref):
    # params_ref (SMEM): [bias1a, bias1b, bias2a, bias2b, scale]
    _, H, W, C = x_ref.shape            # C = channel-padded width (mult of 128)

    bias1a = params_ref[0]
    bias1b = params_ref[1]
    bias2a = params_ref[2]
    bias2b = params_ref[3]
    scale = params_ref[4]

    # Zero the padded scratch buffers every step (negligible vs. the conv) so
    # the spatial border is zero regardless of how the "parallel" grid axis is
    # sharded across TensorCores on megacore parts.
    pad1_ref[...] = jnp.zeros_like(pad1_ref)
    pad2_ref[...] = jnp.zeros_like(pad2_ref)

    x = x_ref[0]                                                # (H, W, C) f32

    def conv3x3(pad_ref, w_ref):
        # im2col: 9 statically shifted windows of the zero-padded buffer,
        # concatenated along lanes -> one MXU contraction with K = 9*C.
        taps = []
        for kh in range(3):
            for kw in range(3):
                win = pad_ref[pl.ds(kh, H), pl.ds(kw, W), :]    # (H, W, C)
                taps.append(win.reshape(H * W, C))
        slab = jnp.concatenate(taps, axis=-1)                   # (H*W, 9*C)
        return jnp.dot(slab.astype(jnp.bfloat16), w_ref[...],
                       preferred_element_type=jnp.float32)      # (H*W, C) f32

    # conv1: pad the biased input with zeros (border stays zero).
    pad1_ref[pl.ds(1, H), pl.ds(1, W), :] = x + bias1a
    out = conv3x3(pad1_ref, w1_ref)
    out = jnp.maximum(out + bias1b, 0.0)                        # ReLU

    # conv2: its zero-padded input is relu(conv1 + bias1b) + bias2a.
    pad2_ref[pl.ds(1, H), pl.ds(1, W), :] = (out + bias2a).reshape(H, W, C)
    out = conv3x3(pad2_ref, w2_ref)

    # scale / bias / identity shortcut / final ReLU (f32 VPU path).
    out = out * scale + bias2b + x.reshape(H * W, C)
    o_ref[0] = jnp.maximum(out, 0.0).reshape(H, W, C)


def fixup_basic_block(x_nhwc, w1_khwio, w2_khwio, params, *, lane=128):
    """x_nhwc: (N,H,W,C) f32; w*: (3,3,Cin,Cout) f32; params: (5,) f32."""
    N, H, W, C = x_nhwc.shape
    P = w1_khwio.shape[-1]
    assert C == P, "identity shortcut requires inplanes == planes (no downsample)"
    assert w2_khwio.shape == (3, 3, P, P)

    # Lane-dense layout: pad channels to a multiple of 128 with zeros.
    Cp = max(lane, ((C + lane - 1) // lane) * lane)
    x_p = jnp.pad(x_nhwc, ((0, 0), (0, 0), (0, 0), (0, Cp - C)))

    # Pre-flatten weights to the exact matmul layout (9*Cp, Cp), bf16 operands.
    w1_p = jnp.pad(w1_khwio, ((0, 0), (0, 0), (0, Cp - C), (0, Cp - P)))
    w2_p = jnp.pad(w2_khwio, ((0, 0), (0, 0), (0, Cp - P), (0, Cp - P)))
    w1_p = w1_p.reshape(9 * Cp, Cp).astype(jnp.bfloat16)
    w2_p = w2_p.reshape(9 * Cp, Cp).astype(jnp.bfloat16)

    flops = 2 * (2 * 9 * H * W * Cp * Cp) * N          # two 3x3 convs per image
    bytes_accessed = (x_p.size + N * H * W * Cp) * 4 + (w1_p.size + w2_p.size) * 2

    out_p = pl.pallas_call(
        _fixup_block_kernel,
        out_shape=jax.ShapeDtypeStruct((N, H, W, Cp), jnp.float32),
        grid=(N,),
        in_specs=[
            pl.BlockSpec(memory_space=pltpu.SMEM),                     # scalars
            pl.BlockSpec((1, H, W, Cp), lambda n: (n, 0, 0, 0)),       # x (per-image)
            pl.BlockSpec((9 * Cp, Cp), lambda n: (0, 0)),              # conv1 weight (resident)
            pl.BlockSpec((9 * Cp, Cp), lambda n: (0, 0)),              # conv2 weight (resident)
        ],
        out_specs=pl.BlockSpec((1, H, W, Cp), lambda n: (n, 0, 0, 0)),
        scratch_shapes=[
            pltpu.VMEM((H + 2, W + 2, Cp), jnp.float32),               # padded conv1 input
            pltpu.VMEM((H + 2, W + 2, Cp), jnp.float32),               # padded conv2 input
        ],
        compiler_params=pltpu.CompilerParams(
            dimension_semantics=("parallel",),
            vmem_limit_bytes=32 * 1024 * 1024),
        cost_estimate=pl.CostEstimate(flops=flops, transcendentals=0,
                                      bytes_accessed=bytes_accessed),
    )(params, x_p, w1_p, w2_p)

    # Drop the padded output channels.
    return out_p[..., :P]


def _reference_nchw(x, w1_oihw, w2_oihw, b1a, b1b, b2a, b2b, scale):
    """Pure-JAX f32 reference matching the PyTorch forward (NCHW)."""
    conv = lambda a, w: jax.lax.conv_general_dilated(
        a, w, window_strides=(1, 1), padding=((1, 1), (1, 1)),
        dimension_numbers=("NCHW", "OIHW", "NCHW"))
    out = conv(x + b1a, w1_oihw)
    out = jax.nn.relu(out + b1b)
    out = conv(out + b2a, w2_oihw)
    out = out * scale + b2b
    out = out + x
    return jax.nn.relu(out)


if __name__ == "__main__":
    key = jax.random.PRNGKey(0)
    k_x, k_w1, k_w2 = jax.random.split(key, 3)

    N, C, H, W = 2, 4, 16, 16      # inplanes == planes, stride 1 (no downsample)
    P = C

    # Input in PyTorch NCHW convention.
    x_nchw = jax.random.normal(k_x, (N, C, H, W), dtype=jnp.float32)

    # Conv weights random; use non-trivial scalar parameters to exercise all paths.
    w1_oihw = 0.1 * jax.random.normal(k_w1, (P, C, 3, 3), dtype=jnp.float32)
    w2_oihw = 0.1 * jax.random.normal(k_w2, (P, P, 3, 3), dtype=jnp.float32)
    bias1a, bias1b, bias2a, bias2b, scale = 0.1, -0.05, 0.07, 0.02, 1.2
    params = jnp.array([bias1a, bias1b, bias2a, bias2b, scale], dtype=jnp.float32)

    # Glue: convert to kernel layout (NHWC activations, (kh,kw,Cin,Cout) weights).
    x_nhwc = jnp.transpose(x_nchw, (0, 2, 3, 1))
    w1_k = jnp.transpose(w1_oihw, (2, 3, 1, 0))
    w2_k = jnp.transpose(w2_oihw, (2, 3, 1, 0))

    out_nhwc = fixup_basic_block(x_nhwc, w1_k, w2_k, params)
    out_nhwc = jax.block_until_ready(out_nhwc)
    out_nchw = jnp.transpose(out_nhwc, (0, 3, 1, 2))

    ref = _reference_nchw(x_nchw, w1_oihw, w2_oihw,
                          bias1a, bias1b, bias2a, bias2b, scale)
    # Tolerance accounts for bf16 MXU operands (f32 accumulation); typical
    # error is ~3e-3, worst-case tails well under 5e-2 at these magnitudes.
    np.testing.assert_allclose(np.asarray(out_nchw), np.asarray(ref),
                               rtol=5e-2, atol=5e-2)
    print("KERNEL_OK")
</pallas_src>

<mosaic_0001>
module attributes {stable_mosaic.version = 11 : i64} {
  func.func @_fixup_block_kernel(%arg0: i32, %arg1: memref<5xf32, #tpu.memory_space<smem>>, %arg2: memref<1x16x16x128xf32, #tpu.memory_space<vmem>>, %arg3: memref<1152x128xbf16, #tpu.memory_space<vmem>>, %arg4: memref<1152x128xbf16, #tpu.memory_space<vmem>>, %arg5: memref<1x16x16x128xf32, #tpu.memory_space<vmem>>, %arg6: memref<18x18x128xf32, #tpu.memory_space<vmem>>, %arg7: memref<18x18x128xf32, #tpu.memory_space<vmem>>) attributes {dimension_semantics = [#tpu.dimension_semantics<parallel>], iteration_bounds = array<i64: 2>, scalar_prefetch = 0 : i64, scratch_operands = 2 : i64, tpu.core_type = #tpu.core_type<tc>, window_params = [{transform_indices = @transform_0, window_bounds = array<i64: 5>}, {transform_indices = @transform_1, window_bounds = array<i64: 1, 16, 16, 128>}, {pipeline_mode = #tpu.pipeline_mode<synchronous>, transform_indices = @transform_2, window_bounds = array<i64: 1152, 128>}, {pipeline_mode = #tpu.pipeline_mode<synchronous>, transform_indices = @transform_3, window_bounds = array<i64: 1152, 128>}, {transform_indices = @transform_4, window_bounds = array<i64: 1, 16, 16, 128>}]} {
    %c0 = arith.constant 0 : index
    %0 = memref.load %arg1[%c0] : memref<5xf32, #tpu.memory_space<smem>>
    %c1 = arith.constant 1 : index
    %1 = memref.load %arg1[%c1] : memref<5xf32, #tpu.memory_space<smem>>
    %c2 = arith.constant 2 : index
    %2 = memref.load %arg1[%c2] : memref<5xf32, #tpu.memory_space<smem>>
    %c3 = arith.constant 3 : index
    %3 = memref.load %arg1[%c3] : memref<5xf32, #tpu.memory_space<smem>>
    %c4 = arith.constant 4 : index
    %4 = memref.load %arg1[%c4] : memref<5xf32, #tpu.memory_space<smem>>
    %cst = arith.constant 0.000000e+00 : f32
    %5 = vector.broadcast %cst : f32 to vector<18x18x128xf32>
    %c0_0 = arith.constant 0 : index
    %c0_1 = arith.constant 0 : index
    %c0_2 = arith.constant 0 : index
    %6 = vector.load %arg6[%c0_0, %c0_1, %c0_2] : memref<18x18x128xf32, #tpu.memory_space<vmem>>, vector<18x18x128xf32>
    tpu.vector_store %arg6[%c0_0, %c0_1, %c0_2], %5 {strides = array<i32>} : memref<18x18x128xf32, #tpu.memory_space<vmem>>, vector<18x18x128xf32>,
    %cst_3 = arith.constant 0.000000e+00 : f32
    %7 = vector.broadcast %cst_3 : f32 to vector<18x18x128xf32>
    %c0_4 = arith.constant 0 : index
    %c0_5 = arith.constant 0 : index
    %c0_6 = arith.constant 0 : index
    %8 = vector.load %arg7[%c0_4, %c0_5, %c0_6] : memref<18x18x128xf32, #tpu.memory_space<vmem>>, vector<18x18x128xf32>
    tpu.vector_store %arg7[%c0_4, %c0_5, %c0_6], %7 {strides = array<i32>} : memref<18x18x128xf32, #tpu.memory_space<vmem>>, vector<18x18x128xf32>,
    %c0_7 = arith.constant 0 : index
    %c0_8 = arith.constant 0 : index
    %c0_9 = arith.constant 0 : index
    %c0_10 = arith.constant 0 : index
    %9 = vector.load %arg2[%c0_7, %c0_8, %c0_9, %c0_10] : memref<1x16x16x128xf32, #tpu.memory_space<vmem>>, vector<1x16x16x128xf32>
    %10 = vector.shape_cast %9 : vector<1x16x16x128xf32> to vector<16x16x128xf32>
    %11 = vector.broadcast %0 : f32 to vector<16x16x128xf32>
    %12 = arith.addf %10, %11 : vector<16x16x128xf32>
    %c1_11 = arith.constant 1 : index
    %c1_12 = arith.constant 1 : index
    %c0_13 = arith.constant 0 : index
    %13 = vector.load %arg6[%c1_11, %c1_12, %c0_13] : memref<18x18x128xf32, #tpu.memory_space<vmem>>, vector<16x16x128xf32>
    tpu.vector_store %arg6[%c1_11, %c1_12, %c0_13], %12 {strides = array<i32>} : memref<18x18x128xf32, #tpu.memory_space<vmem>>, vector<16x16x128xf32>,
    %c0_14 = arith.constant 0 : index
    %c0_15 = arith.constant 0 : index
    %c0_16 = arith.constant 0 : index
    %14 = vector.load %arg6[%c0_14, %c0_15, %c0_16] : memref<18x18x128xf32, #tpu.memory_space<vmem>>, vector<16x16x128xf32>
    %15 = vector.shape_cast %14 : vector<16x16x128xf32> to vector<256x128xf32>
    %c0_17 = arith.constant 0 : index
    %c1_18 = arith.constant 1 : index
    %c0_19 = arith.constant 0 : index
    %16 = vector.load %arg6[%c0_17, %c1_18, %c0_19] : memref<18x18x128xf32, #tpu.memory_space<vmem>>, vector<16x16x128xf32>
    %17 = vector.shape_cast %16 : vector<16x16x128xf32> to vector<256x128xf32>
    %c0_20 = arith.constant 0 : index
    %c2_21 = arith.constant 2 : index
    %c0_22 = arith.constant 0 : index
    %18 = vector.load %arg6[%c0_20, %c2_21, %c0_22] : memref<18x18x128xf32, #tpu.memory_space<vmem>>, vector<16x16x128xf32>
    %19 = vector.shape_cast %18 : vector<16x16x128xf32> to vector<256x128xf32>
    %c1_23 = arith.constant 1 : index
    %c0_24 = arith.constant 0 : index
    %c0_25 = arith.constant 0 : index
    %20 = vector.load %arg6[%c1_23, %c0_24, %c0_25] : memref<18x18x128xf32, #tpu.memory_space<vmem>>, vector<16x16x128xf32>
    %21 = vector.shape_cast %20 : vector<16x16x128xf32> to vector<256x128xf32>
    %c1_26 = arith.constant 1 : index
    %c1_27 = arith.constant 1 : index
    %c0_28 = arith.constant 0 : index
    %22 = vector.load %arg6[%c1_26, %c1_27, %c0_28] : memref<18x18x128xf32, #tpu.memory_space<vmem>>, vector<16x16x128xf32>
    %23 = vector.shape_cast %22 : vector<16x16x128xf32> to vector<256x128xf32>
    %c1_29 = arith.constant 1 : index
    %c2_30 = arith.constant 2 : index
    %c0_31 = arith.constant 0 : index
    %24 = vector.load %arg6[%c1_29, %c2_30, %c0_31] : memref<18x18x128xf32, #tpu.memory_space<vmem>>, vector<16x16x128xf32>
    %25 = vector.shape_cast %24 : vector<16x16x128xf32> to vector<256x128xf32>
    %c2_32 = arith.constant 2 : index
    %c0_33 = arith.constant 0 : index
    %c0_34 = arith.constant 0 : index
    %26 = vector.load %arg6[%c2_32, %c0_33, %c0_34] : memref<18x18x128xf32, #tpu.memory_space<vmem>>, vector<16x16x128xf32>
    %27 = vector.shape_cast %26 : vector<16x16x128xf32> to vector<256x128xf32>
    %c2_35 = arith.constant 2 : index
    %c1_36 = arith.constant 1 : index
    %c0_37 = arith.constant 0 : index
    %28 = vector.load %arg6[%c2_35, %c1_36, %c0_37] : memref<18x18x128xf32, #tpu.memory_space<vmem>>, vector<16x16x128xf32>
    %29 = vector.shape_cast %28 : vector<16x16x128xf32> to vector<256x128xf32>
    %c2_38 = arith.constant 2 : index
    %c2_39 = arith.constant 2 : index
    %c0_40 = arith.constant 0 : index
    %30 = vector.load %arg6[%c2_38, %c2_39, %c0_40] : memref<18x18x128xf32, #tpu.memory_space<vmem>>, vector<16x16x128xf32>
    %31 = vector.shape_cast %30 : vector<16x16x128xf32> to vector<256x128xf32>
    %32 = tpu.concatenate %15, %17, %19, %21, %23, %25, %27, %29, %31 in 1 : vector<256x128xf32>, vector<256x128xf32>, vector<256x128xf32>, vector<256x128xf32>, vector<256x128xf32>, vector<256x128xf32>, vector<256x128xf32>, vector<256x128xf32>, vector<256x128xf32> -> vector<256x1152xf32>
    %33 = arith.truncf %32 : vector<256x1152xf32> to vector<256x1152xbf16>
    %c0_41 = arith.constant 0 : index
    %c0_42 = arith.constant 0 : index
    %34 = vector.load %arg3[%c0_41, %c0_42] : memref<1152x128xbf16, #tpu.memory_space<vmem>>, vector<1152x128xbf16>
    %cst_43 = arith.constant dense<0.000000e+00> : vector<256x128xf32>
    %35 = tpu.matmul %33, %34, %cst_43 {dimension_numbers = #tpu.dot_dimension_numbers<[1], [0], [0], [1], [0, 0, 1, 1], [], []>} : vector<256x1152xbf16>, vector<1152x128xbf16>, vector<256x128xf32> -> vector<256x128xf32>
    %36 = vector.broadcast %1 : f32 to vector<256x128xf32>
    %37 = arith.addf %35, %36 : vector<256x128xf32>
    %cst_44 = arith.constant 0.000000e+00 : f32
    %38 = vector.broadcast %cst_44 : f32 to vector<256x128xf32>
    %39 = arith.maximumf %37, %38 : vector<256x128xf32>
    %40 = vector.broadcast %2 : f32 to vector<256x128xf32>
    %41 = arith.addf %39, %40 : vector<256x128xf32>
    %42 = vector.shape_cast %41 : vector<256x128xf32> to vector<16x16x128xf32>
    %c1_45 = arith.constant 1 : index
    %c1_46 = arith.constant 1 : index
    %c0_47 = arith.constant 0 : index
    %43 = vector.load %arg7[%c1_45, %c1_46, %c0_47] : memref<18x18x128xf32, #tpu.memory_space<vmem>>, vector<16x16x128xf32>
    tpu.vector_store %arg7[%c1_45, %c1_46, %c0_47], %42 {strides = array<i32>} : memref<18x18x128xf32, #tpu.memory_space<vmem>>, vector<16x16x128xf32>,
    %c0_48 = arith.constant 0 : index
    %c0_49 = arith.constant 0 : index
    %c0_50 = arith.constant 0 : index
    %44 = vector.load %arg7[%c0_48, %c0_49, %c0_50] : memref<18x18x128xf32, #tpu.memory_space<vmem>>, vector<16x16x128xf32>
    %45 = vector.shape_cast %44 : vector<16x16x128xf32> to vector<256x128xf32>
    %c0_51 = arith.constant 0 : index
    %c1_52 = arith.constant 1 : index
    %c0_53 = arith.constant 0 : index
    %46 = vector.load %arg7[%c0_51, %c1_52, %c0_53] : memref<18x18x128xf32, #tpu.memory_space<vmem>>, vector<16x16x128xf32>
    %47 = vector.shape_cast %46 : vector<16x16x128xf32> to vector<256x128xf32>
    %c0_54 = arith.constant 0 : index
    %c2_55 = arith.constant 2 : index
    %c0_56 = arith.constant 0 : index
    %48 = vector.load %arg7[%c0_54, %c2_55, %c0_56] : memref<18x18x128xf32, #tpu.memory_space<vmem>>, vector<16x16x128xf32>
    %49 = vector.shape_cast %48 : vector<16x16x128xf32> to vector<256x128xf32>
    %c1_57 = arith.constant 1 : index
    %c0_58 = arith.constant 0 : index
    %c0_59 = arith.constant 0 : index
    %50 = vector.load %arg7[%c1_57, %c0_58, %c0_59] : memref<18x18x128xf32, #tpu.memory_space<vmem>>, vector<16x16x128xf32>
    %51 = vector.shape_cast %50 : vector<16x16x128xf32> to vector<256x128xf32>
    %c1_60 = arith.constant 1 : index
    %c1_61 = arith.constant 1 : index
    %c0_62 = arith.constant 0 : index
    %52 = vector.load %arg7[%c1_60, %c1_61, %c0_62] : memref<18x18x128xf32, #tpu.memory_space<vmem>>, vector<16x16x128xf32>
    %53 = vector.shape_cast %52 : vector<16x16x128xf32> to vector<256x128xf32>
    %c1_63 = arith.constant 1 : index
    %c2_64 = arith.constant 2 : index
    %c0_65 = arith.constant 0 : index
    %54 = vector.load %arg7[%c1_63, %c2_64, %c0_65] : memref<18x18x128xf32, #tpu.memory_space<vmem>>, vector<16x16x128xf32>
    %55 = vector.shape_cast %54 : vector<16x16x128xf32> to vector<256x128xf32>
    %c2_66 = arith.constant 2 : index
    %c0_67 = arith.constant 0 : index
    %c0_68 = arith.constant 0 : index
    %56 = vector.load %arg7[%c2_66, %c0_67, %c0_68] : memref<18x18x128xf32, #tpu.memory_space<vmem>>, vector<16x16x128xf32>
    %57 = vector.shape_cast %56 : vector<16x16x128xf32> to vector<256x128xf32>
    %c2_69 = arith.constant 2 : index
    %c1_70 = arith.constant 1 : index
    %c0_71 = arith.constant 0 : index
    %58 = vector.load %arg7[%c2_69, %c1_70, %c0_71] : memref<18x18x128xf32, #tpu.memory_space<vmem>>, vector<16x16x128xf32>
    %59 = vector.shape_cast %58 : vector<16x16x128xf32> to vector<256x128xf32>
    %c2_72 = arith.constant 2 : index
    %c2_73 = arith.constant 2 : index
    %c0_74 = arith.constant 0 : index
    %60 = vector.load %arg7[%c2_72, %c2_73, %c0_74] : memref<18x18x128xf32, #tpu.memory_space<vmem>>, vector<16x16x128xf32>
    %61 = vector.shape_cast %60 : vector<16x16x128xf32> to vector<256x128xf32>
    %62 = tpu.concatenate %45, %47, %49, %51, %53, %55, %57, %59, %61 in 1 : vector<256x128xf32>, vector<256x128xf32>, vector<256x128xf32>, vector<256x128xf32>, vector<256x128xf32>, vector<256x128xf32>, vector<256x128xf32>, vector<256x128xf32>, vector<256x128xf32> -> vector<256x1152xf32>
    %63 = arith.truncf %62 : vector<256x1152xf32> to vector<256x1152xbf16>
    %c0_75 = arith.constant 0 : index
    %c0_76 = arith.constant 0 : index
    %64 = vector.load %arg4[%c0_75, %c0_76] : memref<1152x128xbf16, #tpu.memory_space<vmem>>, vector<1152x128xbf16>
    %cst_77 = arith.constant dense<0.000000e+00> : vector<256x128xf32>
    %65 = tpu.matmul %63, %64, %cst_77 {dimension_numbers = #tpu.dot_dimension_numbers<[1], [0], [0], [1], [0, 0, 1, 1], [], []>} : vector<256x1152xbf16>, vector<1152x128xbf16>, vector<256x128xf32> -> vector<256x128xf32>
    %66 = vector.broadcast %4 : f32 to vector<256x128xf32>
    %67 = arith.mulf %65, %66 : vector<256x128xf32>
    %68 = vector.broadcast %3 : f32 to vector<256x128xf32>
    %69 = arith.addf %67, %68 : vector<256x128xf32>
    %70 = vector.shape_cast %10 : vector<16x16x128xf32> to vector<256x128xf32>
    %71 = arith.addf %69, %70 : vector<256x128xf32>
    %cst_78 = arith.constant 0.000000e+00 : f32
    %72 = vector.broadcast %cst_78 : f32 to vector<256x128xf32>
    %73 = arith.maximumf %71, %72 : vector<256x128xf32>
    %74 = vector.shape_cast %73 : vector<256x128xf32> to vector<16x16x128xf32>
    %c0_79 = arith.constant 0 : index
    %c0_80 = arith.constant 0 : index
    %c0_81 = arith.constant 0 : index
    %c0_82 = arith.constant 0 : index
    %75 = vector.load %arg5[%c0_79, %c0_80, %c0_81, %c0_82] : memref<1x16x16x128xf32, #tpu.memory_space<vmem>>, vector<1x16x16x128xf32>
    %76 = vector.shape_cast %75 : vector<1x16x16x128xf32> to vector<16x16x128xf32>
    %77 = vector.shape_cast %74 : vector<16x16x128xf32> to vector<1x16x16x128xf32>
    tpu.vector_store %arg5[%c0_79, %c0_80, %c0_81, %c0_82], %77 {strides = array<i32>} : memref<1x16x16x128xf32, #tpu.memory_space<vmem>>, vector<1x16x16x128xf32>,
    return
  }
  func.func @transform_0(%arg0: i32) -> i32 {
    %c0_i32 = arith.constant 0 : i32
    %c0_i32_0 = arith.constant 0 : i32
    return %c0_i32 : i32
  }
  func.func @transform_1(%arg0: i32) -> (i32, i32, i32, i32) {
    %c0_i32 = arith.constant 0 : i32
    %c0_i32_0 = arith.constant 0 : i32
    %c0_i32_1 = arith.constant 0 : i32
    %c0_i32_2 = arith.constant 0 : i32
    return %arg0, %c0_i32, %c0_i32_0, %c0_i32_1 : i32, i32, i32, i32
  }
  func.func @transform_2(%arg0: i32) -> (i32, i32) {
    %c0_i32 = arith.constant 0 : i32
    %c0_i32_0 = arith.constant 0 : i32
    %c0_i32_1 = arith.constant 0 : i32
    return %c0_i32, %c0_i32_0 : i32, i32
  }
  func.func @transform_3(%arg0: i32) -> (i32, i32) {
    %c0_i32 = arith.constant 0 : i32
    %c0_i32_0 = arith.constant 0 : i32
    %c0_i32_1 = arith.constant 0 : i32
    return %c0_i32, %c0_i32_0 : i32, i32
  }
  func.func @transform_4(%arg0: i32) -> (i32, i32, i32, i32) {
    %c0_i32 = arith.constant 0 : i32
    %c0_i32_0 = arith.constant 0 : i32
    %c0_i32_1 = arith.constant 0 : i32
    %c0_i32_2 = arith.constant 0 : i32
    return %arg0, %c0_i32, %c0_i32_0, %c0_i32_1 : i32, i32, i32, i32
  }
}

</mosaic_0001>

<llo_original>
// kernel: tpu_custom_call.1
$region0: #{tpu_custom_call.1}
  #allocation0 [shape = 'u32[]', space=smem, size = 0x4, offset = 0x4, fixed_abs, tag = 'smem constant byte address 0x4 - core index']
  #allocation1 [shape = 'u32[144,128]{1,0:T(1,128)}', space=vmem, size = 0x12000, scoped, tag = 'internal scratch']
  #allocation2 [shape = 'f32[18,18,128]{2,1,0:T(8,128)}', space=vmem, size = 0x36000, scoped, tag = 'scratch operand']
  #allocation3 [shape = 'f32[18,18,128]{2,1,0:T(8,128)}', space=vmem, size = 0x36000, scoped, tag = 'scratch operand']
  %s0 = inlined_call_operand.hbm [shape: f32[5], index: 0, kind: input, shape index: {}]
  %s1 = inlined_call_operand.hbm [shape: f32[2,16,16,128], index: 1, kind: input, shape index: {}]
  %s2 = inlined_call_operand.hbm [shape: bf16[1152,128], index: 2, kind: input, shape index: {}]
  %s3 = inlined_call_operand.hbm [shape: bf16[1152,128], index: 3, kind: input, shape index: {}]
  %s4 = inlined_call_operand.hbm [shape: f32[2,16,16,128], index: 4, kind: output, shape index: {}]
  %s5 = sld [smem:[#allocation0]]
  $region65: #{tpu_custom_call.1} parent=0
    _
  %s7 = ssub.s32 1, %s5
  %s8 = scalar_select 0, %s7, %s5
  $region1: #{tpu_custom_call.1} parent=0
    #allocation4 [shape = 'u8[512]{0}', space=smem, size = 0x200, scoped, tag = 'input window, operand 0, single buffered']
    #allocation5 [shape = 's32[2]{0}', space=sflag, size = 0x8, scoped, tag = 'scoped memory for tpu_custom_call.1']
    #allocation6 [shape = 's32[2]{0}', space=sflag, size = 0x8, scoped, tag = 'scoped memory for tpu_custom_call.1']
    #allocation7 [shape = 's32[2]{0}', space=sflag, size = 0x8, scoped, tag = 'scoped memory for tpu_custom_call.1']
    #allocation8 [shape = 'u8[262144]{0}', space=vmem, size = 0x40000, scoped, tag = 'input window, operand 1']
    #allocation9 [shape = 'u8[294912]{0}', space=vmem, size = 0x48000, scoped, tag = 'input window, operand 2, single buffered']
    #allocation10 [shape = 's32[1]{0}', space=sflag, size = 0x4, scoped, tag = 'scoped memory for tpu_custom_call.1']
    #allocation11 [shape = 'u8[294912]{0}', space=vmem, size = 0x48000, scoped, tag = 'input window, operand 3, single buffered']
    #allocation12 [shape = 'u8[262144]{0}', space=vmem, size = 0x40000, scoped, tag = 'output window, operand 0']
    %9 = vsyncpa [#allocation7], 0
    %10 = vsyncpa [#allocation5], 0
    %s11 = scalar_lea.sflag [#allocation5], 1
    %12 = vsyncpa %s11, 0
    %13 = vsyncpa [#allocation10], 0
    %14 = vsyncpa [#allocation6], 0
    %s15 = scalar_lea.sflag [#allocation6], 1
    %16 = vsyncpa %s15, 0
    loop: start=0, step=1, limit=4
    $region2: #{tpu_custom_call.1} parent=1 // loop_pre_header
      _
    $region3: #{tpu_custom_call.1} parent=1 // loop_header
      %s18 = sphi 0, %s22
      %p19 = scmp.ge.s32.totalorder %s18, 4
      %s26 = sphi 0, %s26
      %s28 = sphi 0, %s26
      %s29 = sphi 0, %s28
      %s43 = sphi 0, %s29
      %s49 = sphi 0, %s51
      %s52 = sphi 0, %s49
      %s53 = sphi 0, %s52
      %s69 = sphi 0, %s53
      %s73 = sphi 0, %s73
      %s75 = sphi 0, %s73
      %s76 = sphi 0, %s75
      %s90 = sphi 0, %s76
      %s94 = sphi 0, %s94
      %s96 = sphi 0, %s94
      %s97 = sphi 0, %s96
      %s111 = sphi 0, %s97
      %s117 = sphi 0, %s119
      %s120 = sphi 0, %s117
      %s121 = sphi 0, %s120
      %s137 = sphi 0, %s121
    $region4: #{tpu_custom_call.1} parent=1 // loop_header_branch
      %21 = sbr.rel (%p19) target = $region8
    $region5: #{tpu_custom_call.1} parent=1 // loop_body
      %s23 = ssub.s32 %s18, 1
      %s24 = ssub.s32 %s18, 2
      %s25 = sadd.s32 %s18, 1
      %s27 = sadd.s32 %s26, 1
      %p30 = scmp.eq.s32.totalorder %s18, 1
      %p31 = scmp.ne.s32.totalorder %s26, %s28
      %p32 = scmp.eq.s32.totalorder %s18, 0
      %p33 = por %p31, %p32
      %p34 = scmp.ne.s32.totalorder %s26, %s28
      %p35 = scmp.eq.s32.totalorder %s23, 1
      %p36 = por %p34, %p35
      %p37 = scmp.ne.s32.totalorder %s28, %s29
      %p38 = scmp.eq.s32.totalorder %s23, 0
      %p39 = por %p37, %p38
      %p40 = scmp.ne.s32.totalorder %s28, %s29
      %p41 = scmp.eq.s32.totalorder %s24, 1
      %p42 = por %p40, %p41
      %p44 = scmp.ne.s32.totalorder %s29, %s43
      %p45 = scmp.eq.s32.totalorder %s24, 0
      %p46 = por %p44, %p45
      %s47 = ssub.s32 %s18, %s25
      %p48 = scmp.eq.s32.totalorder %s47, 0
      %s50 = sadd.s32 %s49, 1
      %s51 = scalar_select %p48, %s49, %s50
      %p54 = pneg %p48
      %p55 = scmp.eq.s32.totalorder %s18, 1
      %p56 = por %p54, %p55
      %p57 = scmp.ne.s32.totalorder %s49, %s52
      %p58 = scmp.eq.s32.totalorder %s18, 0
      %p59 = por %p57, %p58
      %p60 = scmp.ne.s32.totalorder %s49, %s52
      %p61 = scmp.eq.s32.totalorder %s23, 1
      %p62 = por %p60, %p61
      %p63 = scmp.ne.s32.totalorder %s52, %s53
      %p64 = scmp.eq.s32.totalorder %s23, 0
      %p65 = por %p63, %p64
      %p66 = scmp.ne.s32.totalorder %s52, %s53
      %p67 = scmp.eq.s32.totalorder %s24, 1
      %p68 = por %p66, %p67
      %p70 = scmp.ne.s32.totalorder %s53, %s69
      %p71 = scmp.eq.s32.totalorder %s24, 0
      %p72 = por %p70, %p71
      %s74 = sadd.s32 %s73, 1
      %p77 = scmp.eq.s32.totalorder %s18, 1
      %p78 = scmp.ne.s32.totalorder %s73, %s75
      %p79 = scmp.eq.s32.totalorder %s18, 0
      %p80 = por %p78, %p79
      %p81 = scmp.ne.s32.totalorder %s73, %s75
      %p82 = scmp.eq.s32.totalorder %s23, 1
      %p83 = por %p81, %p82
      %p84 = scmp.ne.s32.totalorder %s75, %s76
      %p85 = scmp.eq.s32.totalorder %s23, 0
      %p86 = por %p84, %p85
      %p87 = scmp.ne.s32.totalorder %s75, %s76
      %p88 = scmp.eq.s32.totalorder %s24, 1
      %p89 = por %p87, %p88
      %p91 = scmp.ne.s32.totalorder %s76, %s90
      %p92 = scmp.eq.s32.totalorder %s24, 0
      %p93 = por %p91, %p92
      %s95 = sadd.s32 %s94, 1
      %p98 = scmp.eq.s32.totalorder %s18, 1
      %p99 = scmp.ne.s32.totalorder %s94, %s96
      %p100 = scmp.eq.s32.totalorder %s18, 0
      %p101 = por %p99, %p100
      %p102 = scmp.ne.s32.totalorder %s94, %s96
      %p103 = scmp.eq.s32.totalorder %s23, 1
      %p104 = por %p102, %p103
      %p105 = scmp.ne.s32.totalorder %s96, %s97
      %p106 = scmp.eq.s32.totalorder %s23, 0
      %p107 = por %p105, %p106
      %p108 = scmp.ne.s32.totalorder %s96, %s97
      %p109 = scmp.eq.s32.totalorder %s24, 1
      %p110 = por %p108, %p109
      %p112 = scmp.ne.s32.totalorder %s97, %s111
      %p113 = scmp.eq.s32.totalorder %s24, 0
      %p114 = por %p112, %p113
      %s115 = ssub.s32 %s18, %s25
      %p116 = scmp.eq.s32.totalorder %s115, 0
      %s118 = sadd.s32 %s117, 1
      %s119 = scalar_select %p116, %s117, %s118
      %p122 = pneg %p116
      %p123 = scmp.eq.s32.totalorder %s18, 1
      %p124 = por %p122, %p123
      %p125 = scmp.ne.s32.totalorder %s117, %s120
      %p126 = scmp.eq.s32.totalorder %s18, 0
      %p127 = por %p125, %p126
      %p128 = scmp.ne.s32.totalorder %s117, %s120
      %p129 = scmp.eq.s32.totalorder %s23, 1
      %p130 = por %p128, %p129
      %p131 = scmp.ne.s32.totalorder %s120, %s121
      %p132 = scmp.eq.s32.totalorder %s23, 0
      %p133 = por %p131, %p132
      %p134 = scmp.ne.s32.totalorder %s120, %s121
      %p135 = scmp.eq.s32.totalorder %s24, 1
      %p136 = por %p134, %p135
      %p138 = scmp.ne.s32.totalorder %s121, %s137
      %p139 = scmp.eq.s32.totalorder %s24, 0
      %p140 = por %p138, %p139
      %p141 = scmp.le.s32.totalorder 1, %s18
      %p142 = scmp.lt.s32.totalorder %s18, 3
      %p143 = pnand %p141, %p142
      %p144 = pneg %p143
      // Predicated region
      $region9: #{tpu_custom_call.1} parent=5 // pred_check
        _
      $region10: #{tpu_custom_call.1} parent=5 // pred_check_branch
        %146 = sbr.rel (%p143) target = $region12
      $region11: #{tpu_custom_call.1} parent=5 // pred_region
        %s147 = ssub.s32 %s18, 1
        // Predicated region
        $region13: #{tpu_custom_call.1} parent=11 // pred_check
          %p148 = pneg %p39
        $region14: #{tpu_custom_call.1} parent=11 // pred_check_branch
          %150 = sbr.rel (%p148) target = $region16
        $region15: #{tpu_custom_call.1} parent=11 // pred_region
          %s152 = ssub.s32 16, 16
          %153 = vsyncadd [#allocation7], %s152
          %156 = dma.hbm_to_smem %s0, 16, [#allocation4], [#allocation7]
        $region16: #{tpu_custom_call.1} parent=11 // pred_fallthru
          _
        // Predicated region
        $region17: #{tpu_custom_call.1} parent=11 // pred_check
          %p157 = pneg %p86
        $region18: #{tpu_custom_call.1} parent=11 // pred_check_branch
          %159 = sbr.rel (%p157) target = $region20
        $region19: #{tpu_custom_call.1} parent=11 // pred_region
          %s161 = ssub.s32 9216, 9216
          %162 = vsyncadd [#allocation10], %s161
          %s163 = sshll.u32 [#allocation9], 4
          %s164 = int_to_ptr.vmem [resolvable:$true] %s163
          %169 = dma.hbm_to_vmem [thread:$0]  %s2, 9216, %s164, [#allocation10], 64, 64, 4
        $region20: #{tpu_custom_call.1} parent=11 // pred_fallthru
          _
        // Predicated region
        $region21: #{tpu_custom_call.1} parent=11 // pred_check
          %p170 = pneg %p107
        $region22: #{tpu_custom_call.1} parent=11 // pred_check_branch
          %172 = sbr.rel (%p170) target = $region24
        $region23: #{tpu_custom_call.1} parent=11 // pred_region
          %s174 = ssub.s32 9216, 9216
          %175 = vsyncadd [#allocation10], %s174
          %s176 = sshll.u32 [#allocation11], 4
          %s177 = int_to_ptr.vmem [resolvable:$true] %s176
          %182 = dma.hbm_to_vmem [thread:$0]  %s3, 9216, %s177, [#allocation10], 64, 64, 4
        $region24: #{tpu_custom_call.1} parent=11 // pred_fallthru
          _
      $region12: #{tpu_custom_call.1} parent=5 // pred_fallthru
        _
      %p183 = scmp.lt.s32.totalorder %s18, 2
      // Predicated region
      $region25: #{tpu_custom_call.1} parent=5 // pred_check
        %p184 = pneg %p183
      $region26: #{tpu_custom_call.1} parent=5 // pred_check_branch
        %186 = sbr.rel (%p184) target = $region28
      $region27: #{tpu_custom_call.1} parent=5 // pred_region
        // Predicated region
        $region29: #{tpu_custom_call.1} parent=27 // pred_check
          %p187 = pneg %p59
        $region30: #{tpu_custom_call.1} parent=27 // pred_check_branch
          %189 = sbr.rel (%p187) target = $region32
        $region31: #{tpu_custom_call.1} parent=27 // pred_region
          %s190 = sand.u32 %s49, 1
          %s191 = scalar_lea.sflag [#allocation5], %s190
          %s192 = sand.u32 %s49, 1
          %s193 = smul.addr %s192, 256
          %s194 = scalar_lea.vmem [#allocation8], %s193
          %s196 = ssub.s32 4096, 4096
          %197 = vsyncadd %s191, %s196
          %s198 = smul.addr %s18, 32
          %s199 = smul.addr %s198, 128
          %s200 = scalar_lea.hbm %s1, %s199
          %s201 = sshll.u32 %s194, 4
          %s202 = int_to_ptr.vmem [resolvable:$true] %s201
          %207 = dma.hbm_to_vmem [thread:$0]  %s200, 4096, %s202, %s191, 128, 128, 8
        $region32: #{tpu_custom_call.1} parent=27 // pred_fallthru
          _
      $region28: #{tpu_custom_call.1} parent=5 // pred_fallthru
        _
      %p208 = scmp.le.s32.totalorder 1, %s18
      %p209 = scmp.lt.s32.totalorder %s18, 3
      %p210 = pnand %p208, %p209
      %p211 = pneg %p210
      // Predicated region
      $region33: #{tpu_custom_call.1} parent=5 // pred_check
        _
      $region34: #{tpu_custom_call.1} parent=5 // pred_check_branch
        %213 = sbr.rel (%p210) target = $region36
      $region35: #{tpu_custom_call.1} parent=5 // pred_region
        %s214 = ssub.s32 %s18, 1
        // Predicated region
        $region37: #{tpu_custom_call.1} parent=35 // pred_check
          %p215 = pneg %p39
        $region38: #{tpu_custom_call.1} parent=35 // pred_check_branch
          %217 = sbr.rel (%p215) target = $region40
        $region39: #{tpu_custom_call.1} parent=35 // pred_region
          %218 = dma.done [#allocation7], 16
        $region40: #{tpu_custom_call.1} parent=35 // pred_fallthru
          _
        %s219 = sand.u32 %s52, 1
        %s220 = scalar_lea.sflag [#allocation5], %s219
        %s221 = sand.u32 %s52, 1
        %s222 = smul.addr %s221, 256
        %s223 = scalar_lea.vmem [#allocation8], %s222
        // Predicated region
        $region41: #{tpu_custom_call.1} parent=35 // pred_check
          %p224 = pneg %p65
        $region42: #{tpu_custom_call.1} parent=35 // pred_check_branch
          %226 = sbr.rel (%p224) target = $region44
        $region43: #{tpu_custom_call.1} parent=35 // pred_region
          %227 = dma.done %s220, 4096
        $region44: #{tpu_custom_call.1} parent=35 // pred_fallthru
          _
        // Predicated region
        $region45: #{tpu_custom_call.1} parent=35 // pred_check
          %p228 = pneg %p86
        $region46: #{tpu_custom_call.1} parent=35 // pred_check_branch
          %230 = sbr.rel (%p228) target = $region48
        $region47: #{tpu_custom_call.1} parent=35 // pred_region
          %231 = dma.done [#allocation10], 9216
        $region48: #{tpu_custom_call.1} parent=35 // pred_fallthru
          _
        // Predicated region
        $region49: #{tpu_custom_call.1} parent=35 // pred_check
          %p232 = pneg %p107
        $region50: #{tpu_custom_call.1} parent=35 // pred_check_branch
          %234 = sbr.rel (%p232) target = $region52
        $region51: #{tpu_custom_call.1} parent=35 // pred_region
          %235 = dma.done [#allocation10], 9216
        $region52: #{tpu_custom_call.1} parent=35 // pred_fallthru
          _
        %236 = sfence
        %p237 = pneg %p39
        %p238 = pneg %p36
        %s239 = sand.u32 %s52, 1
        %s240 = scalar_lea.sflag [#allocation5], %s239
        %s241 = sand.u32 %s52, 1
        %s242 = smul.addr %s241, 256
        %s243 = scalar_lea.vmem [#allocation8], %s242
        %p244 = pneg %p65
        %p245 = pneg %p62
        %p246 = pneg %p86
        %p247 = pneg %p83
        %p248 = pneg %p107
        %p249 = pneg %p104
        %p250 = pneg %p133
        %p251 = pneg %p130
        %s252 = sand.u32 %s120, 1
        %s253 = scalar_lea.sflag [#allocation6], %s252
        %s254 = sand.u32 %s120, 1
        %s255 = smul.addr %s254, 256
        %s256 = scalar_lea.vmem [#allocation12], %s255
        %s258 = sld [smem:[#allocation4]]
        %s259 = sld [smem:[#allocation4 + $0x1]]
        %s260 = sld [smem:[#allocation4 + $0x2]]
        %s261 = sld [smem:[#allocation4 + $0x3]]
        %s262 = sld [smem:[#allocation4 + $0x4]]
        %263 = vst [vmem:[#allocation2] sm:$0xff] 0.0
        %264 = vst [vmem:[#allocation2 + $0x8] sm:$0xff] 0.0
        %265 = vst [vmem:[#allocation2 + $0x10] sm:$0x3] 0.0
        %266 = vst [vmem:[#allocation2 + $0x18] sm:$0xff] 0.0
        %267 = vst [vmem:[#allocation2 + $0x20] sm:$0xff] 0.0
        %268 = vst [vmem:[#allocation2 + $0x28] sm:$0x3] 0.0
        %269 = vst [vmem:[#allocation2 + $0x30] sm:$0xff] 0.0
        %270 = vst [vmem:[#allocation2 + $0x38] sm:$0xff] 0.0
        %271 = vst [vmem:[#allocation2 + $0x40] sm:$0x3] 0.0
        %272 = vst [vmem:[#allocation2 + $0x48] sm:$0xff] 0.0
        %273 = vst [vmem:[#allocation2 + $0x50] sm:$0xff] 0.0
        %274 = vst [vmem:[#allocation2 + $0x58] sm:$0x3] 0.0
        %275 = vst [vmem:[#allocation2 + $0x60] sm:$0xff] 0.0
        %276 = vst [vmem:[#allocation2 + $0x68] sm:$0xff] 0.0
        %277 = vst [vmem:[#allocation2 + $0x70] sm:$0x3] 0.0
        %278 = vst [vmem:[#allocation2 + $0x78] sm:$0xff] 0.0
        %279 = vst [vmem:[#allocation2 + $0x80] sm:$0xff] 0.0
        %280 = vst [vmem:[#allocation2 + $0x88] sm:$0x3] 0.0
        %281 = vst [vmem:[#allocation2 + $0x90] sm:$0xff] 0.0
        %282 = vst [vmem:[#allocation2 + $0x98] sm:$0xff] 0.0
        %283 = vst [vmem:[#allocation2 + $0xa0] sm:$0x3] 0.0
        %284 = vst [vmem:[#allocation2 + $0xa8] sm:$0xff] 0.0
        %285 = vst [vmem:[#allocation2 + $0xb0] sm:$0xff] 0.0
        %286 = vst [vmem:[#allocation2 + $0xb8] sm:$0x3] 0.0
        %287 = vst [vmem:[#allocation2 + $0xc0] sm:$0xff] 0.0
        %288 = vst [vmem:[#allocation2 + $0xc8] sm:$0xff] 0.0
        %289 = vst [vmem:[#allocation2 + $0xd0] sm:$0x3] 0.0
        %290 = vst [vmem:[#allocation2 + $0xd8] sm:$0xff] 0.0
        %291 = vst [vmem:[#allocation2 + $0xe0] sm:$0xff] 0.0
        %292 = vst [vmem:[#allocation2 + $0xe8] sm:$0x3] 0.0
        %293 = vst [vmem:[#allocation2 + $0xf0] sm:$0xff] 0.0
        %294 = vst [vmem:[#allocation2 + $0xf8] sm:$0xff] 0.0
        %295 = vst [vmem:[#allocation2 + $0x100] sm:$0x3] 0.0
        %296 = vst [vmem:[#allocation2 + $0x108] sm:$0xff] 0.0
        %297 = vst [vmem:[#allocation2 + $0x110] sm:$0xff] 0.0
        %298 = vst [vmem:[#allocation2 + $0x118] sm:$0x3] 0.0
        %299 = vst [vmem:[#allocation2 + $0x120] sm:$0xff] 0.0
        %300 = vst [vmem:[#allocation2 + $0x128] sm:$0xff] 0.0
        %301 = vst [vmem:[#allocation2 + $0x130] sm:$0x3] 0.0
        %302 = vst [vmem:[#allocation2 + $0x138] sm:$0xff] 0.0
        %303 = vst [vmem:[#allocation2 + $0x140] sm:$0xff] 0.0
        %304 = vst [vmem:[#allocation2 + $0x148] sm:$0x3] 0.0
        %305 = vst [vmem:[#allocation2 + $0x150] sm:$0xff] 0.0
        %306 = vst [vmem:[#allocation2 + $0x158] sm:$0xff] 0.0
        %307 = vst [vmem:[#allocation2 + $0x160] sm:$0x3] 0.0
        %308 = vst [vmem:[#allocation2 + $0x168] sm:$0xff] 0.0
        %309 = vst [vmem:[#allocation2 + $0x170] sm:$0xff] 0.0
        %310 = vst [vmem:[#allocation2 + $0x178] sm:$0x3] 0.0
        %311 = vst [vmem:[#allocation2 + $0x180] sm:$0xff] 0.0
        %312 = vst [vmem:[#allocation2 + $0x188] sm:$0xff] 0.0
        %313 = vst [vmem:[#allocation2 + $0x190] sm:$0x3] 0.0
        %314 = vst [vmem:[#allocation2 + $0x198] sm:$0xff] 0.0
        %315 = vst [vmem:[#allocation2 + $0x1a0] sm:$0xff] 0.0
        %316 = vst [vmem:[#allocation2 + $0x1a8] sm:$0x3] 0.0
        %317 = vst [vmem:[#allocation3] sm:$0xff] 0.0
        %318 = vst [vmem:[#allocation3 + $0x8] sm:$0xff] 0.0
        %319 = vst [vmem:[#allocation3 + $0x10] sm:$0x3] 0.0
        %320 = vst [vmem:[#allocation3 + $0x18] sm:$0xff] 0.0
        %321 = vst [vmem:[#allocation3 + $0x20] sm:$0xff] 0.0
        %322 = vst [vmem:[#allocation3 + $0x28] sm:$0x3] 0.0
        %323 = vst [vmem:[#allocation3 + $0x30] sm:$0xff] 0.0
        %324 = vst [vmem:[#allocation3 + $0x38] sm:$0xff] 0.0
        %325 = vst [vmem:[#allocation3 + $0x40] sm:$0x3] 0.0
        %326 = vst [vmem:[#allocation3 + $0x48] sm:$0xff] 0.0
        %327 = vst [vmem:[#allocation3 + $0x50] sm:$0xff] 0.0
        %328 = vst [vmem:[#allocation3 + $0x58] sm:$0x3] 0.0
        %329 = vst [vmem:[#allocation3 + $0x60] sm:$0xff] 0.0
        %330 = vst [vmem:[#allocation3 + $0x68] sm:$0xff] 0.0
        %331 = vst [vmem:[#allocation3 + $0x70] sm:$0x3] 0.0
        %332 = vst [vmem:[#allocation3 + $0x78] sm:$0xff] 0.0
        %333 = vst [vmem:[#allocation3 + $0x80] sm:$0xff] 0.0
        %334 = vst [vmem:[#allocation3 + $0x88] sm:$0x3] 0.0
        %335 = vst [vmem:[#allocation3 + $0x90] sm:$0xff] 0.0
        %336 = vst [vmem:[#allocation3 + $0x98] sm:$0xff] 0.0
        %337 = vst [vmem:[#allocation3 + $0xa0] sm:$0x3] 0.0
        %338 = vst [vmem:[#allocation3 + $0xa8] sm:$0xff] 0.0
        %339 = vst [vmem:[#allocation3 + $0xb0] sm:$0xff] 0.0
        %340 = vst [vmem:[#allocation3 + $0xb8] sm:$0x3] 0.0
        %341 = vst [vmem:[#allocation3 + $0xc0] sm:$0xff] 0.0
        %342 = vst [vmem:[#allocation3 + $0xc8] sm:$0xff] 0.0
        %343 = vst [vmem:[#allocation3 + $0xd0] sm:$0x3] 0.0
        %344 = vst [vmem:[#allocation3 + $0xd8] sm:$0xff] 0.0
        %345 = vst [vmem:[#allocation3 + $0xe0] sm:$0xff] 0.0
        %346 = vst [vmem:[#allocation3 + $0xe8] sm:$0x3] 0.0
        %347 = vst [vmem:[#allocation3 + $0xf0] sm:$0xff] 0.0
        %348 = vst [vmem:[#allocation3 + $0xf8] sm:$0xff] 0.0
        %349 = vst [vmem:[#allocation3 + $0x100] sm:$0x3] 0.0
        %350 = vst [vmem:[#allocation3 + $0x108] sm:$0xff] 0.0
        %351 = vst [vmem:[#allocation3 + $0x110] sm:$0xff] 0.0
        %352 = vst [vmem:[#allocation3 + $0x118] sm:$0x3] 0.0
        %353 = vst [vmem:[#allocation3 + $0x120] sm:$0xff] 0.0
        %354 = vst [vmem:[#allocation3 + $0x128] sm:$0xff] 0.0
        %355 = vst [vmem:[#allocation3 + $0x130] sm:$0x3] 0.0
        %356 = vst [vmem:[#allocation3 + $0x138] sm:$0xff] 0.0
        %357 = vst [vmem:[#allocation3 + $0x140] sm:$0xff] 0.0
        %358 = vst [vmem:[#allocation3 + $0x148] sm:$0x3] 0.0
        %359 = vst [vmem:[#allocation3 + $0x150] sm:$0xff] 0.0
        %360 = vst [vmem:[#allocation3 + $0x158] sm:$0xff] 0.0
        %361 = vst [vmem:[#allocation3 + $0x160] sm:$0x3] 0.0
        %362 = vst [vmem:[#allocation3 + $0x168] sm:$0xff] 0.0
        %363 = vst [vmem:[#allocation3 + $0x170] sm:$0xff] 0.0
        %364 = vst [vmem:[#allocation3 + $0x178] sm:$0x3] 0.0
        %365 = vst [vmem:[#allocation3 + $0x180] sm:$0xff] 0.0
        %366 = vst [vmem:[#allocation3 + $0x188] sm:$0xff] 0.0
        %367 = vst [vmem:[#allocation3 + $0x190] sm:$0x3] 0.0
        %368 = vst [vmem:[#allocation3 + $0x198] sm:$0xff] 0.0
        %369 = vst [vmem:[#allocation3 + $0x1a0] sm:$0xff] 0.0
        %370 = vst [vmem:[#allocation3 + $0x1a8] sm:$0x3] 0.0
        %v371 = vld [vmem:[%s223] sm:$0xff]
        %v372 = vld [vmem:[%s223 + $0x8] sm:$0xff]
        %v373 = vld [vmem:[%s223 + $0x10] sm:$0xff]
        %v374 = vld [vmem:[%s223 + $0x18] sm:$0xff]
        %v375 = vld [vmem:[%s223 + $0x20] sm:$0xff]
        %v376 = vld [vmem:[%s223 + $0x28] sm:$0xff]
        %v377 = vld [vmem:[%s223 + $0x30] sm:$0xff]
        %v378 = vld [vmem:[%s223 + $0x38] sm:$0xff]
        %v379 = vld [vmem:[%s223 + $0x40] sm:$0xff]
        %v380 = vld [vmem:[%s223 + $0x48] sm:$0xff]
        %v381 = vld [vmem:[%s223 + $0x50] sm:$0xff]
        %v382 = vld [vmem:[%s223 + $0x58] sm:$0xff]
        %v383 = vld [vmem:[%s223 + $0x60] sm:$0xff]
        %v384 = vld [vmem:[%s223 + $0x68] sm:$0xff]
        %v385 = vld [vmem:[%s223 + $0x70] sm:$0xff]
        %v386 = vld [vmem:[%s223 + $0x78] sm:$0xff]
        %v387 = vld [vmem:[%s223 + $0x80] sm:$0xff]
        %v388 = vld [vmem:[%s223 + $0x88] sm:$0xff]
        %v389 = vld [vmem:[%s223 + $0x90] sm:$0xff]
        %v390 = vld [vmem:[%s223 + $0x98] sm:$0xff]
        %v391 = vld [vmem:[%s223 + $0xa0] sm:$0xff]
        %v392 = vld [vmem:[%s223 + $0xa8] sm:$0xff]
        %v393 = vld [vmem:[%s223 + $0xb0] sm:$0xff]
        %v394 = vld [vmem:[%s223 + $0xb8] sm:$0xff]
        %v395 = vld [vmem:[%s223 + $0xc0] sm:$0xff]
        %v396 = vld [vmem:[%s223 + $0xc8] sm:$0xff]
        %v397 = vld [vmem:[%s223 + $0xd0] sm:$0xff]
        %v398 = vld [vmem:[%s223 + $0xd8] sm:$0xff]
        %v399 = vld [vmem:[%s223 + $0xe0] sm:$0xff]
        %v400 = vld [vmem:[%s223 + $0xe8] sm:$0xff]
        %v401 = vld [vmem:[%s223 + $0xf0] sm:$0xff]
        %v402 = vld [vmem:[%s223 + $0xf8] sm:$0xff]
        %v403 = vstv %s258
        %v404 = vadd.f32 %v371, %v403
        %v405 = vadd.f32 %v372, %v403
        %v406 = vadd.f32 %v373, %v403
        %v407 = vadd.f32 %v374, %v403
        %v408 = vadd.f32 %v375, %v403
        %v409 = vadd.f32 %v376, %v403
        %v410 = vadd.f32 %v377, %v403
        %v411 = vadd.f32 %v378, %v403
        %v412 = vadd.f32 %v379, %v403
        %v413 = vadd.f32 %v380, %v403
        %v414 = vadd.f32 %v381, %v403
        %v415 = vadd.f32 %v382, %v403
        %v416 = vadd.f32 %v383, %v403
        %v417 = vadd.f32 %v384, %v403
        %v418 = vadd.f32 %v385, %v403
        %v419 = vadd.f32 %v386, %v403
        %v420 = vadd.f32 %v387, %v403
        %v421 = vadd.f32 %v388, %v403
        %v422 = vadd.f32 %v389, %v403
        %v423 = vadd.f32 %v390, %v403
        %v424 = vadd.f32 %v391, %v403
        %v425 = vadd.f32 %v392, %v403
        %v426 = vadd.f32 %v393, %v403
        %v427 = vadd.f32 %v394, %v403
        %v428 = vadd.f32 %v395, %v403
        %v429 = vadd.f32 %v396, %v403
        %v430 = vadd.f32 %v397, %v403
        %v431 = vadd.f32 %v398, %v403
        %v432 = vadd.f32 %v399, %v403
        %v433 = vadd.f32 %v400, %v403
        %v434 = vadd.f32 %v401, %v403
        %v435 = vadd.f32 %v402, %v403
        %s436 = scalar_lea.vmem [#allocation2], 24
        %437 = vst [vmem:[%s436 + $0x1] sm:$0xff] %v404
        %438 = vst [vmem:[%s436 + $0x9] sm:$0xff] %v405
        %439 = vst [vmem:[%s436 + $0x19] sm:$0xff] %v406
        %440 = vst [vmem:[%s436 + $0x21] sm:$0xff] %v407
        %441 = vst [vmem:[%s436 + $0x31] sm:$0xff] %v408
        %442 = vst [vmem:[%s436 + $0x39] sm:$0xff] %v409
        %443 = vst [vmem:[%s436 + $0x49] sm:$0xff] %v410
        %444 = vst [vmem:[%s436 + $0x51] sm:$0xff] %v411
        %445 = vst [vmem:[%s436 + $0x61] sm:$0xff] %v412
        %446 = vst [vmem:[%s436 + $0x69] sm:$0xff] %v413
        %447 = vst [vmem:[%s436 + $0x79] sm:$0xff] %v414
        %448 = vst [vmem:[%s436 + $0x81] sm:$0xff] %v415
        %449 = vst [vmem:[%s436 + $0x91] sm:$0xff] %v416
        %450 = vst [vmem:[%s436 + $0x99] sm:$0xff] %v417
        %451 = vst [vmem:[%s436 + $0xa9] sm:$0xff] %v418
        %452 = vst [vmem:[%s436 + $0xb1] sm:$0xff] %v419
        %453 = vst [vmem:[%s436 + $0xc1] sm:$0xff] %v420
        %454 = vst [vmem:[%s436 + $0xc9] sm:$0xff] %v421
        %455 = vst [vmem:[%s436 + $0xd9] sm:$0xff] %v422
        %456 = vst [vmem:[%s436 + $0xe1] sm:$0xff] %v423
        %457 = vst [vmem:[%s436 + $0xf1] sm:$0xff] %v424
        %458 = vst [vmem:[%s436 + $0xf9] sm:$0xff] %v425
        %459 = vst [vmem:[%s436 + $0x109] sm:$0xff] %v426
        %460 = vst [vmem:[%s436 + $0x111] sm:$0xff] %v427
        %461 = vst [vmem:[%s436 + $0x121] sm:$0xff] %v428
        %462 = vst [vmem:[%s436 + $0x129] sm:$0xff] %v429
        %463 = vst [vmem:[%s436 + $0x139] sm:$0xff] %v430
        %464 = vst [vmem:[%s436 + $0x141] sm:$0xff] %v431
        %465 = vst [vmem:[%s436 + $0x151] sm:$0xff] %v432
        %466 = vst [vmem:[%s436 + $0x159] sm:$0xff] %v433
        %467 = vst [vmem:[%s436 + $0x169] sm:$0xff] %v434
        %468 = vst [vmem:[%s436 + $0x171] sm:$0xff] %v435
        %v469 = vld [vmem:[#allocation2] sm:$0xff]
        %v470 = vld [vmem:[#allocation2 + $0x8] sm:$0xff]
        %v471 = vld [vmem:[#allocation2 + $0x18] sm:$0xff]
        %v472 = vld [vmem:[#allocation2 + $0x20] sm:$0xff]
        %v473 = vld [vmem:[#allocation2 + $0x30] sm:$0xff]
        %v474 = vld [vmem:[#allocation2 + $0x38] sm:$0xff]
        %v475 = vld [vmem:[#allocation2 + $0x48] sm:$0xff]
        %v476 = vld [vmem:[#allocation2 + $0x50] sm:$0xff]
        %v477 = vld [vmem:[#allocation2 + $0x60] sm:$0xff]
        %v478 = vld [vmem:[#allocation2 + $0x68] sm:$0xff]
        %v479 = vld [vmem:[#allocation2 + $0x78] sm:$0xff]
        %v480 = vld [vmem:[#allocation2 + $0x80] sm:$0xff]
        %v481 = vld [vmem:[#allocation2 + $0x90] sm:$0xff]
        %v482 = vld [vmem:[#allocation2 + $0x98] sm:$0xff]
        %v483 = vld [vmem:[#allocation2 + $0xa8] sm:$0xff]
        %v484 = vld [vmem:[#allocation2 + $0xb0] sm:$0xff]
        %v485 = vld [vmem:[#allocation2 + $0xc0] sm:$0xff]
        %v486 = vld [vmem:[#allocation2 + $0xc8] sm:$0xff]
        %v487 = vld [vmem:[#allocation2 + $0xd8] sm:$0xff]
        %v488 = vld [vmem:[#allocation2 + $0xe0] sm:$0xff]
        %v489 = vld [vmem:[#allocation2 + $0xf0] sm:$0xff]
        %v490 = vld [vmem:[#allocation2 + $0xf8] sm:$0xff]
        %v491 = vld [vmem:[#allocation2 + $0x108] sm:$0xff]
        %v492 = vld [vmem:[#allocation2 + $0x110] sm:$0xff]
        %v493 = vld [vmem:[#allocation2 + $0x120] sm:$0xff]
        %v494 = vld [vmem:[#allocation2 + $0x128] sm:$0xff]
        %v495 = vld [vmem:[#allocation2 + $0x138] sm:$0xff]
        %v496 = vld [vmem:[#allocation2 + $0x140] sm:$0xff]
        %v497 = vld [vmem:[#allocation2 + $0x150] sm:$0xff]
        %v498 = vld [vmem:[#allocation2 + $0x158] sm:$0xff]
        %v499 = vld [vmem:[#allocation2 + $0x168] sm:$0xff]
        %v500 = vld [vmem:[#allocation2 + $0x170] sm:$0xff]
        %v501 = vld [vmem:[#allocation2 + $0x1] sm:$0xff]
        %v502 = vld [vmem:[#allocation2 + $0x9] sm:$0xff]
        %v503 = vld [vmem:[#allocation2 + $0x19] sm:$0xff]
        %v504 = vld [vmem:[#allocation2 + $0x21] sm:$0xff]
        %v505 = vld [vmem:[#allocation2 + $0x31] sm:$0xff]
        %v506 = vld [vmem:[#allocation2 + $0x39] sm:$0xff]
        %v507 = vld [vmem:[#allocation2 + $0x49] sm:$0xff]
        %v508 = vld [vmem:[#allocation2 + $0x51] sm:$0xff]
        %v509 = vld [vmem:[#allocation2 + $0x61] sm:$0xff]
        %v510 = vld [vmem:[#allocation2 + $0x69] sm:$0xff]
        %v511 = vld [vmem:[#allocation2 + $0x79] sm:$0xff]
        %v512 = vld [vmem:[#allocation2 + $0x81] sm:$0xff]
        %v513 = vld [vmem:[#allocation2 + $0x91] sm:$0xff]
        %v514 = vld [vmem:[#allocation2 + $0x99] sm:$0xff]
        %v515 = vld [vmem:[#allocation2 + $0xa9] sm:$0xff]
        %v516 = vld [vmem:[#allocation2 + $0xb1] sm:$0xff]
        %v517 = vld [vmem:[#allocation2 + $0xc1] sm:$0xff]
        %v518 = vld [vmem:[#allocation2 + $0xc9] sm:$0xff]
        %v519 = vld [vmem:[#allocation2 + $0xd9] sm:$0xff]
        %v520 = vld [vmem:[#allocation2 + $0xe1] sm:$0xff]
        %v521 = vld [vmem:[#allocation2 + $0xf1] sm:$0xff]
        %v522 = vld [vmem:[#allocation2 + $0xf9] sm:$0xff]
        %v523 = vld [vmem:[#allocation2 + $0x109] sm:$0xff]
        %v524 = vld [vmem:[#allocation2 + $0x111] sm:$0xff]
        %v525 = vld [vmem:[#allocation2 + $0x121] sm:$0xff]
        %v526 = vld [vmem:[#allocation2 + $0x129] sm:$0xff]
        %v527 = vld [vmem:[#allocation2 + $0x139] sm:$0xff]
        %v528 = vld [vmem:[#allocation2 + $0x141] sm:$0xff]
        %v529 = vld [vmem:[#allocation2 + $0x151] sm:$0xff]
        %v530 = vld [vmem:[#allocation2 + $0x159] sm:$0xff]
        %v531 = vld [vmem:[#allocation2 + $0x169] sm:$0xff]
        %v532 = vld [vmem:[#allocation2 + $0x171] sm:$0xff]
        %v533 = vld [vmem:[#allocation2 + $0x2] sm:$0xff]
        %v534 = vld [vmem:[#allocation2 + $0xa] sm:$0xff]
        %v535 = vld [vmem:[#allocation2 + $0x1a] sm:$0xff]
        %v536 = vld [vmem:[#allocation2 + $0x22] sm:$0xff]
        %v537 = vld [vmem:[#allocation2 + $0x32] sm:$0xff]
        %v538 = vld [vmem:[#allocation2 + $0x3a] sm:$0xff]
        %v539 = vld [vmem:[#allocation2 + $0x4a] sm:$0xff]
        %v540 = vld [vmem:[#allocation2 + $0x52] sm:$0xff]
        %v541 = vld [vmem:[#allocation2 + $0x62] sm:$0xff]
        %v542 = vld [vmem:[#allocation2 + $0x6a] sm:$0xff]
        %v543 = vld [vmem:[#allocation2 + $0x7a] sm:$0xff]
        %v544 = vld [vmem:[#allocation2 + $0x82] sm:$0xff]
        %v545 = vld [vmem:[#allocation2 + $0x92] sm:$0xff]
        %v546 = vld [vmem:[#allocation2 + $0x9a] sm:$0xff]
        %v547 = vld [vmem:[#allocation2 + $0xaa] sm:$0xff]
        %v548 = vld [vmem:[#allocation2 + $0xb2] sm:$0xff]
        %v549 = vld [vmem:[#allocation2 + $0xc2] sm:$0xff]
        %v550 = vld [vmem:[#allocation2 + $0xca] sm:$0xff]
        %v551 = vld [vmem:[#allocation2 + $0xda] sm:$0xff]
        %v552 = vld [vmem:[#allocation2 + $0xe2] sm:$0xff]
        %v553 = vld [vmem:[#allocation2 + $0xf2] sm:$0xff]
        %v554 = vld [vmem:[#allocation2 + $0xfa] sm:$0xff]
        %v555 = vld [vmem:[#allocation2 + $0x10a] sm:$0xff]
        %v556 = vld [vmem:[#allocation2 + $0x112] sm:$0xff]
        %v557 = vld [vmem:[#allocation2 + $0x122] sm:$0xff]
        %v558 = vld [vmem:[#allocation2 + $0x12a] sm:$0xff]
        %v559 = vld [vmem:[#allocation2 + $0x13a] sm:$0xff]
        %v560 = vld [vmem:[#allocation2 + $0x142] sm:$0xff]
        %v561 = vld [vmem:[#allocation2 + $0x152] sm:$0xff]
        %v562 = vld [vmem:[#allocation2 + $0x15a] sm:$0xff]
        %v563 = vld [vmem:[#allocation2 + $0x16a] sm:$0xff]
        %v564 = vld [vmem:[#allocation2 + $0x172] sm:$0xff]
        %v565 = vld [vmem:[%s436] sm:$0xff]
        %v566 = vld [vmem:[%s436 + $0x8] sm:$0xff]
        %v567 = vld [vmem:[%s436 + $0x18] sm:$0xff]
        %v568 = vld [vmem:[%s436 + $0x20] sm:$0xff]
        %v569 = vld [vmem:[%s436 + $0x30] sm:$0xff]
        %v570 = vld [vmem:[%s436 + $0x38] sm:$0xff]
        %v571 = vld [vmem:[%s436 + $0x48] sm:$0xff]
        %v572 = vld [vmem:[%s436 + $0x50] sm:$0xff]
        %v573 = vld [vmem:[%s436 + $0x60] sm:$0xff]
        %v574 = vld [vmem:[%s436 + $0x68] sm:$0xff]
        %v575 = vld [vmem:[%s436 + $0x78] sm:$0xff]
        %v576 = vld [vmem:[%s436 + $0x80] sm:$0xff]
        %v577 = vld [vmem:[%s436 + $0x90] sm:$0xff]
        %v578 = vld [vmem:[%s436 + $0x98] sm:$0xff]
        %v579 = vld [vmem:[%s436 + $0xa8] sm:$0xff]
        %v580 = vld [vmem:[%s436 + $0xb0] sm:$0xff]
        %v581 = vld [vmem:[%s436 + $0xc0] sm:$0xff]
        %v582 = vld [vmem:[%s436 + $0xc8] sm:$0xff]
        %v583 = vld [vmem:[%s436 + $0xd8] sm:$0xff]
        %v584 = vld [vmem:[%s436 + $0xe0] sm:$0xff]
        %v585 = vld [vmem:[%s436 + $0xf0] sm:$0xff]
        %v586 = vld [vmem:[%s436 + $0xf8] sm:$0xff]
        %v587 = vld [vmem:[%s436 + $0x108] sm:$0xff]
        %v588 = vld [vmem:[%s436 + $0x110] sm:$0xff]
        %v589 = vld [vmem:[%s436 + $0x120] sm:$0xff]
        %v590 = vld [vmem:[%s436 + $0x128] sm:$0xff]
        %v591 = vld [vmem:[%s436 + $0x138] sm:$0xff]
        %v592 = vld [vmem:[%s436 + $0x140] sm:$0xff]
        %v593 = vld [vmem:[%s436 + $0x150] sm:$0xff]
        %v594 = vld [vmem:[%s436 + $0x158] sm:$0xff]
        %v595 = vld [vmem:[%s436 + $0x168] sm:$0xff]
        %v596 = vld [vmem:[%s436 + $0x170] sm:$0xff]
        %v597 = vld [vmem:[%s436 + $0x1] sm:$0xff]
        %v598 = vld [vmem:[%s436 + $0x9] sm:$0xff]
        %v599 = vld [vmem:[%s436 + $0x19] sm:$0xff]
        %v600 = vld [vmem:[%s436 + $0x21] sm:$0xff]
        %v601 = vld [vmem:[%s436 + $0x31] sm:$0xff]
        %v602 = vld [vmem:[%s436 + $0x39] sm:$0xff]
        %v603 = vld [vmem:[%s436 + $0x49] sm:$0xff]
        %v604 = vld [vmem:[%s436 + $0x51] sm:$0xff]
        %v605 = vld [vmem:[%s436 + $0x61] sm:$0xff]
        %v606 = vld [vmem:[%s436 + $0x69] sm:$0xff]
        %v607 = vld [vmem:[%s436 + $0x79] sm:$0xff]
        %v608 = vld [vmem:[%s436 + $0x81] sm:$0xff]
        %v609 = vld [vmem:[%s436 + $0x91] sm:$0xff]
        %v610 = vld [vmem:[%s436 + $0x99] sm:$0xff]
        %v611 = vld [vmem:[%s436 + $0xa9] sm:$0xff]
        %v612 = vld [vmem:[%s436 + $0xb1] sm:$0xff]
        %v613 = vld [vmem:[%s436 + $0xc1] sm:$0xff]
        %v614 = vld [vmem:[%s436 + $0xc9] sm:$0xff]
        %v615 = vld [vmem:[%s436 + $0xd9] sm:$0xff]
        %v616 = vld [vmem:[%s436 + $0xe1] sm:$0xff]
        %v617 = vld [vmem:[%s436 + $0xf1] sm:$0xff]
        %v618 = vld [vmem:[%s436 + $0xf9] sm:$0xff]
        %v619 = vld [vmem:[%s436 + $0x109] sm:$0xff]
        %v620 = vld [vmem:[%s436 + $0x111] sm:$0xff]
        %v621 = vld [vmem:[%s436 + $0x121] sm:$0xff]
        %v622 = vld [vmem:[%s436 + $0x129] sm:$0xff]
        %v623 = vld [vmem:[%s436 + $0x139] sm:$0xff]
        %v624 = vld [vmem:[%s436 + $0x141] sm:$0xff]
        %v625 = vld [vmem:[%s436 + $0x151] sm:$0xff]
        %v626 = vld [vmem:[%s436 + $0x159] sm:$0xff]
        %v627 = vld [vmem:[%s436 + $0x169] sm:$0xff]
        %v628 = vld [vmem:[%s436 + $0x171] sm:$0xff]
        %v629 = vld [vmem:[%s436 + $0x2] sm:$0xff]
        %v630 = vld [vmem:[%s436 + $0xa] sm:$0xff]
        %v631 = vld [vmem:[%s436 + $0x1a] sm:$0xff]
        %v632 = vld [vmem:[%s436 + $0x22] sm:$0xff]
        %v633 = vld [vmem:[%s436 + $0x32] sm:$0xff]
        %v634 = vld [vmem:[%s436 + $0x3a] sm:$0xff]
        %v635 = vld [vmem:[%s436 + $0x4a] sm:$0xff]
        %v636 = vld [vmem:[%s436 + $0x52] sm:$0xff]
        %v637 = vld [vmem:[%s436 + $0x62] sm:$0xff]
        %v638 = vld [vmem:[%s436 + $0x6a] sm:$0xff]
        %v639 = vld [vmem:[%s436 + $0x7a] sm:$0xff]
        %v640 = vld [vmem:[%s436 + $0x82] sm:$0xff]
        %v641 = vld [vmem:[%s436 + $0x92] sm:$0xff]
        %v642 = vld [vmem:[%s436 + $0x9a] sm:$0xff]
        %v643 = vld [vmem:[%s436 + $0xaa] sm:$0xff]
        %v644 = vld [vmem:[%s436 + $0xb2] sm:$0xff]
        %v645 = vld [vmem:[%s436 + $0xc2] sm:$0xff]
        %v646 = vld [vmem:[%s436 + $0xca] sm:$0xff]
        %v647 = vld [vmem:[%s436 + $0xda] sm:$0xff]
        %v648 = vld [vmem:[%s436 + $0xe2] sm:$0xff]
        %v649 = vld [vmem:[%s436 + $0xf2] sm:$0xff]
        %v650 = vld [vmem:[%s436 + $0xfa] sm:$0xff]
        %v651 = vld [vmem:[%s436 + $0x10a] sm:$0xff]
        %v652 = vld [vmem:[%s436 + $0x112] sm:$0xff]
        %v653 = vld [vmem:[%s436 + $0x122] sm:$0xff]
        %v654 = vld [vmem:[%s436 + $0x12a] sm:$0xff]
        %v655 = vld [vmem:[%s436 + $0x13a] sm:$0xff]
        %v656 = vld [vmem:[%s436 + $0x142] sm:$0xff]
        %v657 = vld [vmem:[%s436 + $0x152] sm:$0xff]
        %v658 = vld [vmem:[%s436 + $0x15a] sm:$0xff]
        %v659 = vld [vmem:[%s436 + $0x16a] sm:$0xff]
        %v660 = vld [vmem:[%s436 + $0x172] sm:$0xff]
        %s661 = scalar_lea.vmem [#allocation2], 48
        %v662 = vld [vmem:[%s661] sm:$0xff]
        %v663 = vld [vmem:[%s661 + $0x8] sm:$0xff]
        %v664 = vld [vmem:[%s661 + $0x18] sm:$0xff]
        %v665 = vld [vmem:[%s661 + $0x20] sm:$0xff]
        %v666 = vld [vmem:[%s661 + $0x30] sm:$0xff]
        %v667 = vld [vmem:[%s661 + $0x38] sm:$0xff]
        %v668 = vld [vmem:[%s661 + $0x48] sm:$0xff]
        %v669 = vld [vmem:[%s661 + $0x50] sm:$0xff]
        %v670 = vld [vmem:[%s661 + $0x60] sm:$0xff]
        %v671 = vld [vmem:[%s661 + $0x68] sm:$0xff]
        %v672 = vld [vmem:[%s661 + $0x78] sm:$0xff]
        %v673 = vld [vmem:[%s661 + $0x80] sm:$0xff]
        %v674 = vld [vmem:[%s661 + $0x90] sm:$0xff]
        %v675 = vld [vmem:[%s661 + $0x98] sm:$0xff]
        %v676 = vld [vmem:[%s661 + $0xa8] sm:$0xff]
        %v677 = vld [vmem:[%s661 + $0xb0] sm:$0xff]
        %v678 = vld [vmem:[%s661 + $0xc0] sm:$0xff]
        %v679 = vld [vmem:[%s661 + $0xc8] sm:$0xff]
        %v680 = vld [vmem:[%s661 + $0xd8] sm:$0xff]
        %v681 = vld [vmem:[%s661 + $0xe0] sm:$0xff]
        %v682 = vld [vmem:[%s661 + $0xf0] sm:$0xff]
        %v683 = vld [vmem:[%s661 + $0xf8] sm:$0xff]
        %v684 = vld [vmem:[%s661 + $0x108] sm:$0xff]
        %v685 = vld [vmem:[%s661 + $0x110] sm:$0xff]
        %v686 = vld [vmem:[%s661 + $0x120] sm:$0xff]
        %v687 = vld [vmem:[%s661 + $0x128] sm:$0xff]
        %v688 = vld [vmem:[%s661 + $0x138] sm:$0xff]
        %v689 = vld [vmem:[%s661 + $0x140] sm:$0xff]
        %v690 = vld [vmem:[%s661 + $0x150] sm:$0xff]
        %v691 = vld [vmem:[%s661 + $0x158] sm:$0xff]
        %v692 = vld [vmem:[%s661 + $0x168] sm:$0xff]
        %v693 = vld [vmem:[%s661 + $0x170] sm:$0xff]
        %v694 = vld [vmem:[%s661 + $0x1] sm:$0xff]
        %v695 = vld [vmem:[%s661 + $0x9] sm:$0xff]
        %v696 = vld [vmem:[%s661 + $0x19] sm:$0xff]
        %v697 = vld [vmem:[%s661 + $0x21] sm:$0xff]
        %v698 = vld [vmem:[%s661 + $0x31] sm:$0xff]
        %v699 = vld [vmem:[%s661 + $0x39] sm:$0xff]
        %v700 = vld [vmem:[%s661 + $0x49] sm:$0xff]
        %v701 = vld [vmem:[%s661 + $0x51] sm:$0xff]
        %v702 = vld [vmem:[%s661 + $0x61] sm:$0xff]
        %v703 = vld [vmem:[%s661 + $0x69] sm:$0xff]
        %v704 = vld [vmem:[%s661 + $0x79] sm:$0xff]
        %v705 = vld [vmem:[%s661 + $0x81] sm:$0xff]
        %v706 = vld [vmem:[%s661 + $0x91] sm:$0xff]
        %v707 = vld [vmem:[%s661 + $0x99] sm:$0xff]
        %v708 = vld [vmem:[%s661 + $0xa9] sm:$0xff]
        %v709 = vld [vmem:[%s661 + $0xb1] sm:$0xff]
        %v710 = vld [vmem:[%s661 + $0xc1] sm:$0xff]
        %v711 = vld [vmem:[%s661 + $0xc9] sm:$0xff]
        %v712 = vld [vmem:[%s661 + $0xd9] sm:$0xff]
        %v713 = vld [vmem:[%s661 + $0xe1] sm:$0xff]
        %v714 = vld [vmem:[%s661 + $0xf1] sm:$0xff]
        %v715 = vld [vmem:[%s661 + $0xf9] sm:$0xff]
        %v716 = vld [vmem:[%s661 + $0x109] sm:$0xff]
        %v717 = vld [vmem:[%s661 + $0x111] sm:$0xff]
        %v718 = vld [vmem:[%s661 + $0x121] sm:$0xff]
        %v719 = vld [vmem:[%s661 + $0x129] sm:$0xff]
        %v720 = vld [vmem:[%s661 + $0x139] sm:$0xff]
        %v721 = vld [vmem:[%s661 + $0x141] sm:$0xff]
        %v722 = vld [vmem:[%s661 + $0x151] sm:$0xff]
        %v723 = vld [vmem:[%s661 + $0x159] sm:$0xff]
        %v724 = vld [vmem:[%s661 + $0x169] sm:$0xff]
        %v725 = vld [vmem:[%s661 + $0x171] sm:$0xff]
        %v726 = vld [vmem:[%s661 + $0x2] sm:$0xff]
        %v727 = vld [vmem:[%s661 + $0xa] sm:$0xff]
        %v728 = vld [vmem:[%s661 + $0x1a] sm:$0xff]
        %v729 = vld [vmem:[%s661 + $0x22] sm:$0xff]
        %v730 = vld [vmem:[%s661 + $0x32] sm:$0xff]
        %v731 = vld [vmem:[%s661 + $0x3a] sm:$0xff]
        %v732 = vld [vmem:[%s661 + $0x4a] sm:$0xff]
        %v733 = vld [vmem:[%s661 + $0x52] sm:$0xff]
        %v734 = vld [vmem:[%s661 + $0x62] sm:$0xff]
        %v735 = vld [vmem:[%s661 + $0x6a] sm:$0xff]
        %v736 = vld [vmem:[%s661 + $0x7a] sm:$0xff]
        %v737 = vld [vmem:[%s661 + $0x82] sm:$0xff]
        %v738 = vld [vmem:[%s661 + $0x92] sm:$0xff]
        %v739 = vld [vmem:[%s661 + $0x9a] sm:$0xff]
        %v740 = vld [vmem:[%s661 + $0xaa] sm:$0xff]
        %v741 = vld [vmem:[%s661 + $0xb2] sm:$0xff]
        %v742 = vld [vmem:[%s661 + $0xc2] sm:$0xff]
        %v743 = vld [vmem:[%s661 + $0xca] sm:$0xff]
        %v744 = vld [vmem:[%s661 + $0xda] sm:$0xff]
        %v745 = vld [vmem:[%s661 + $0xe2] sm:$0xff]
        %v746 = vld [vmem:[%s661 + $0xf2] sm:$0xff]
        %v747 = vld [vmem:[%s661 + $0xfa] sm:$0xff]
        %v748 = vld [vmem:[%s661 + $0x10a] sm:$0xff]
        %v749 = vld [vmem:[%s661 + $0x112] sm:$0xff]
        %v750 = vld [vmem:[%s661 + $0x122] sm:$0xff]
        %v751 = vld [vmem:[%s661 + $0x12a] sm:$0xff]
        %v752 = vld [vmem:[%s661 + $0x13a] sm:$0xff]
        %v753 = vld [vmem:[%s661 + $0x142] sm:$0xff]
        %v754 = vld [vmem:[%s661 + $0x152] sm:$0xff]
        %v755 = vld [vmem:[%s661 + $0x15a] sm:$0xff]
        %v756 = vld [vmem:[%s661 + $0x16a] sm:$0xff]
        %v757 = vld [vmem:[%s661 + $0x172] sm:$0xff]
        %v758 = vpack.c.bf16 %v470, %v469
        %v759 = vpack.c.bf16 %v502, %v501
        %v760 = vpack.c.bf16 %v534, %v533
        %v761 = vpack.c.bf16 %v566, %v565
        %v762 = vpack.c.bf16 %v598, %v597
        %v763 = vpack.c.bf16 %v630, %v629
        %v764 = vpack.c.bf16 %v663, %v662
        %v765 = vpack.c.bf16 %v695, %v694
        %v766 = vpack.c.bf16 %v727, %v726
        %v767 = vpack.c.bf16 %v472, %v471
        %v768 = vpack.c.bf16 %v504, %v503
        %v769 = vpack.c.bf16 %v536, %v535
        %v770 = vpack.c.bf16 %v568, %v567
        %v771 = vpack.c.bf16 %v600, %v599
        %v772 = vpack.c.bf16 %v632, %v631
        %v773 = vpack.c.bf16 %v665, %v664
        %v774 = vpack.c.bf16 %v697, %v696
        %v775 = vpack.c.bf16 %v729, %v728
        %v776 = vpack.c.bf16 %v474, %v473
        %v777 = vpack.c.bf16 %v506, %v505
        %v778 = vpack.c.bf16 %v538, %v537
        %v779 = vpack.c.bf16 %v570, %v569
        %v780 = vpack.c.bf16 %v602, %v601
        %v781 = vpack.c.bf16 %v634, %v633
        %v782 = vpack.c.bf16 %v667, %v666
        %v783 = vpack.c.bf16 %v699, %v698
        %v784 = vpack.c.bf16 %v731, %v730
        %v785 = vpack.c.bf16 %v476, %v475
        %v786 = vpack.c.bf16 %v508, %v507
        %v787 = vpack.c.bf16 %v540, %v539
        %v788 = vpack.c.bf16 %v572, %v571
        %v789 = vpack.c.bf16 %v604, %v603
        %v790 = vpack.c.bf16 %v636, %v635
        %v791 = vpack.c.bf16 %v669, %v668
        %v792 = vpack.c.bf16 %v701, %v700
        %v793 = vpack.c.bf16 %v733, %v732
        %v794 = vpack.c.bf16 %v478, %v477
        %v795 = vpack.c.bf16 %v510, %v509
        %v796 = vpack.c.bf16 %v542, %v541
        %v797 = vpack.c.bf16 %v574, %v573
        %v798 = vpack.c.bf16 %v606, %v605
        %v799 = vpack.c.bf16 %v638, %v637
        %v800 = vpack.c.bf16 %v671, %v670
        %v801 = vpack.c.bf16 %v703, %v702
        %v802 = vpack.c.bf16 %v735, %v734
        %v803 = vpack.c.bf16 %v480, %v479
        %v804 = vpack.c.bf16 %v512, %v511
        %v805 = vpack.c.bf16 %v544, %v543
        %v806 = vpack.c.bf16 %v576, %v575
        %v807 = vpack.c.bf16 %v608, %v607
        %v808 = vpack.c.bf16 %v640, %v639
        %v809 = vpack.c.bf16 %v673, %v672
        %v810 = vpack.c.bf16 %v705, %v704
        %v811 = vpack.c.bf16 %v737, %v736
        %v812 = vpack.c.bf16 %v482, %v481
        %v813 = vpack.c.bf16 %v514, %v513
        %v814 = vpack.c.bf16 %v546, %v545
        %v815 = vpack.c.bf16 %v578, %v577
        %v816 = vpack.c.bf16 %v610, %v609
        %v817 = vpack.c.bf16 %v642, %v641
        %v818 = vpack.c.bf16 %v675, %v674
        %v819 = vpack.c.bf16 %v707, %v706
        %v820 = vpack.c.bf16 %v739, %v738
        %v821 = vpack.c.bf16 %v484, %v483
        %v822 = vpack.c.bf16 %v516, %v515
        %v823 = vpack.c.bf16 %v548, %v547
        %v824 = vpack.c.bf16 %v580, %v579
        %v825 = vpack.c.bf16 %v612, %v611
        %v826 = vpack.c.bf16 %v644, %v643
        %v827 = vpack.c.bf16 %v677, %v676
        %v828 = vpack.c.bf16 %v709, %v708
        %v829 = vpack.c.bf16 %v741, %v740
        %v830 = vpack.c.bf16 %v486, %v485
        %v831 = vpack.c.bf16 %v518, %v517
        %v832 = vpack.c.bf16 %v550, %v549
        %v833 = vpack.c.bf16 %v582, %v581
        %v834 = vpack.c.bf16 %v614, %v613
        %v835 = vpack.c.bf16 %v646, %v645
        %v836 = vpack.c.bf16 %v679, %v678
        %v837 = vpack.c.bf16 %v711, %v710
        %v838 = vpack.c.bf16 %v743, %v742
        %v839 = vpack.c.bf16 %v488, %v487
        %v840 = vpack.c.bf16 %v520, %v519
        %v841 = vpack.c.bf16 %v552, %v551
        %v842 = vpack.c.bf16 %v584, %v583
        %v843 = vpack.c.bf16 %v616, %v615
        %v844 = vpack.c.bf16 %v648, %v647
        %v845 = vpack.c.bf16 %v681, %v680
        %v846 = vpack.c.bf16 %v713, %v712
        %v847 = vpack.c.bf16 %v745, %v744
        %v848 = vpack.c.bf16 %v490, %v489
        %v849 = vpack.c.bf16 %v522, %v521
        %v850 = vpack.c.bf16 %v554, %v553
        %v851 = vpack.c.bf16 %v586, %v585
        %v852 = vpack.c.bf16 %v618, %v617
        %v853 = vpack.c.bf16 %v650, %v649
        %v854 = vpack.c.bf16 %v683, %v682
        %v855 = vpack.c.bf16 %v715, %v714
        %v856 = vpack.c.bf16 %v747, %v746
        %v857 = vpack.c.bf16 %v492, %v491
        %v858 = vpack.c.bf16 %v524, %v523
        %v859 = vpack.c.bf16 %v556, %v555
        %v860 = vpack.c.bf16 %v588, %v587
        %v861 = vpack.c.bf16 %v620, %v619
        %v862 = vpack.c.bf16 %v652, %v651
        %v863 = vpack.c.bf16 %v685, %v684
        %v864 = vpack.c.bf16 %v717, %v716
        %v865 = vpack.c.bf16 %v749, %v748
        %v866 = vpack.c.bf16 %v494, %v493
        %v867 = vpack.c.bf16 %v526, %v525
        %v868 = vpack.c.bf16 %v558, %v557
        %v869 = vpack.c.bf16 %v590, %v589
        %v870 = vpack.c.bf16 %v622, %v621
        %v871 = vpack.c.bf16 %v654, %v653
        %v872 = vpack.c.bf16 %v687, %v686
        %v873 = vpack.c.bf16 %v719, %v718
        %v874 = vpack.c.bf16 %v751, %v750
        %v875 = vpack.c.bf16 %v496, %v495
        %v876 = vpack.c.bf16 %v528, %v527
        %v877 = vpack.c.bf16 %v560, %v559
        %v878 = vpack.c.bf16 %v592, %v591
        %v879 = vpack.c.bf16 %v624, %v623
        %v880 = vpack.c.bf16 %v656, %v655
        %v881 = vpack.c.bf16 %v689, %v688
        %v882 = vpack.c.bf16 %v721, %v720
        %v883 = vpack.c.bf16 %v753, %v752
        %v884 = vpack.c.bf16 %v498, %v497
        %v885 = vpack.c.bf16 %v530, %v529
        %v886 = vpack.c.bf16 %v562, %v561
        %v887 = vpack.c.bf16 %v594, %v593
        %v888 = vpack.c.bf16 %v626, %v625
        %v889 = vpack.c.bf16 %v658, %v657
        %v890 = vpack.c.bf16 %v691, %v690
        %v891 = vpack.c.bf16 %v723, %v722
        %v892 = vpack.c.bf16 %v755, %v754
        %v893 = vpack.c.bf16 %v500, %v499
        %v894 = vpack.c.bf16 %v532, %v531
        %v895 = vpack.c.bf16 %v564, %v563
        %v896 = vpack.c.bf16 %v596, %v595
        %v897 = vpack.c.bf16 %v628, %v627
        %v898 = vpack.c.bf16 %v660, %v659
        %v899 = vpack.c.bf16 %v693, %v692
        %v900 = vpack.c.bf16 %v725, %v724
        %v901 = vpack.c.bf16 %v757, %v756
        %v902 = vld [vmem:[#allocation9] sm:$0xf]
        %v903 = vld [vmem:[#allocation9 + $0x4] sm:$0xf]
        %v904 = vld [vmem:[#allocation9 + $0x8] sm:$0xf]
        %v905 = vld [vmem:[#allocation9 + $0xc] sm:$0xf]
        %v906 = vld [vmem:[#allocation9 + $0x10] sm:$0xf]
        %v907 = vld [vmem:[#allocation9 + $0x14] sm:$0xf]
        %v908 = vld [vmem:[#allocation9 + $0x18] sm:$0xf]
        %v909 = vld [vmem:[#allocation9 + $0x1c] sm:$0xf]
        %v910 = vld [vmem:[#allocation9 + $0x20] sm:$0xf]
        %v911 = vld [vmem:[#allocation9 + $0x24] sm:$0xf]
        %v912 = vld [vmem:[#allocation9 + $0x28] sm:$0xf]
        %v913 = vld [vmem:[#allocation9 + $0x2c] sm:$0xf]
        %v914 = vld [vmem:[#allocation9 + $0x30] sm:$0xf]
        %v915 = vld [vmem:[#allocation9 + $0x34] sm:$0xf]
        %v916 = vld [vmem:[#allocation9 + $0x38] sm:$0xf]
        %v917 = vld [vmem:[#allocation9 + $0x3c] sm:$0xf]
        %v918 = vld [vmem:[#allocation9 + $0x40] sm:$0xf]
        %v919 = vld [vmem:[#allocation9 + $0x44] sm:$0xf]
        %v920 = vld [vmem:[#allocation9 + $0x48] sm:$0xf]
        %v921 = vld [vmem:[#allocation9 + $0x4c] sm:$0xf]
        %v922 = vld [vmem:[#allocation9 + $0x50] sm:$0xf]
        %v923 = vld [vmem:[#allocation9 + $0x54] sm:$0xf]
        %v924 = vld [vmem:[#allocation9 + $0x58] sm:$0xf]
        %v925 = vld [vmem:[#allocation9 + $0x5c] sm:$0xf]
        %v926 = vld [vmem:[#allocation9 + $0x60] sm:$0xf]
        %v927 = vld [vmem:[#allocation9 + $0x64] sm:$0xf]
        %v928 = vld [vmem:[#allocation9 + $0x68] sm:$0xf]
        %v929 = vld [vmem:[#allocation9 + $0x6c] sm:$0xf]
        %v930 = vld [vmem:[#allocation9 + $0x70] sm:$0xf]
        %v931 = vld [vmem:[#allocation9 + $0x74] sm:$0xf]
        %v932 = vld [vmem:[#allocation9 + $0x78] sm:$0xf]
        %v933 = vld [vmem:[#allocation9 + $0x7c] sm:$0xf]
        %v934 = vld [vmem:[#allocation9 + $0x80] sm:$0xf]
        %v935 = vld [vmem:[#allocation9 + $0x84] sm:$0xf]
        %v936 = vld [vmem:[#allocation9 + $0x88] sm:$0xf]
        %v937 = vld [vmem:[#allocation9 + $0x8c] sm:$0xf]
        %v938 = vld [vmem:[#allocation9 + $0x90] sm:$0xf]
        %v939 = vld [vmem:[#allocation9 + $0x94] sm:$0xf]
        %v940 = vld [vmem:[#allocation9 + $0x98] sm:$0xf]
        %v941 = vld [vmem:[#allocation9 + $0x9c] sm:$0xf]
        %v942 = vld [vmem:[#allocation9 + $0xa0] sm:$0xf]
        %v943 = vld [vmem:[#allocation9 + $0xa4] sm:$0xf]
        %v944 = vld [vmem:[#allocation9 + $0xa8] sm:$0xf]
        %v945 = vld [vmem:[#allocation9 + $0xac] sm:$0xf]
        %v946 = vld [vmem:[#allocation9 + $0xb0] sm:$0xf]
        %v947 = vld [vmem:[#allocation9 + $0xb4] sm:$0xf]
        %v948 = vld [vmem:[#allocation9 + $0xb8] sm:$0xf]
        %v949 = vld [vmem:[#allocation9 + $0xbc] sm:$0xf]
        %v950 = vld [vmem:[#allocation9 + $0xc0] sm:$0xf]
        %v951 = vld [vmem:[#allocation9 + $0xc4] sm:$0xf]
        %v952 = vld [vmem:[#allocation9 + $0xc8] sm:$0xf]
        %v953 = vld [vmem:[#allocation9 + $0xcc] sm:$0xf]
        %v954 = vld [vmem:[#allocation9 + $0xd0] sm:$0xf]
        %v955 = vld [vmem:[#allocation9 + $0xd4] sm:$0xf]
        %v956 = vld [vmem:[#allocation9 + $0xd8] sm:$0xf]
        %v957 = vld [vmem:[#allocation9 + $0xdc] sm:$0xf]
        %v958 = vld [vmem:[#allocation9 + $0xe0] sm:$0xf]
        %v959 = vld [vmem:[#allocation9 + $0xe4] sm:$0xf]
        %v960 = vld [vmem:[#allocation9 + $0xe8] sm:$0xf]
        %v961 = vld [vmem:[#allocation9 + $0xec] sm:$0xf]
        %v962 = vld [vmem:[#allocation9 + $0xf0] sm:$0xf]
        %v963 = vld [vmem:[#allocation9 + $0xf4] sm:$0xf]
        %v964 = vld [vmem:[#allocation9 + $0xf8] sm:$0xf]
        %v965 = vld [vmem:[#allocation9 + $0xfc] sm:$0xf]
        %v966 = vld [vmem:[#allocation9 + $0x100] sm:$0xf]
        %v967 = vld [vmem:[#allocation9 + $0x104] sm:$0xf]
        %v968 = vld [vmem:[#allocation9 + $0x108] sm:$0xf]
        %v969 = vld [vmem:[#allocation9 + $0x10c] sm:$0xf]
        %v970 = vld [vmem:[#allocation9 + $0x110] sm:$0xf]
        %v971 = vld [vmem:[#allocation9 + $0x114] sm:$0xf]
        %v972 = vld [vmem:[#allocation9 + $0x118] sm:$0xf]
        %v973 = vld [vmem:[#allocation9 + $0x11c] sm:$0xf]
        %v974 = vld [vmem:[#allocation9 + $0x120] sm:$0xf]
        %v975 = vld [vmem:[#allocation9 + $0x124] sm:$0xf]
        %v976 = vld [vmem:[#allocation9 + $0x128] sm:$0xf]
        %v977 = vld [vmem:[#allocation9 + $0x12c] sm:$0xf]
        %v978 = vld [vmem:[#allocation9 + $0x130] sm:$0xf]
        %v979 = vld [vmem:[#allocation9 + $0x134] sm:$0xf]
        %v980 = vld [vmem:[#allocation9 + $0x138] sm:$0xf]
        %v981 = vld [vmem:[#allocation9 + $0x13c] sm:$0xf]
        %v982 = vld [vmem:[#allocation9 + $0x140] sm:$0xf]
        %v983 = vld [vmem:[#allocation9 + $0x144] sm:$0xf]
        %v984 = vld [vmem:[#allocation9 + $0x148] sm:$0xf]
        %v985 = vld [vmem:[#allocation9 + $0x14c] sm:$0xf]
        %v986 = vld [vmem:[#allocation9 + $0x150] sm:$0xf]
        %v987 = vld [vmem:[#allocation9 + $0x154] sm:$0xf]
        %v988 = vld [vmem:[#allocation9 + $0x158] sm:$0xf]
        %v989 = vld [vmem:[#allocation9 + $0x15c] sm:$0xf]
        %v990 = vld [vmem:[#allocation9 + $0x160] sm:$0xf]
        %v991 = vld [vmem:[#allocation9 + $0x164] sm:$0xf]
        %v992 = vld [vmem:[#allocation9 + $0x168] sm:$0xf]
        %v993 = vld [vmem:[#allocation9 + $0x16c] sm:$0xf]
        %v994 = vld [vmem:[#allocation9 + $0x170] sm:$0xf]
        %v995 = vld [vmem:[#allocation9 + $0x174] sm:$0xf]
        %v996 = vld [vmem:[#allocation9 + $0x178] sm:$0xf]
        %v997 = vld [vmem:[#allocation9 + $0x17c] sm:$0xf]
        %v998 = vld [vmem:[#allocation9 + $0x180] sm:$0xf]
        %v999 = vld [vmem:[#allocation9 + $0x184] sm:$0xf]
        %v1000 = vld [vmem:[#allocation9 + $0x188] sm:$0xf]
        %v1001 = vld [vmem:[#allocation9 + $0x18c] sm:$0xf]
        %v1002 = vld [vmem:[#allocation9 + $0x190] sm:$0xf]
        %v1003 = vld [vmem:[#allocation9 + $0x194] sm:$0xf]
        %v1004 = vld [vmem:[#allocation9 + $0x198] sm:$0xf]
        %v1005 = vld [vmem:[#allocation9 + $0x19c] sm:$0xf]
        %v1006 = vld [vmem:[#allocation9 + $0x1a0] sm:$0xf]
        %v1007 = vld [vmem:[#allocation9 + $0x1a4] sm:$0xf]
        %v1008 = vld [vmem:[#allocation9 + $0x1a8] sm:$0xf]
        %v1009 = vld [vmem:[#allocation9 + $0x1ac] sm:$0xf]
        %v1010 = vld [vmem:[#allocation9 + $0x1b0] sm:$0xf]
        %v1011 = vld [vmem:[#allocation9 + $0x1b4] sm:$0xf]
        %v1012 = vld [vmem:[#allocation9 + $0x1b8] sm:$0xf]
        %v1013 = vld [vmem:[#allocation9 + $0x1bc] sm:$0xf]
        %v1014 = vld [vmem:[#allocation9 + $0x1c0] sm:$0xf]
        %v1015 = vld [vmem:[#allocation9 + $0x1c4] sm:$0xf]
        %v1016 = vld [vmem:[#allocation9 + $0x1c8] sm:$0xf]
        %v1017 = vld [vmem:[#allocation9 + $0x1cc] sm:$0xf]
        %v1018 = vld [vmem:[#allocation9 + $0x1d0] sm:$0xf]
        %v1019 = vld [vmem:[#allocation9 + $0x1d4] sm:$0xf]
        %v1020 = vld [vmem:[#allocation9 + $0x1d8] sm:$0xf]
        %v1021 = vld [vmem:[#allocation9 + $0x1dc] sm:$0xf]
        %v1022 = vld [vmem:[#allocation9 + $0x1e0] sm:$0xf]
        %v1023 = vld [vmem:[#allocation9 + $0x1e4] sm:$0xf]
        %v1024 = vld [vmem:[#allocation9 + $0x1e8] sm:$0xf]
        %v1025 = vld [vmem:[#allocation9 + $0x1ec] sm:$0xf]
        %v1026 = vld [vmem:[#allocation9 + $0x1f0] sm:$0xf]
        %v1027 = vld [vmem:[#allocation9 + $0x1f4] sm:$0xf]
        %v1028 = vld [vmem:[#allocation9 + $0x1f8] sm:$0xf]
        %v1029 = vld [vmem:[#allocation9 + $0x1fc] sm:$0xf]
        %v1030 = vld [vmem:[#allocation9 + $0x200] sm:$0xf]
        %v1031 = vld [vmem:[#allocation9 + $0x204] sm:$0xf]
        %v1032 = vld [vmem:[#allocation9 + $0x208] sm:$0xf]
        %v1033 = vld [vmem:[#allocation9 + $0x20c] sm:$0xf]
        %v1034 = vld [vmem:[#allocation9 + $0x210] sm:$0xf]
        %v1035 = vld [vmem:[#allocation9 + $0x214] sm:$0xf]
        %v1036 = vld [vmem:[#allocation9 + $0x218] sm:$0xf]
        %v1037 = vld [vmem:[#allocation9 + $0x21c] sm:$0xf]
        %v1038 = vld [vmem:[#allocation9 + $0x220] sm:$0xf]
        %v1039 = vld [vmem:[#allocation9 + $0x224] sm:$0xf]
        %v1040 = vld [vmem:[#allocation9 + $0x228] sm:$0xf]
        %v1041 = vld [vmem:[#allocation9 + $0x22c] sm:$0xf]
        %v1042 = vld [vmem:[#allocation9 + $0x230] sm:$0xf]
        %v1043 = vld [vmem:[#allocation9 + $0x234] sm:$0xf]
        %v1044 = vld [vmem:[#allocation9 + $0x238] sm:$0xf]
        %v1045 = vld [vmem:[#allocation9 + $0x23c] sm:$0xf]
        %v1046 = vstv %s259
        %v1191 = vunpack.c.l.b16 %v902
        %v1192 = vunpack.c.l.b16 %v903
        %v1193 = vunpack.c.l.b16 %v904
        %v1194 = vunpack.c.l.b16 %v905
        %v1195 = vunpack.c.l.b16 %v906
        %v1196 = vunpack.c.l.b16 %v907
        %v1197 = vunpack.c.l.b16 %v908
        %v1198 = vunpack.c.l.b16 %v909
        %v1199 = vunpack.c.l.b16 %v910
        %v1200 = vunpack.c.l.b16 %v911
        %v1201 = vunpack.c.l.b16 %v912
        %v1202 = vunpack.c.l.b16 %v913
        %v1203 = vunpack.c.l.b16 %v914
        %v1204 = vunpack.c.l.b16 %v915
        %v1205 = vunpack.c.l.b16 %v916
        %v1206 = vunpack.c.l.b16 %v917
        %v1207 = vunpack.c.l.b16 %v918
        %v1208 = vunpack.c.l.b16 %v919
        %v1209 = vunpack.c.l.b16 %v920
        %v1210 = vunpack.c.l.b16 %v921
        %v1211 = vunpack.c.l.b16 %v922
        %v1212 = vunpack.c.l.b16 %v923
        %v1213 = vunpack.c.l.b16 %v924
        %v1214 = vunpack.c.l.b16 %v925
        %v1215 = vunpack.c.l.b16 %v926
        %v1216 = vunpack.c.l.b16 %v927
        %v1217 = vunpack.c.l.b16 %v928
        %v1218 = vunpack.c.l.b16 %v929
        %v1219 = vunpack.c.l.b16 %v930
        %v1220 = vunpack.c.l.b16 %v931
        %v1221 = vunpack.c.l.b16 %v932
        %v1222 = vunpack.c.l.b16 %v933
        %v1223 = vunpack.c.l.b16 %v934
        %v1224 = vunpack.c.l.b16 %v935
        %v1225 = vunpack.c.l.b16 %v936
        %v1226 = vunpack.c.l.b16 %v937
        %v1227 = vunpack.c.l.b16 %v938
        %v1228 = vunpack.c.l.b16 %v939
        %v1229 = vunpack.c.l.b16 %v940
        %v1230 = vunpack.c.l.b16 %v941
        %v1231 = vunpack.c.l.b16 %v942
        %v1232 = vunpack.c.l.b16 %v943
        %v1233 = vunpack.c.l.b16 %v944
        %v1234 = vunpack.c.l.b16 %v945
        %v1235 = vunpack.c.l.b16 %v946
        %v1236 = vunpack.c.l.b16 %v947
        %v1237 = vunpack.c.l.b16 %v948
        %v1238 = vunpack.c.l.b16 %v949
        %v1239 = vunpack.c.l.b16 %v950
        %v1240 = vunpack.c.l.b16 %v951
        %v1241 = vunpack.c.l.b16 %v952
        %v1242 = vunpack.c.l.b16 %v953
        %v1243 = vunpack.c.l.b16 %v954
        %v1244 = vunpack.c.l.b16 %v955
        %v1245 = vunpack.c.l.b16 %v956
        %v1246 = vunpack.c.l.b16 %v957
        %v1247 = vunpack.c.l.b16 %v958
        %v1248 = vunpack.c.l.b16 %v959
        %v1249 = vunpack.c.l.b16 %v960
        %v1250 = vunpack.c.l.b16 %v961
        %v1251 = vunpack.c.l.b16 %v962
        %v1252 = vunpack.c.l.b16 %v963
        %v1253 = vunpack.c.l.b16 %v964
        %v1254 = vunpack.c.l.b16 %v965
        %v1255 = vunpack.c.l.b16 %v966
        %v1256 = vunpack.c.l.b16 %v967
        %v1257 = vunpack.c.l.b16 %v968
        %v1258 = vunpack.c.l.b16 %v969
        %v1259 = vunpack.c.l.b16 %v970
        %v1260 = vunpack.c.l.b16 %v971
        %v1261 = vunpack.c.l.b16 %v972
        %v1262 = vunpack.c.l.b16 %v973
        %v1263 = vunpack.c.l.b16 %v974
        %v1264 = vunpack.c.l.b16 %v975
        %v1265 = vunpack.c.l.b16 %v976
        %v1266 = vunpack.c.l.b16 %v977
        %v1267 = vunpack.c.l.b16 %v978
        %v1268 = vunpack.c.l.b16 %v979
        %v1269 = vunpack.c.l.b16 %v980
        %v1270 = vunpack.c.l.b16 %v981
        %v1271 = vunpack.c.l.b16 %v982
        %v1272 = vunpack.c.l.b16 %v983
        %v1273 = vunpack.c.l.b16 %v984
        %v1274 = vunpack.c.l.b16 %v985
        %v1275 = vunpack.c.l.b16 %v986
        %v1276 = vunpack.c.l.b16 %v987
        %v1277 = vunpack.c.l.b16 %v988
        %v1278 = vunpack.c.l.b16 %v989
        %v1279 = vunpack.c.l.b16 %v990
        %v1280 = vunpack.c.l.b16 %v991
        %v1281 = vunpack.c.l.b16 %v992
        %v1282 = vunpack.c.l.b16 %v993
        %v1283 = vunpack.c.l.b16 %v994
        %v1284 = vunpack.c.l.b16 %v995
        %v1285 = vunpack.c.l.b16 %v996
        %v1286 = vunpack.c.l.b16 %v997
        %v1287 = vunpack.c.l.b16 %v998
        %v1288 = vunpack.c.l.b16 %v999
        %v1289 = vunpack.c.l.b16 %v1000
        %v1290 = vunpack.c.l.b16 %v1001
        %v1291 = vunpack.c.l.b16 %v1002
        %v1292 = vunpack.c.l.b16 %v1003
        %v1293 = vunpack.c.l.b16 %v1004
        %v1294 = vunpack.c.l.b16 %v1005
        %v1295 = vunpack.c.l.b16 %v1006
        %v1296 = vunpack.c.l.b16 %v1007
        %v1297 = vunpack.c.l.b16 %v1008
        %v1298 = vunpack.c.l.b16 %v1009
        %v1299 = vunpack.c.l.b16 %v1010
        %v1300 = vunpack.c.l.b16 %v1011
        %v1301 = vunpack.c.l.b16 %v1012
        %v1302 = vunpack.c.l.b16 %v1013
        %v1303 = vunpack.c.l.b16 %v1014
        %v1304 = vunpack.c.l.b16 %v1015
        %v1305 = vunpack.c.l.b16 %v1016
        %v1306 = vunpack.c.l.b16 %v1017
        %v1307 = vunpack.c.l.b16 %v1018
        %v1308 = vunpack.c.l.b16 %v1019
        %v1309 = vunpack.c.l.b16 %v1020
        %v1310 = vunpack.c.l.b16 %v1021
        %v1311 = vunpack.c.l.b16 %v1022
        %v1312 = vunpack.c.l.b16 %v1023
        %v1313 = vunpack.c.l.b16 %v1024
        %v1314 = vunpack.c.l.b16 %v1025
        %v1315 = vunpack.c.l.b16 %v1026
        %v1316 = vunpack.c.l.b16 %v1027
        %v1317 = vunpack.c.l.b16 %v1028
        %v1318 = vunpack.c.l.b16 %v1029
        %v1319 = vunpack.c.l.b16 %v1030
        %v1320 = vunpack.c.l.b16 %v1031
        %v1321 = vunpack.c.l.b16 %v1032
        %v1322 = vunpack.c.l.b16 %v1033
        %v1323 = vunpack.c.l.b16 %v1034
        %v1324 = vunpack.c.l.b16 %v1035
        %v1325 = vunpack.c.l.b16 %v1036
        %v1326 = vunpack.c.l.b16 %v1037
        %v1327 = vunpack.c.l.b16 %v1038
        %v1328 = vunpack.c.l.b16 %v1039
        %v1329 = vunpack.c.l.b16 %v1040
        %v1330 = vunpack.c.l.b16 %v1041
        %v1331 = vunpack.c.l.b16 %v1042
        %v1332 = vunpack.c.l.b16 %v1043
        %v1333 = vunpack.c.l.b16 %v1044
        %v1334 = vunpack.c.l.b16 %v1045
        %v1335 = vpack.c.b16 %v1192, %v1191
        %v1336 = vpack.c.b16 %v1194, %v1193
        %v1337 = vpack.c.b16 %v1196, %v1195
        %v1338 = vpack.c.b16 %v1198, %v1197
        %v1339 = vpack.c.b16 %v1200, %v1199
        %v1340 = vpack.c.b16 %v1202, %v1201
        %v1341 = vpack.c.b16 %v1204, %v1203
        %v1342 = vpack.c.b16 %v1206, %v1205
        %v1343 = vpack.c.b16 %v1208, %v1207
        %v1344 = vpack.c.b16 %v1210, %v1209
        %v1345 = vpack.c.b16 %v1212, %v1211
        %v1346 = vpack.c.b16 %v1214, %v1213
        %v1347 = vpack.c.b16 %v1216, %v1215
        %v1348 = vpack.c.b16 %v1218, %v1217
        %v1349 = vpack.c.b16 %v1220, %v1219
        %v1350 = vpack.c.b16 %v1222, %v1221
        %v1351 = vpack.c.b16 %v1224, %v1223
        %v1352 = vpack.c.b16 %v1226, %v1225
        %v1353 = vpack.c.b16 %v1228, %v1227
        %v1354 = vpack.c.b16 %v1230, %v1229
        %v1355 = vpack.c.b16 %v1232, %v1231
        %v1356 = vpack.c.b16 %v1234, %v1233
        %v1357 = vpack.c.b16 %v1236, %v1235
        %v1358 = vpack.c.b16 %v1238, %v1237
        %v1359 = vpack.c.b16 %v1240, %v1239
        %v1360 = vpack.c.b16 %v1242, %v1241
        %v1361 = vpack.c.b16 %v1244, %v1243
        %v1362 = vpack.c.b16 %v1246, %v1245
        %v1363 = vpack.c.b16 %v1248, %v1247
        %v1364 = vpack.c.b16 %v1250, %v1249
        %v1365 = vpack.c.b16 %v1252, %v1251
        %v1366 = vpack.c.b16 %v1254, %v1253
        %v1367 = vpack.c.b16 %v1256, %v1255
        %v1368 = vpack.c.b16 %v1258, %v1257
        %v1369 = vpack.c.b16 %v1260, %v1259
        %v1370 = vpack.c.b16 %v1262, %v1261
        %v1371 = vpack.c.b16 %v1264, %v1263
        %v1372 = vpack.c.b16 %v1266, %v1265
        %v1373 = vpack.c.b16 %v1268, %v1267
        %v1374 = vpack.c.b16 %v1270, %v1269
        %v1375 = vpack.c.b16 %v1272, %v1271
        %v1376 = vpack.c.b16 %v1274, %v1273
        %v1377 = vpack.c.b16 %v1276, %v1275
        %v1378 = vpack.c.b16 %v1278, %v1277
        %v1379 = vpack.c.b16 %v1280, %v1279
        %v1380 = vpack.c.b16 %v1282, %v1281
        %v1381 = vpack.c.b16 %v1284, %v1283
        %v1382 = vpack.c.b16 %v1286, %v1285
        %v1383 = vpack.c.b16 %v1288, %v1287
        %v1384 = vpack.c.b16 %v1290, %v1289
        %v1385 = vpack.c.b16 %v1292, %v1291
        %v1386 = vpack.c.b16 %v1294, %v1293
        %v1387 = vpack.c.b16 %v1296, %v1295
        %v1388 = vpack.c.b16 %v1298, %v1297
        %v1389 = vpack.c.b16 %v1300, %v1299
        %v1390 = vpack.c.b16 %v1302, %v1301
        %v1391 = vpack.c.b16 %v1304, %v1303
        %v1392 = vpack.c.b16 %v1306, %v1305
        %v1393 = vpack.c.b16 %v1308, %v1307
        %v1394 = vpack.c.b16 %v1310, %v1309
        %v1395 = vpack.c.b16 %v1312, %v1311
        %v1396 = vpack.c.b16 %v1314, %v1313
        %v1397 = vpack.c.b16 %v1316, %v1315
        %v1398 = vpack.c.b16 %v1318, %v1317
        %v1399 = vpack.c.b16 %v1320, %v1319
        %v1400 = vpack.c.b16 %v1322, %v1321
        %v1401 = vpack.c.b16 %v1324, %v1323
        %v1402 = vpack.c.b16 %v1326, %v1325
        %v1403 = vpack.c.b16 %v1328, %v1327
        %v1404 = vpack.c.b16 %v1330, %v1329
        %v1405 = vpack.c.b16 %v1332, %v1331
        %v1406 = vpack.c.b16 %v1334, %v1333
        %1479 = vmatprep.subr.bf16.mxu0 0
        %1480 = vmatpush1.bf16.msra.mxu0 %v1342
        %1481 = vmatprep.subr.bf16.mxu0 0
        %1482 = vmatpush1.bf16.msra.mxu0 %v1341
        %1483 = vmatprep.subr.bf16.mxu0 0
        %1484 = vmatpush1.bf16.msra.mxu0 %v1340
        %1485 = vmatprep.subr.bf16.mxu0 0
        %1486 = vmatpush1.bf16.msra.mxu0 %v1339
        %1487 = vmatprep.subr.bf16.mxu0 0
        %1488 = vmatpush1.bf16.msra.mxu0 %v1338
        %1489 = vmatprep.subr.bf16.mxu0 0
        %1490 = vmatpush1.bf16.msra.mxu0 %v1337
        %1491 = vmatprep.subr.bf16.mxu0 0
        %1492 = vmatpush1.bf16.msra.mxu0 %v1336
        %1493 = vmatprep.subr.bf16.mxu0 0
        %1494 = vmatpush1.bf16.msra.mxu0 %v1335
        %1495 = vmatprep.subr.bf16.mxu0 0
        %1496 = vmatpush2.bf16.msra.mxu0 %v1350
        %1497 = vmatprep.subr.bf16.mxu0 0
        %1498 = vmatpush2.bf16.msra.mxu0 %v1349
        %1499 = vmatprep.subr.bf16.mxu0 0
        %1500 = vmatpush2.bf16.msra.mxu0 %v1348
        %1501 = vmatprep.subr.bf16.mxu0 0
        %1502 = vmatpush2.bf16.msra.mxu0 %v1347
        %1503 = vmatprep.subr.bf16.mxu0 0
        %1504 = vmatpush2.bf16.msra.mxu0 %v1346
        %1505 = vmatprep.subr.bf16.mxu0 0
        %1506 = vmatpush2.bf16.msra.mxu0 %v1345
        %1507 = vmatprep.subr.bf16.mxu0 0
        %1508 = vmatpush2.bf16.msra.mxu0 %v1344
        %1509 = vmatprep.subr.bf16.mxu0 0
        %1510 = vmatpush2.bf16.msra.mxu0 %v1343
        %1511 = vmatprep.mubr.bf16.mxu0 %v759
        %1512 = vmatmul.mubr.bf16.gmra.mxu0 %v758
        %v1513 = vpop.f32.mrf.mxu0
        %v1514 = vadd.f32 %v1046, %v1513
        %v1515 = vpop.f32.mrf.mxu0
        %v1516 = vpop.f32.mrf.mxu0
        %v1517 = vadd.f32 %v1046, %v1516
        %v1518 = vpop.f32.mrf.mxu0
        %1519 = vmatprep.mubr.bf16.mxu0 %v768
        %1520 = vmatmul.mubr.bf16.gmra.mxu0 %v767
        %v1521 = vpop.f32.mrf.mxu0
        %v1522 = vadd.f32 %v1046, %v1521
        %v1523 = vpop.f32.mrf.mxu0
        %v1524 = vpop.f32.mrf.mxu0
        %v1525 = vadd.f32 %v1046, %v1524
        %v1526 = vpop.f32.mrf.mxu0
        %1527 = vmatprep.mubr.bf16.mxu0 %v777
        %1528 = vmatmul.mubr.bf16.gmra.mxu0 %v776
        %v1529 = vpop.f32.mrf.mxu0
        %v1530 = vadd.f32 %v1046, %v1529
        %v1531 = vpop.f32.mrf.mxu0
        %v1532 = vpop.f32.mrf.mxu0
        %v1533 = vadd.f32 %v1046, %v1532
        %v1534 = vpop.f32.mrf.mxu0
        %1535 = vmatprep.mubr.bf16.mxu0 %v786
        %1536 = vmatmul.mubr.bf16.gmra.mxu0 %v785
        %v1537 = vpop.f32.mrf.mxu0
        %v1538 = vadd.f32 %v1046, %v1537
        %v1539 = vpop.f32.mrf.mxu0
        %v1540 = vpop.f32.mrf.mxu0
        %v1541 = vadd.f32 %v1046, %v1540
        %v1542 = vpop.f32.mrf.mxu0
        %1543 = vmatprep.mubr.bf16.mxu0 %v795
        %1544 = vmatmul.mubr.bf16.gmra.mxu0 %v794
        %v1545 = vpop.f32.mrf.mxu0
        %v1546 = vadd.f32 %v1046, %v1545
        %v1547 = vpop.f32.mrf.mxu0
        %v1548 = vpop.f32.mrf.mxu0
        %v1549 = vadd.f32 %v1046, %v1548
        %v1550 = vpop.f32.mrf.mxu0
        %1551 = vmatprep.mubr.bf16.mxu0 %v804
        %1552 = vmatmul.mubr.bf16.gmra.mxu0 %v803
        %v1553 = vpop.f32.mrf.mxu0
        %v1554 = vadd.f32 %v1046, %v1553
        %v1555 = vpop.f32.mrf.mxu0
        %v1556 = vpop.f32.mrf.mxu0
        %v1557 = vadd.f32 %v1046, %v1556
        %v1558 = vpop.f32.mrf.mxu0
        %1559 = vmatprep.mubr.bf16.mxu0 %v813
        %1560 = vmatmul.mubr.bf16.gmra.mxu0 %v812
        %v1561 = vpop.f32.mrf.mxu0
        %v1562 = vadd.f32 %v1046, %v1561
        %v1563 = vpop.f32.mrf.mxu0
        %v1564 = vpop.f32.mrf.mxu0
        %v1565 = vadd.f32 %v1046, %v1564
        %v1566 = vpop.f32.mrf.mxu0
        %1567 = vmatprep.mubr.bf16.mxu0 %v822
        %1568 = vmatmul.mubr.bf16.gmra.mxu0 %v821
        %v1569 = vpop.f32.mrf.mxu0
        %v1570 = vadd.f32 %v1046, %v1569
        %v1571 = vpop.f32.mrf.mxu0
        %v1572 = vpop.f32.mrf.mxu0
        %v1573 = vadd.f32 %v1046, %v1572
        %v1574 = vpop.f32.mrf.mxu0
        %1575 = vmatprep.mubr.bf16.mxu0 %v831
        %1576 = vmatmul.mubr.bf16.gmra.mxu0 %v830
        %v1577 = vpop.f32.mrf.mxu0
        %v1578 = vadd.f32 %v1046, %v1577
        %v1579 = vpop.f32.mrf.mxu0
        %v1580 = vpop.f32.mrf.mxu0
        %v1581 = vadd.f32 %v1046, %v1580
        %v1582 = vpop.f32.mrf.mxu0
        %1583 = vmatprep.mubr.bf16.mxu0 %v840
        %1584 = vmatmul.mubr.bf16.gmra.mxu0 %v839
        %v1585 = vpop.f32.mrf.mxu0
        %v1586 = vadd.f32 %v1046, %v1585
        %v1587 = vpop.f32.mrf.mxu0
        %v1588 = vpop.f32.mrf.mxu0
        %v1589 = vadd.f32 %v1046, %v1588
        %v1590 = vpop.f32.mrf.mxu0
        %1591 = vmatprep.mubr.bf16.mxu0 %v849
        %1592 = vmatmul.mubr.bf16.gmra.mxu0 %v848
        %v1593 = vpop.f32.mrf.mxu0
        %v1594 = vadd.f32 %v1046, %v1593
        %v1595 = vpop.f32.mrf.mxu0
        %v1596 = vpop.f32.mrf.mxu0
        %v1597 = vadd.f32 %v1046, %v1596
        %v1598 = vpop.f32.mrf.mxu0
        %1599 = vmatprep.mubr.bf16.mxu0 %v858
        %1600 = vmatmul.mubr.bf16.gmra.mxu0 %v857
        %v1601 = vpop.f32.mrf.mxu0
        %v1602 = vadd.f32 %v1046, %v1601
        %v1603 = vpop.f32.mrf.mxu0
        %v1604 = vpop.f32.mrf.mxu0
        %v1605 = vadd.f32 %v1046, %v1604
        %v1606 = vpop.f32.mrf.mxu0
        %1607 = vmatprep.mubr.bf16.mxu0 %v867
        %1608 = vmatmul.mubr.bf16.gmra.mxu0 %v866
        %v1609 = vpop.f32.mrf.mxu0
        %v1610 = vadd.f32 %v1046, %v1609
        %v1611 = vpop.f32.mrf.mxu0
        %v1612 = vpop.f32.mrf.mxu0
        %v1613 = vadd.f32 %v1046, %v1612
        %v1614 = vpop.f32.mrf.mxu0
        %1615 = vmatprep.mubr.bf16.mxu0 %v876
        %1616 = vmatmul.mubr.bf16.gmra.mxu0 %v875
        %v1617 = vpop.f32.mrf.mxu0
        %v1618 = vadd.f32 %v1046, %v1617
        %v1619 = vpop.f32.mrf.mxu0
        %v1620 = vpop.f32.mrf.mxu0
        %v1621 = vadd.f32 %v1046, %v1620
        %v1622 = vpop.f32.mrf.mxu0
        %1623 = vmatprep.mubr.bf16.mxu0 %v885
        %1624 = vmatmul.mubr.bf16.gmra.mxu0 %v884
        %v1625 = vpop.f32.mrf.mxu0
        %v1626 = vadd.f32 %v1046, %v1625
        %v1627 = vpop.f32.mrf.mxu0
        %v1628 = vpop.f32.mrf.mxu0
        %v1629 = vadd.f32 %v1046, %v1628
        %v1630 = vpop.f32.mrf.mxu0
        %1631 = vmatprep.mubr.bf16.mxu0 %v894
        %1632 = vmatmul.mubr.bf16.gmra.mxu0 %v893
        %v1633 = vpop.f32.mrf.mxu0
        %v1634 = vadd.f32 %v1046, %v1633
        %v1635 = vpop.f32.mrf.mxu0
        %v1636 = vpop.f32.mrf.mxu0
        %v1637 = vadd.f32 %v1046, %v1636
        %v1638 = vpop.f32.mrf.mxu0
        %1639 = vdwg.mxu0
        %1640 = vmatprep.subr.bf16.mxu0 0
        %1641 = vmatpush1.bf16.msra.mxu0 %v1358
        %1642 = vmatprep.subr.bf16.mxu0 0
        %1643 = vmatpush1.bf16.msra.mxu0 %v1357
        %1644 = vmatprep.subr.bf16.mxu0 0
        %1645 = vmatpush1.bf16.msra.mxu0 %v1356
        %1646 = vmatprep.subr.bf16.mxu0 0
        %1647 = vmatpush1.bf16.msra.mxu0 %v1355
        %1648 = vmatprep.subr.bf16.mxu0 0
        %1649 = vmatpush1.bf16.msra.mxu0 %v1354
        %1650 = vmatprep.subr.bf16.mxu0 0
        %1651 = vmatpush1.bf16.msra.mxu0 %v1353
        %1652 = vmatprep.subr.bf16.mxu0 0
        %1653 = vmatpush1.bf16.msra.mxu0 %v1352
        %1654 = vmatprep.subr.bf16.mxu0 0
        %1655 = vmatpush1.bf16.msra.mxu0 %v1351
        %1656 = vmatprep.subr.bf16.mxu0 0
        %1657 = vmatpush2.bf16.msra.mxu0 %v1366
        %1658 = vmatprep.subr.bf16.mxu0 0
        %1659 = vmatpush2.bf16.msra.mxu0 %v1365
        %1660 = vmatprep.subr.bf16.mxu0 0
        %1661 = vmatpush2.bf16.msra.mxu0 %v1364
        %1662 = vmatprep.subr.bf16.mxu0 0
        %1663 = vmatpush2.bf16.msra.mxu0 %v1363
        %1664 = vmatprep.subr.bf16.mxu0 0
        %1665 = vmatpush2.bf16.msra.mxu0 %v1362
        %1666 = vmatprep.subr.bf16.mxu0 0
        %1667 = vmatpush2.bf16.msra.mxu0 %v1361
        %1668 = vmatprep.subr.bf16.mxu0 0
        %1669 = vmatpush2.bf16.msra.mxu0 %v1360
        %1670 = vmatprep.subr.bf16.mxu0 0
        %1671 = vmatpush2.bf16.msra.mxu0 %v1359
        %1672 = vmatprep.mubr.bf16.mxu0 %v761
        %1673 = vmatmul.mubr.bf16.gmra.mxu0 %v760
        %v1674 = vpop.f32.mrf.mxu0
        %v1675 = vadd.f32 %v1514, %v1674
        %v1676 = vpop.f32.mrf.mxu0
        %v1677 = vpop.f32.mrf.mxu0
        %v1678 = vadd.f32 %v1517, %v1677
        %v1679 = vpop.f32.mrf.mxu0
        %1680 = vmatprep.mubr.bf16.mxu0 %v770
        %1681 = vmatmul.mubr.bf16.gmra.mxu0 %v769
        %v1682 = vpop.f32.mrf.mxu0
        %v1683 = vadd.f32 %v1522, %v1682
        %v1684 = vpop.f32.mrf.mxu0
        %v1685 = vpop.f32.mrf.mxu0
        %v1686 = vadd.f32 %v1525, %v1685
        %v1687 = vpop.f32.mrf.mxu0
        %1688 = vmatprep.mubr.bf16.mxu0 %v779
        %1689 = vmatmul.mubr.bf16.gmra.mxu0 %v778
        %v1690 = vpop.f32.mrf.mxu0
        %v1691 = vadd.f32 %v1530, %v1690
        %v1692 = vpop.f32.mrf.mxu0
        %v1693 = vpop.f32.mrf.mxu0
        %v1694 = vadd.f32 %v1533, %v1693
        %v1695 = vpop.f32.mrf.mxu0
        %1696 = vmatprep.mubr.bf16.mxu0 %v788
        %1697 = vmatmul.mubr.bf16.gmra.mxu0 %v787
        %v1698 = vpop.f32.mrf.mxu0
        %v1699 = vadd.f32 %v1538, %v1698
        %v1700 = vpop.f32.mrf.mxu0
        %v1701 = vpop.f32.mrf.mxu0
        %v1702 = vadd.f32 %v1541, %v1701
        %v1703 = vpop.f32.mrf.mxu0
        %1704 = vmatprep.mubr.bf16.mxu0 %v797
        %1705 = vmatmul.mubr.bf16.gmra.mxu0 %v796
        %v1706 = vpop.f32.mrf.mxu0
        %v1707 = vadd.f32 %v1546, %v1706
        %v1708 = vpop.f32.mrf.mxu0
        %v1709 = vpop.f32.mrf.mxu0
        %v1710 = vadd.f32 %v1549, %v1709
        %v1711 = vpop.f32.mrf.mxu0
        %1712 = vmatprep.mubr.bf16.mxu0 %v806
        %1713 = vmatmul.mubr.bf16.gmra.mxu0 %v805
        %v1714 = vpop.f32.mrf.mxu0
        %v1715 = vadd.f32 %v1554, %v1714
        %v1716 = vpop.f32.mrf.mxu0
        %v1717 = vpop.f32.mrf.mxu0
        %v1718 = vadd.f32 %v1557, %v1717
        %v1719 = vpop.f32.mrf.mxu0
        %1720 = vmatprep.mubr.bf16.mxu0 %v815
        %1721 = vmatmul.mubr.bf16.gmra.mxu0 %v814
        %v1722 = vpop.f32.mrf.mxu0
        %v1723 = vadd.f32 %v1562, %v1722
        %v1724 = vpop.f32.mrf.mxu0
        %v1725 = vpop.f32.mrf.mxu0
        %v1726 = vadd.f32 %v1565, %v1725
        %v1727 = vpop.f32.mrf.mxu0
        %1728 = vmatprep.mubr.bf16.mxu0 %v824
        %1729 = vmatmul.mubr.bf16.gmra.mxu0 %v823
        %v1730 = vpop.f32.mrf.mxu0
        %v1731 = vadd.f32 %v1570, %v1730
        %v1732 = vpop.f32.mrf.mxu0
        %v1733 = vpop.f32.mrf.mxu0
        %v1734 = vadd.f32 %v1573, %v1733
        %v1735 = vpop.f32.mrf.mxu0
        %1736 = vmatprep.mubr.bf16.mxu0 %v833
        %1737 = vmatmul.mubr.bf16.gmra.mxu0 %v832
        %v1738 = vpop.f32.mrf.mxu0
        %v1739 = vadd.f32 %v1578, %v1738
        %v1740 = vpop.f32.mrf.mxu0
        %v1741 = vpop.f32.mrf.mxu0
        %v1742 = vadd.f32 %v1581, %v1741
        %v1743 = vpop.f32.mrf.mxu0
        %1744 = vmatprep.mubr.bf16.mxu0 %v842
        %1745 = vmatmul.mubr.bf16.gmra.mxu0 %v841
        %v1746 = vpop.f32.mrf.mxu0
        %v1747 = vadd.f32 %v1586, %v1746
        %v1748 = vpop.f32.mrf.mxu0
        %v1749 = vpop.f32.mrf.mxu0
        %v1750 = vadd.f32 %v1589, %v1749
        %v1751 = vpop.f32.mrf.mxu0
        %1752 = vmatprep.mubr.bf16.mxu0 %v851
        %1753 = vmatmul.mubr.bf16.gmra.mxu0 %v850
        %v1754 = vpop.f32.mrf.mxu0
        %v1755 = vadd.f32 %v1594, %v1754
        %v1756 = vpop.f32.mrf.mxu0
        %v1757 = vpop.f32.mrf.mxu0
        %v1758 = vadd.f32 %v1597, %v1757
        %v1759 = vpop.f32.mrf.mxu0
        %1760 = vmatprep.mubr.bf16.mxu0 %v860
        %1761 = vmatmul.mubr.bf16.gmra.mxu0 %v859
        %v1762 = vpop.f32.mrf.mxu0
        %v1763 = vadd.f32 %v1602, %v1762
        %v1764 = vpop.f32.mrf.mxu0
        %v1765 = vpop.f32.mrf.mxu0
        %v1766 = vadd.f32 %v1605, %v1765
        %v1767 = vpop.f32.mrf.mxu0
        %1768 = vmatprep.mubr.bf16.mxu0 %v869
        %1769 = vmatmul.mubr.bf16.gmra.mxu0 %v868
        %v1770 = vpop.f32.mrf.mxu0
        %v1771 = vadd.f32 %v1610, %v1770
        %v1772 = vpop.f32.mrf.mxu0
        %v1773 = vpop.f32.mrf.mxu0
        %v1774 = vadd.f32 %v1613, %v1773
        %v1775 = vpop.f32.mrf.mxu0
        %1776 = vmatprep.mubr.bf16.mxu0 %v878
        %1777 = vmatmul.mubr.bf16.gmra.mxu0 %v877
        %v1778 = vpop.f32.mrf.mxu0
        %v1779 = vadd.f32 %v1618, %v1778
        %v1780 = vpop.f32.mrf.mxu0
        %v1781 = vpop.f32.mrf.mxu0
        %v1782 = vadd.f32 %v1621, %v1781
        %v1783 = vpop.f32.mrf.mxu0
        %1784 = vmatprep.mubr.bf16.mxu0 %v887
        %1785 = vmatmul.mubr.bf16.gmra.mxu0 %v886
        %v1786 = vpop.f32.mrf.mxu0
        %v1787 = vadd.f32 %v1626, %v1786
        %v1788 = vpop.f32.mrf.mxu0
        %v1789 = vpop.f32.mrf.mxu0
        %v1790 = vadd.f32 %v1629, %v1789
        %v1791 = vpop.f32.mrf.mxu0
        %1792 = vmatprep.mubr.bf16.mxu0 %v896
        %1793 = vmatmul.mubr.bf16.gmra.mxu0 %v895
        %v1794 = vpop.f32.mrf.mxu0
        %v1795 = vadd.f32 %v1634, %v1794
        %v1796 = vpop.f32.mrf.mxu0
        %v1797 = vpop.f32.mrf.mxu0
        %v1798 = vadd.f32 %v1637, %v1797
        %v1799 = vpop.f32.mrf.mxu0
        %1800 = vdwg.mxu0
        %1801 = vmatprep.subr.bf16.mxu0 0
        %1802 = vmatpush1.bf16.msra.mxu0 %v1374
        %1803 = vmatprep.subr.bf16.mxu0 0
        %1804 = vmatpush1.bf16.msra.mxu0 %v1373
        %1805 = vmatprep.subr.bf16.mxu0 0
        %1806 = vmatpush1.bf16.msra.mxu0 %v1372
        %1807 = vmatprep.subr.bf16.mxu0 0
        %1808 = vmatpush1.bf16.msra.mxu0 %v1371
        %1809 = vmatprep.subr.bf16.mxu0 0
        %1810 = vmatpush1.bf16.msra.mxu0 %v1370
        %1811 = vmatprep.subr.bf16.mxu0 0
        %1812 = vmatpush1.bf16.msra.mxu0 %v1369
        %1813 = vmatprep.subr.bf16.mxu0 0
        %1814 = vmatpush1.bf16.msra.mxu0 %v1368
        %1815 = vmatprep.subr.bf16.mxu0 0
        %1816 = vmatpush1.bf16.msra.mxu0 %v1367
        %1817 = vmatprep.subr.bf16.mxu0 0
        %1818 = vmatpush2.bf16.msra.mxu0 %v1382
        %1819 = vmatprep.subr.bf16.mxu0 0
        %1820 = vmatpush2.bf16.msra.mxu0 %v1381
        %1821 = vmatprep.subr.bf16.mxu0 0
        %1822 = vmatpush2.bf16.msra.mxu0 %v1380
        %1823 = vmatprep.subr.bf16.mxu0 0
        %1824 = vmatpush2.bf16.msra.mxu0 %v1379
        %1825 = vmatprep.subr.bf16.mxu0 0
        %1826 = vmatpush2.bf16.msra.mxu0 %v1378
        %1827 = vmatprep.subr.bf16.mxu0 0
        %1828 = vmatpush2.bf16.msra.mxu0 %v1377
        %1829 = vmatprep.subr.bf16.mxu0 0
        %1830 = vmatpush2.bf16.msra.mxu0 %v1376
        %1831 = vmatprep.subr.bf16.mxu0 0
        %1832 = vmatpush2.bf16.msra.mxu0 %v1375
        %1833 = vmatprep.mubr.bf16.mxu0 %v763
        %1834 = vmatmul.mubr.bf16.gmra.mxu0 %v762
        %v1835 = vpop.f32.mrf.mxu0
        %v1836 = vadd.f32 %v1675, %v1835
        %v1837 = vpop.f32.mrf.mxu0
        %v1838 = vpop.f32.mrf.mxu0
        %v1839 = vadd.f32 %v1678, %v1838
        %v1840 = vpop.f32.mrf.mxu0
        %1841 = vmatprep.mubr.bf16.mxu0 %v772
        %1842 = vmatmul.mubr.bf16.gmra.mxu0 %v771
        %v1843 = vpop.f32.mrf.mxu0
        %v1844 = vadd.f32 %v1683, %v1843
        %v1845 = vpop.f32.mrf.mxu0
        %v1846 = vpop.f32.mrf.mxu0
        %v1847 = vadd.f32 %v1686, %v1846
        %v1848 = vpop.f32.mrf.mxu0
        %1849 = vmatprep.mubr.bf16.mxu0 %v781
        %1850 = vmatmul.mubr.bf16.gmra.mxu0 %v780
        %v1851 = vpop.f32.mrf.mxu0
        %v1852 = vadd.f32 %v1691, %v1851
        %v1853 = vpop.f32.mrf.mxu0
        %v1854 = vpop.f32.mrf.mxu0
        %v1855 = vadd.f32 %v1694, %v1854
        %v1856 = vpop.f32.mrf.mxu0
        %1857 = vmatprep.mubr.bf16.mxu0 %v790
        %1858 = vmatmul.mubr.bf16.gmra.mxu0 %v789
        %v1859 = vpop.f32.mrf.mxu0
        %v1860 = vadd.f32 %v1699, %v1859
        %v1861 = vpop.f32.mrf.mxu0
        %v1862 = vpop.f32.mrf.mxu0
        %v1863 = vadd.f32 %v1702, %v1862
        %v1864 = vpop.f32.mrf.mxu0
        %1865 = vmatprep.mubr.bf16.mxu0 %v799
        %1866 = vmatmul.mubr.bf16.gmra.mxu0 %v798
        %v1867 = vpop.f32.mrf.mxu0
        %v1868 = vadd.f32 %v1707, %v1867
        %v1869 = vpop.f32.mrf.mxu0
        %v1870 = vpop.f32.mrf.mxu0
        %v1871 = vadd.f32 %v1710, %v1870
        %v1872 = vpop.f32.mrf.mxu0
        %1873 = vmatprep.mubr.bf16.mxu0 %v808
        %1874 = vmatmul.mubr.bf16.gmra.mxu0 %v807
        %v1875 = vpop.f32.mrf.mxu0
        %v1876 = vadd.f32 %v1715, %v1875
        %v1877 = vpop.f32.mrf.mxu0
        %v1878 = vpop.f32.mrf.mxu0
        %v1879 = vadd.f32 %v1718, %v1878
        %v1880 = vpop.f32.mrf.mxu0
        %1881 = vmatprep.mubr.bf16.mxu0 %v817
        %1882 = vmatmul.mubr.bf16.gmra.mxu0 %v816
        %v1883 = vpop.f32.mrf.mxu0
        %v1884 = vadd.f32 %v1723, %v1883
        %v1885 = vpop.f32.mrf.mxu0
        %v1886 = vpop.f32.mrf.mxu0
        %v1887 = vadd.f32 %v1726, %v1886
        %v1888 = vpop.f32.mrf.mxu0
        %1889 = vmatprep.mubr.bf16.mxu0 %v826
        %1890 = vmatmul.mubr.bf16.gmra.mxu0 %v825
        %v1891 = vpop.f32.mrf.mxu0
        %v1892 = vadd.f32 %v1731, %v1891
        %v1893 = vpop.f32.mrf.mxu0
        %v1894 = vpop.f32.mrf.mxu0
        %v1895 = vadd.f32 %v1734, %v1894
        %v1896 = vpop.f32.mrf.mxu0
        %1897 = vmatprep.mubr.bf16.mxu0 %v835
        %1898 = vmatmul.mubr.bf16.gmra.mxu0 %v834
        %v1899 = vpop.f32.mrf.mxu0
        %v1900 = vadd.f32 %v1739, %v1899
        %v1901 = vpop.f32.mrf.mxu0
        %v1902 = vpop.f32.mrf.mxu0
        %v1903 = vadd.f32 %v1742, %v1902
        %v1904 = vpop.f32.mrf.mxu0
        %1905 = vmatprep.mubr.bf16.mxu0 %v844
        %1906 = vmatmul.mubr.bf16.gmra.mxu0 %v843
        %v1907 = vpop.f32.mrf.mxu0
        %v1908 = vadd.f32 %v1747, %v1907
        %v1909 = vpop.f32.mrf.mxu0
        %v1910 = vpop.f32.mrf.mxu0
        %v1911 = vadd.f32 %v1750, %v1910
        %v1912 = vpop.f32.mrf.mxu0
        %1913 = vmatprep.mubr.bf16.mxu0 %v853
        %1914 = vmatmul.mubr.bf16.gmra.mxu0 %v852
        %v1915 = vpop.f32.mrf.mxu0
        %v1916 = vadd.f32 %v1755, %v1915
        %v1917 = vpop.f32.mrf.mxu0
        %v1918 = vpop.f32.mrf.mxu0
        %v1919 = vadd.f32 %v1758, %v1918
        %v1920 = vpop.f32.mrf.mxu0
        %1921 = vmatprep.mubr.bf16.mxu0 %v862
        %1922 = vmatmul.mubr.bf16.gmra.mxu0 %v861
        %v1923 = vpop.f32.mrf.mxu0
        %v1924 = vadd.f32 %v1763, %v1923
        %v1925 = vpop.f32.mrf.mxu0
        %v1926 = vpop.f32.mrf.mxu0
        %v1927 = vadd.f32 %v1766, %v1926
        %v1928 = vpop.f32.mrf.mxu0
        %1929 = vmatprep.mubr.bf16.mxu0 %v871
        %1930 = vmatmul.mubr.bf16.gmra.mxu0 %v870
        %v1931 = vpop.f32.mrf.mxu0
        %v1932 = vadd.f32 %v1771, %v1931
        %v1933 = vpop.f32.mrf.mxu0
        %v1934 = vpop.f32.mrf.mxu0
        %v1935 = vadd.f32 %v1774, %v1934
        %v1936 = vpop.f32.mrf.mxu0
        %1937 = vmatprep.mubr.bf16.mxu0 %v880
        %1938 = vmatmul.mubr.bf16.gmra.mxu0 %v879
        %v1939 = vpop.f32.mrf.mxu0
        %v1940 = vadd.f32 %v1779, %v1939
        %v1941 = vpop.f32.mrf.mxu0
        %v1942 = vpop.f32.mrf.mxu0
        %v1943 = vadd.f32 %v1782, %v1942
        %v1944 = vpop.f32.mrf.mxu0
        %1945 = vmatprep.mubr.bf16.mxu0 %v889
        %1946 = vmatmul.mubr.bf16.gmra.mxu0 %v888
        %v1947 = vpop.f32.mrf.mxu0
        %v1948 = vadd.f32 %v1787, %v1947
        %v1949 = vpop.f32.mrf.mxu0
        %v1950 = vpop.f32.mrf.mxu0
        %v1951 = vadd.f32 %v1790, %v1950
        %v1952 = vpop.f32.mrf.mxu0
        %1953 = vmatprep.mubr.bf16.mxu0 %v898
        %1954 = vmatmul.mubr.bf16.gmra.mxu0 %v897
        %v1955 = vpop.f32.mrf.mxu0
        %v1956 = vadd.f32 %v1795, %v1955
        %v1957 = vpop.f32.mrf.mxu0
        %v1958 = vpop.f32.mrf.mxu0
        %v1959 = vadd.f32 %v1798, %v1958
        %v1960 = vpop.f32.mrf.mxu0
        %1961 = vdwg.mxu0
        %1962 = vmatprep.subr.bf16.mxu0 0
        %1963 = vmatpush1.bf16.msra.mxu0 %v1390
        %1964 = vmatprep.subr.bf16.mxu0 0
        %1965 = vmatpush1.bf16.msra.mxu0 %v1389
        %1966 = vmatprep.subr.bf16.mxu0 0
        %1967 = vmatpush1.bf16.msra.mxu0 %v1388
        %1968 = vmatprep.subr.bf16.mxu0 0
        %1969 = vmatpush1.bf16.msra.mxu0 %v1387
        %1970 = vmatprep.subr.bf16.mxu0 0
        %1971 = vmatpush1.bf16.msra.mxu0 %v1386
        %1972 = vmatprep.subr.bf16.mxu0 0
        %1973 = vmatpush1.bf16.msra.mxu0 %v1385
        %1974 = vmatprep.subr.bf16.mxu0 0
        %1975 = vmatpush1.bf16.msra.mxu0 %v1384
        %1976 = vmatprep.subr.bf16.mxu0 0
        %1977 = vmatpush1.bf16.msra.mxu0 %v1383
        %1978 = vmatprep.subr.bf16.mxu0 0
        %1979 = vmatpush2.bf16.msra.mxu0 %v1398
        %1980 = vmatprep.subr.bf16.mxu0 0
        %1981 = vmatpush2.bf16.msra.mxu0 %v1397
        %1982 = vmatprep.subr.bf16.mxu0 0
        %1983 = vmatpush2.bf16.msra.mxu0 %v1396
        %1984 = vmatprep.subr.bf16.mxu0 0
        %1985 = vmatpush2.bf16.msra.mxu0 %v1395
        %1986 = vmatprep.subr.bf16.mxu0 0
        %1987 = vmatpush2.bf16.msra.mxu0 %v1394
        %1988 = vmatprep.subr.bf16.mxu0 0
        %1989 = vmatpush2.bf16.msra.mxu0 %v1393
        %1990 = vmatprep.subr.bf16.mxu0 0
        %1991 = vmatpush2.bf16.msra.mxu0 %v1392
        %1992 = vmatprep.subr.bf16.mxu0 0
        %1993 = vmatpush2.bf16.msra.mxu0 %v1391
        %1994 = vmatprep.mubr.bf16.mxu0 %v765
        %1995 = vmatmul.mubr.bf16.gmra.mxu0 %v764
        %v1996 = vpop.f32.mrf.mxu0
        %v1997 = vadd.f32 %v1836, %v1996
        %v1998 = vpop.f32.mrf.mxu0
        %v1999 = vpop.f32.mrf.mxu0
        %v2000 = vadd.f32 %v1839, %v1999
        %v2001 = vpop.f32.mrf.mxu0
        %2002 = vmatprep.mubr.bf16.mxu0 %v774
        %2003 = vmatmul.mubr.bf16.gmra.mxu0 %v773
        %v2004 = vpop.f32.mrf.mxu0
        %v2005 = vadd.f32 %v1844, %v2004
        %v2006 = vpop.f32.mrf.mxu0
        %v2007 = vpop.f32.mrf.mxu0
        %v2008 = vadd.f32 %v1847, %v2007
        %v2009 = vpop.f32.mrf.mxu0
        %2010 = vmatprep.mubr.bf16.mxu0 %v783
        %2011 = vmatmul.mubr.bf16.gmra.mxu0 %v782
        %v2012 = vpop.f32.mrf.mxu0
        %v2013 = vadd.f32 %v1852, %v2012
        %v2014 = vpop.f32.mrf.mxu0
        %v2015 = vpop.f32.mrf.mxu0
        %v2016 = vadd.f32 %v1855, %v2015
        %v2017 = vpop.f32.mrf.mxu0
        %2018 = vmatprep.mubr.bf16.mxu0 %v792
        %2019 = vmatmul.mubr.bf16.gmra.mxu0 %v791
        %v2020 = vpop.f32.mrf.mxu0
        %v2021 = vadd.f32 %v1860, %v2020
        %v2022 = vpop.f32.mrf.mxu0
        %v2023 = vpop.f32.mrf.mxu0
        %v2024 = vadd.f32 %v1863, %v2023
        %v2025 = vpop.f32.mrf.mxu0
        %2026 = vmatprep.mubr.bf16.mxu0 %v801
        %2027 = vmatmul.mubr.bf16.gmra.mxu0 %v800
        %v2028 = vpop.f32.mrf.mxu0
        %v2029 = vadd.f32 %v1868, %v2028
        %v2030 = vpop.f32.mrf.mxu0
        %v2031 = vpop.f32.mrf.mxu0
        %v2032 = vadd.f32 %v1871, %v2031
        %v2033 = vpop.f32.mrf.mxu0
        %2034 = vmatprep.mubr.bf16.mxu0 %v810
        %2035 = vmatmul.mubr.bf16.gmra.mxu0 %v809
        %v2036 = vpop.f32.mrf.mxu0
        %v2037 = vadd.f32 %v1876, %v2036
        %v2038 = vpop.f32.mrf.mxu0
        %v2039 = vpop.f32.mrf.mxu0
        %v2040 = vadd.f32 %v1879, %v2039
        %v2041 = vpop.f32.mrf.mxu0
        %2042 = vmatprep.mubr.bf16.mxu0 %v819
        %2043 = vmatmul.mubr.bf16.gmra.mxu0 %v818
        %v2044 = vpop.f32.mrf.mxu0
        %v2045 = vadd.f32 %v1884, %v2044
        %v2046 = vpop.f32.mrf.mxu0
        %v2047 = vpop.f32.mrf.mxu0
        %v2048 = vadd.f32 %v1887, %v2047
        %v2049 = vpop.f32.mrf.mxu0
        %2050 = vmatprep.mubr.bf16.mxu0 %v828
        %2051 = vmatmul.mubr.bf16.gmra.mxu0 %v827
        %v2052 = vpop.f32.mrf.mxu0
        %v2053 = vadd.f32 %v1892, %v2052
        %v2054 = vpop.f32.mrf.mxu0
        %v2055 = vpop.f32.mrf.mxu0
        %v2056 = vadd.f32 %v1895, %v2055
        %v2057 = vpop.f32.mrf.mxu0
        %2058 = vmatprep.mubr.bf16.mxu0 %v837
        %2059 = vmatmul.mubr.bf16.gmra.mxu0 %v836
        %v2060 = vpop.f32.mrf.mxu0
        %v2061 = vadd.f32 %v1900, %v2060
        %v2062 = vpop.f32.mrf.mxu0
        %v2063 = vpop.f32.mrf.mxu0
        %v2064 = vadd.f32 %v1903, %v2063
        %v2065 = vpop.f32.mrf.mxu0
        %2066 = vmatprep.mubr.bf16.mxu0 %v846
        %2067 = vmatmul.mubr.bf16.gmra.mxu0 %v845
        %v2068 = vpop.f32.mrf.mxu0
        %v2069 = vadd.f32 %v1908, %v2068
        %v2070 = vpop.f32.mrf.mxu0
        %v2071 = vpop.f32.mrf.mxu0
        %v2072 = vadd.f32 %v1911, %v2071
        %v2073 = vpop.f32.mrf.mxu0
        %2074 = vmatprep.mubr.bf16.mxu0 %v855
        %2075 = vmatmul.mubr.bf16.gmra.mxu0 %v854
        %v2076 = vpop.f32.mrf.mxu0
        %v2077 = vadd.f32 %v1916, %v2076
        %v2078 = vpop.f32.mrf.mxu0
        %v2079 = vpop.f32.mrf.mxu0
        %v2080 = vadd.f32 %v1919, %v2079
        %v2081 = vpop.f32.mrf.mxu0
        %2082 = vmatprep.mubr.bf16.mxu0 %v864
        %2083 = vmatmul.mubr.bf16.gmra.mxu0 %v863
        %v2084 = vpop.f32.mrf.mxu0
        %v2085 = vadd.f32 %v1924, %v2084
        %v2086 = vpop.f32.mrf.mxu0
        %v2087 = vpop.f32.mrf.mxu0
        %v2088 = vadd.f32 %v1927, %v2087
        %v2089 = vpop.f32.mrf.mxu0
        %2090 = vmatprep.mubr.bf16.mxu0 %v873
        %2091 = vmatmul.mubr.bf16.gmra.mxu0 %v872
        %v2092 = vpop.f32.mrf.mxu0
        %v2093 = vadd.f32 %v1932, %v2092
        %v2094 = vpop.f32.mrf.mxu0
        %v2095 = vpop.f32.mrf.mxu0
        %v2096 = vadd.f32 %v1935, %v2095
        %v2097 = vpop.f32.mrf.mxu0
        %2098 = vmatprep.mubr.bf16.mxu0 %v882
        %2099 = vmatmul.mubr.bf16.gmra.mxu0 %v881
        %v2100 = vpop.f32.mrf.mxu0
        %v2101 = vadd.f32 %v1940, %v2100
        %v2102 = vpop.f32.mrf.mxu0
        %v2103 = vpop.f32.mrf.mxu0
        %v2104 = vadd.f32 %v1943, %v2103
        %v2105 = vpop.f32.mrf.mxu0
        %2106 = vmatprep.mubr.bf16.mxu0 %v891
        %2107 = vmatmul.mubr.bf16.gmra.mxu0 %v890
        %v2108 = vpop.f32.mrf.mxu0
        %v2109 = vadd.f32 %v1948, %v2108
        %v2110 = vpop.f32.mrf.mxu0
        %v2111 = vpop.f32.mrf.mxu0
        %v2112 = vadd.f32 %v1951, %v2111
        %v2113 = vpop.f32.mrf.mxu0
        %2114 = vmatprep.mubr.bf16.mxu0 %v900
        %2115 = vmatmul.mubr.bf16.gmra.mxu0 %v899
        %v2116 = vpop.f32.mrf.mxu0
        %v2117 = vadd.f32 %v1956, %v2116
        %v2118 = vpop.f32.mrf.mxu0
        %v2119 = vpop.f32.mrf.mxu0
        %v2120 = vadd.f32 %v1959, %v2119
        %v2121 = vpop.f32.mrf.mxu0
        %2122 = vdwg.mxu0
        %2123 = vmatprep.subr.bf16.mxu0 0
        %2124 = vmatpush1.bf16.msra.mxu0 %v1406
        %2125 = vmatprep.subr.bf16.mxu0 0
        %2126 = vmatpush1.bf16.msra.mxu0 %v1405
        %2127 = vmatprep.subr.bf16.mxu0 0
        %2128 = vmatpush1.bf16.msra.mxu0 %v1404
        %2129 = vmatprep.subr.bf16.mxu0 0
        %2130 = vmatpush1.bf16.msra.mxu0 %v1403
        %2131 = vmatprep.subr.bf16.mxu0 0
        %2132 = vmatpush1.bf16.msra.mxu0 %v1402
        %2133 = vmatprep.subr.bf16.mxu0 0
        %2134 = vmatpush1.bf16.msra.mxu0 %v1401
        %2135 = vmatprep.subr.bf16.mxu0 0
        %2136 = vmatpush1.bf16.msra.mxu0 %v1400
        %2137 = vmatprep.subr.bf16.mxu0 0
        %2138 = vmatpush1.bf16.msra.mxu0 %v1399
        %2139 = vmatprep.subr.bf16.mxu0 0
        %2140 = vmatpush2.bf16.msra.mxu0 0
        %2141 = vmatprep.subr.bf16.mxu0 0
        %2142 = vmatpush2.bf16.msra.mxu0 0
        %2143 = vmatprep.subr.bf16.mxu0 0
        %2144 = vmatpush2.bf16.msra.mxu0 0
        %2145 = vmatprep.subr.bf16.mxu0 0
        %2146 = vmatpush2.bf16.msra.mxu0 0
        %2147 = vmatprep.subr.bf16.mxu0 0
        %2148 = vmatpush2.bf16.msra.mxu0 0
        %2149 = vmatprep.subr.bf16.mxu0 0
        %2150 = vmatpush2.bf16.msra.mxu0 0
        %2151 = vmatprep.subr.bf16.mxu0 0
        %2152 = vmatpush2.bf16.msra.mxu0 0
        %2153 = vmatprep.subr.bf16.mxu0 0
        %2154 = vmatpush2.bf16.msra.mxu0 0
        %2155 = vmatprep.mubr.bf16.mxu0 0
        %2156 = vmatmul.mubr.bf16.gmra.mxu0 %v766
        %v2157 = vpop.f32.mrf.mxu0
        %v2158 = vadd.f32 %v1997, %v2157
        %v2159 = vpop.f32.mrf.mxu0
        %v2160 = vpop.f32.mrf.mxu0
        %v2161 = vadd.f32 %v2000, %v2160
        %v2162 = vpop.f32.mrf.mxu0
        %2163 = vmatprep.mubr.bf16.mxu0 0
        %2164 = vmatmul.mubr.bf16.gmra.mxu0 %v775
        %v2165 = vpop.f32.mrf.mxu0
        %v2166 = vadd.f32 %v2005, %v2165
        %v2167 = vpop.f32.mrf.mxu0
        %v2168 = vpop.f32.mrf.mxu0
        %v2169 = vadd.f32 %v2008, %v2168
        %v2170 = vpop.f32.mrf.mxu0
        %2171 = vmatprep.mubr.bf16.mxu0 0
        %2172 = vmatmul.mubr.bf16.gmra.mxu0 %v784
        %v2173 = vpop.f32.mrf.mxu0
        %v2174 = vadd.f32 %v2013, %v2173
        %v2175 = vpop.f32.mrf.mxu0
        %v2176 = vpop.f32.mrf.mxu0
        %v2177 = vadd.f32 %v2016, %v2176
        %v2178 = vpop.f32.mrf.mxu0
        %2179 = vmatprep.mubr.bf16.mxu0 0
        %2180 = vmatmul.mubr.bf16.gmra.mxu0 %v793
        %v2181 = vpop.f32.mrf.mxu0
        %v2182 = vadd.f32 %v2021, %v2181
        %v2183 = vpop.f32.mrf.mxu0
        %v2184 = vpop.f32.mrf.mxu0
        %v2185 = vadd.f32 %v2024, %v2184
        %v2186 = vpop.f32.mrf.mxu0
        %2187 = vmatprep.mubr.bf16.mxu0 0
        %2188 = vmatmul.mubr.bf16.gmra.mxu0 %v802
        %v2189 = vpop.f32.mrf.mxu0
        %v2190 = vadd.f32 %v2029, %v2189
        %v2191 = vpop.f32.mrf.mxu0
        %v2192 = vpop.f32.mrf.mxu0
        %v2193 = vadd.f32 %v2032, %v2192
        %v2194 = vpop.f32.mrf.mxu0
        %2195 = vmatprep.mubr.bf16.mxu0 0
        %2196 = vmatmul.mubr.bf16.gmra.mxu0 %v811
        %v2197 = vpop.f32.mrf.mxu0
        %v2198 = vadd.f32 %v2037, %v2197
        %v2199 = vpop.f32.mrf.mxu0
        %v2200 = vpop.f32.mrf.mxu0
        %v2201 = vadd.f32 %v2040, %v2200
        %v2202 = vpop.f32.mrf.mxu0
        %2203 = vmatprep.mubr.bf16.mxu0 0
        %2204 = vmatmul.mubr.bf16.gmra.mxu0 %v820
        %v2205 = vpop.f32.mrf.mxu0
        %v2206 = vadd.f32 %v2045, %v2205
        %v2207 = vpop.f32.mrf.mxu0
        %v2208 = vpop.f32.mrf.mxu0
        %v2209 = vadd.f32 %v2048, %v2208
        %v2210 = vpop.f32.mrf.mxu0
        %2211 = vmatprep.mubr.bf16.mxu0 0
        %2212 = vmatmul.mubr.bf16.gmra.mxu0 %v829
        %v2213 = vpop.f32.mrf.mxu0
        %v2214 = vadd.f32 %v2053, %v2213
        %v2215 = vpop.f32.mrf.mxu0
        %v2216 = vpop.f32.mrf.mxu0
        %v2217 = vadd.f32 %v2056, %v2216
        %v2218 = vpop.f32.mrf.mxu0
        %2219 = vmatprep.mubr.bf16.mxu0 0
        %2220 = vmatmul.mubr.bf16.gmra.mxu0 %v838
        %v2221 = vpop.f32.mrf.mxu0
        %v2222 = vadd.f32 %v2061, %v2221
        %v2223 = vpop.f32.mrf.mxu0
        %v2224 = vpop.f32.mrf.mxu0
        %v2225 = vadd.f32 %v2064, %v2224
        %v2226 = vpop.f32.mrf.mxu0
        %2227 = vmatprep.mubr.bf16.mxu0 0
        %2228 = vmatmul.mubr.bf16.gmra.mxu0 %v847
        %v2229 = vpop.f32.mrf.mxu0
        %v2230 = vadd.f32 %v2069, %v2229
        %v2231 = vpop.f32.mrf.mxu0
        %v2232 = vpop.f32.mrf.mxu0
        %v2233 = vadd.f32 %v2072, %v2232
        %v2234 = vpop.f32.mrf.mxu0
        %2235 = vmatprep.mubr.bf16.mxu0 0
        %2236 = vmatmul.mubr.bf16.gmra.mxu0 %v856
        %v2237 = vpop.f32.mrf.mxu0
        %v2238 = vadd.f32 %v2077, %v2237
        %v2239 = vpop.f32.mrf.mxu0
        %v2240 = vpop.f32.mrf.mxu0
        %v2241 = vadd.f32 %v2080, %v2240
        %v2242 = vpop.f32.mrf.mxu0
        %2243 = vmatprep.mubr.bf16.mxu0 0
        %2244 = vmatmul.mubr.bf16.gmra.mxu0 %v865
        %v2245 = vpop.f32.mrf.mxu0
        %v2246 = vadd.f32 %v2085, %v2245
        %v2247 = vpop.f32.mrf.mxu0
        %v2248 = vpop.f32.mrf.mxu0
        %v2249 = vadd.f32 %v2088, %v2248
        %v2250 = vpop.f32.mrf.mxu0
        %2251 = vmatprep.mubr.bf16.mxu0 0
        %2252 = vmatmul.mubr.bf16.gmra.mxu0 %v874
        %v2253 = vpop.f32.mrf.mxu0
        %v2254 = vadd.f32 %v2093, %v2253
        %v2255 = vpop.f32.mrf.mxu0
        %v2256 = vpop.f32.mrf.mxu0
        %v2257 = vadd.f32 %v2096, %v2256
        %v2258 = vpop.f32.mrf.mxu0
        %2259 = vmatprep.mubr.bf16.mxu0 0
        %2260 = vmatmul.mubr.bf16.gmra.mxu0 %v883
        %v2261 = vpop.f32.mrf.mxu0
        %v2262 = vadd.f32 %v2101, %v2261
        %v2263 = vpop.f32.mrf.mxu0
        %v2264 = vpop.f32.mrf.mxu0
        %v2265 = vadd.f32 %v2104, %v2264
        %v2266 = vpop.f32.mrf.mxu0
        %2267 = vmatprep.mubr.bf16.mxu0 0
        %2268 = vmatmul.mubr.bf16.gmra.mxu0 %v892
        %v2269 = vpop.f32.mrf.mxu0
        %v2270 = vadd.f32 %v2109, %v2269
        %v2271 = vpop.f32.mrf.mxu0
        %v2272 = vpop.f32.mrf.mxu0
        %v2273 = vadd.f32 %v2112, %v2272
        %v2274 = vpop.f32.mrf.mxu0
        %2275 = vmatprep.mubr.bf16.mxu0 0
        %2276 = vmatmul.mubr.bf16.gmra.mxu0 %v901
        %v2277 = vpop.f32.mrf.mxu0
        %v2278 = vadd.f32 %v2117, %v2277
        %v2279 = vpop.f32.mrf.mxu0
        %v2280 = vpop.f32.mrf.mxu0
        %v2281 = vadd.f32 %v2120, %v2280
        %v2282 = vpop.f32.mrf.mxu0
        %2283 = vdwg.mxu0
        %v2284 = vmax.f32 %v2158, 0.0
        %v2285 = vmax.f32 %v2161, 0.0
        %v2286 = vmax.f32 %v2166, 0.0
        %v2287 = vmax.f32 %v2169, 0.0
        %v2288 = vmax.f32 %v2174, 0.0
        %v2289 = vmax.f32 %v2177, 0.0
        %v2290 = vmax.f32 %v2182, 0.0
        %v2291 = vmax.f32 %v2185, 0.0
        %v2292 = vmax.f32 %v2190, 0.0
        %v2293 = vmax.f32 %v2193, 0.0
        %v2294 = vmax.f32 %v2198, 0.0
        %v2295 = vmax.f32 %v2201, 0.0
        %v2296 = vmax.f32 %v2206, 0.0
        %v2297 = vmax.f32 %v2209, 0.0
        %v2298 = vmax.f32 %v2214, 0.0
        %v2299 = vmax.f32 %v2217, 0.0
        %v2300 = vmax.f32 %v2222, 0.0
        %v2301 = vmax.f32 %v2225, 0.0
        %v2302 = vmax.f32 %v2230, 0.0
        %v2303 = vmax.f32 %v2233, 0.0
        %v2304 = vmax.f32 %v2238, 0.0
        %v2305 = vmax.f32 %v2241, 0.0
        %v2306 = vmax.f32 %v2246, 0.0
        %v2307 = vmax.f32 %v2249, 0.0
        %v2308 = vmax.f32 %v2254, 0.0
        %v2309 = vmax.f32 %v2257, 0.0
        %v2310 = vmax.f32 %v2262, 0.0
        %v2311 = vmax.f32 %v2265, 0.0
        %v2312 = vmax.f32 %v2270, 0.0
        %v2313 = vmax.f32 %v2273, 0.0
        %v2314 = vmax.f32 %v2278, 0.0
        %v2315 = vmax.f32 %v2281, 0.0
        %v2316 = vstv %s260
        %v2317 = vadd.f32 %v2284, %v2316
        %v2318 = vadd.f32 %v2285, %v2316
        %v2319 = vadd.f32 %v2286, %v2316
        %v2320 = vadd.f32 %v2287, %v2316
        %v2321 = vadd.f32 %v2288, %v2316
        %v2322 = vadd.f32 %v2289, %v2316
        %v2323 = vadd.f32 %v2290, %v2316
        %v2324 = vadd.f32 %v2291, %v2316
        %v2325 = vadd.f32 %v2292, %v2316
        %v2326 = vadd.f32 %v2293, %v2316
        %v2327 = vadd.f32 %v2294, %v2316
        %v2328 = vadd.f32 %v2295, %v2316
        %v2329 = vadd.f32 %v2296, %v2316
        %v2330 = vadd.f32 %v2297, %v2316
        %v2331 = vadd.f32 %v2298, %v2316
        %v2332 = vadd.f32 %v2299, %v2316
        %v2333 = vadd.f32 %v2300, %v2316
        %v2334 = vadd.f32 %v2301, %v2316
        %v2335 = vadd.f32 %v2302, %v2316
        %v2336 = vadd.f32 %v2303, %v2316
        %v2337 = vadd.f32 %v2304, %v2316
        %v2338 = vadd.f32 %v2305, %v2316
        %v2339 = vadd.f32 %v2306, %v2316
        %v2340 = vadd.f32 %v2307, %v2316
        %v2341 = vadd.f32 %v2308, %v2316
        %v2342 = vadd.f32 %v2309, %v2316
        %v2343 = vadd.f32 %v2310, %v2316
        %v2344 = vadd.f32 %v2311, %v2316
        %v2345 = vadd.f32 %v2312, %v2316
        %v2346 = vadd.f32 %v2313, %v2316
        %v2347 = vadd.f32 %v2314, %v2316
        %v2348 = vadd.f32 %v2315, %v2316
        %s2349 = scalar_lea.vmem [#allocation3], 24
        %2350 = vst [vmem:[%s2349 + $0x1] sm:$0xff] %v2317
        %2351 = vst [vmem:[%s2349 + $0x9] sm:$0xff] %v2318
        %2352 = vst [vmem:[%s2349 + $0x19] sm:$0xff] %v2319
        %2353 = vst [vmem:[%s2349 + $0x21] sm:$0xff] %v2320
        %2354 = vst [vmem:[%s2349 + $0x31] sm:$0xff] %v2321
        %2355 = vst [vmem:[%s2349 + $0x39] sm:$0xff] %v2322
        %2356 = vst [vmem:[%s2349 + $0x49] sm:$0xff] %v2323
        %2357 = vst [vmem:[%s2349 + $0x51] sm:$0xff] %v2324
        %2358 = vst [vmem:[%s2349 + $0x61] sm:$0xff] %v2325
        %2359 = vst [vmem:[%s2349 + $0x69] sm:$0xff] %v2326
        %2360 = vst [vmem:[%s2349 + $0x79] sm:$0xff] %v2327
        %2361 = vst [vmem:[%s2349 + $0x81] sm:$0xff] %v2328
        %2362 = vst [vmem:[%s2349 + $0x91] sm:$0xff] %v2329
        %2363 = vst [vmem:[%s2349 + $0x99] sm:$0xff] %v2330
        %2364 = vst [vmem:[%s2349 + $0xa9] sm:$0xff] %v2331
        %2365 = vst [vmem:[%s2349 + $0xb1] sm:$0xff] %v2332
        %2366 = vst [vmem:[%s2349 + $0xc1] sm:$0xff] %v2333
        %2367 = vst [vmem:[%s2349 + $0xc9] sm:$0xff] %v2334
        %2368 = vst [vmem:[%s2349 + $0xd9] sm:$0xff] %v2335
        %2369 = vst [vmem:[%s2349 + $0xe1] sm:$0xff] %v2336
        %2370 = vst [vmem:[%s2349 + $0xf1] sm:$0xff] %v2337
        %2371 = vst [vmem:[%s2349 + $0xf9] sm:$0xff] %v2338
        %2372 = vst [vmem:[%s2349 + $0x109] sm:$0xff] %v2339
        %2373 = vst [vmem:[%s2349 + $0x111] sm:$0xff] %v2340
        %2374 = vst [vmem:[%s2349 + $0x121] sm:$0xff] %v2341
        %2375 = vst [vmem:[%s2349 + $0x129] sm:$0xff] %v2342
        %2376 = vst [vmem:[%s2349 + $0x139] sm:$0xff] %v2343
        %2377 = vst [vmem:[%s2349 + $0x141] sm:$0xff] %v2344
        %2378 = vst [vmem:[%s2349 + $0x151] sm:$0xff] %v2345
        %2379 = vst [vmem:[%s2349 + $0x159] sm:$0xff] %v2346
        %2380 = vst [vmem:[%s2349 + $0x169] sm:$0xff] %v2347
        %2381 = vst [vmem:[%s2349 + $0x171] sm:$0xff] %v2348
        %v2382 = vld [vmem:[#allocation3] sm:$0xff]
        %v2383 = vld [vmem:[#allocation3 + $0x8] sm:$0xff]
        %v2384 = vld [vmem:[#allocation3 + $0x18] sm:$0xff]
        %v2385 = vld [vmem:[#allocation3 + $0x20] sm:$0xff]
        %v2386 = vld [vmem:[#allocation3 + $0x30] sm:$0xff]
        %v2387 = vld [vmem:[#allocation3 + $0x38] sm:$0xff]
        %v2388 = vld [vmem:[#allocation3 + $0x48] sm:$0xff]
        %v2389 = vld [vmem:[#allocation3 + $0x50] sm:$0xff]
        %v2390 = vld [vmem:[#allocation3 + $0x60] sm:$0xff]
        %v2391 = vld [vmem:[#allocation3 + $0x68] sm:$0xff]
        %v2392 = vld [vmem:[#allocation3 + $0x78] sm:$0xff]
        %v2393 = vld [vmem:[#allocation3 + $0x80] sm:$0xff]
        %v2394 = vld [vmem:[#allocation3 + $0x90] sm:$0xff]
        %v2395 = vld [vmem:[#allocation3 + $0x98] sm:$0xff]
        %v2396 = vld [vmem:[#allocation3 + $0xa8] sm:$0xff]
        %v2397 = vld [vmem:[#allocation3 + $0xb0] sm:$0xff]
        %v2398 = vld [vmem:[#allocation3 + $0xc0] sm:$0xff]
        %v2399 = vld [vmem:[#allocation3 + $0xc8] sm:$0xff]
        %v2400 = vld [vmem:[#allocation3 + $0xd8] sm:$0xff]
        %v2401 = vld [vmem:[#allocation3 + $0xe0] sm:$0xff]
        %v2402 = vld [vmem:[#allocation3 + $0xf0] sm:$0xff]
        %v2403 = vld [vmem:[#allocation3 + $0xf8] sm:$0xff]
        %v2404 = vld [vmem:[#allocation3 + $0x108] sm:$0xff]
        %v2405 = vld [vmem:[#allocation3 + $0x110] sm:$0xff]
        %v2406 = vld [vmem:[#allocation3 + $0x120] sm:$0xff]
        %v2407 = vld [vmem:[#allocation3 + $0x128] sm:$0xff]
        %v2408 = vld [vmem:[#allocation3 + $0x138] sm:$0xff]
        %v2409 = vld [vmem:[#allocation3 + $0x140] sm:$0xff]
        %v2410 = vld [vmem:[#allocation3 + $0x150] sm:$0xff]
        %v2411 = vld [vmem:[#allocation3 + $0x158] sm:$0xff]
        %v2412 = vld [vmem:[#allocation3 + $0x168] sm:$0xff]
        %v2413 = vld [vmem:[#allocation3 + $0x170] sm:$0xff]
        %v2414 = vld [vmem:[#allocation3 + $0x1] sm:$0xff]
        %v2415 = vld [vmem:[#allocation3 + $0x9] sm:$0xff]
        %v2416 = vld [vmem:[#allocation3 + $0x19] sm:$0xff]
        %v2417 = vld [vmem:[#allocation3 + $0x21] sm:$0xff]
        %v2418 = vld [vmem:[#allocation3 + $0x31] sm:$0xff]
        %v2419 = vld [vmem:[#allocation3 + $0x39] sm:$0xff]
        %v2420 = vld [vmem:[#allocation3 + $0x49] sm:$0xff]
        %v2421 = vld [vmem:[#allocation3 + $0x51] sm:$0xff]
        %v2422 = vld [vmem:[#allocation3 + $0x61] sm:$0xff]
        %v2423 = vld [vmem:[#allocation3 + $0x69] sm:$0xff]
        %v2424 = vld [vmem:[#allocation3 + $0x79] sm:$0xff]
        %v2425 = vld [vmem:[#allocation3 + $0x81] sm:$0xff]
        %v2426 = vld [vmem:[#allocation3 + $0x91] sm:$0xff]
        %v2427 = vld [vmem:[#allocation3 + $0x99] sm:$0xff]
        %v2428 = vld [vmem:[#allocation3 + $0xa9] sm:$0xff]
        %v2429 = vld [vmem:[#allocation3 + $0xb1] sm:$0xff]
        %v2430 = vld [vmem:[#allocation3 + $0xc1] sm:$0xff]
        %v2431 = vld [vmem:[#allocation3 + $0xc9] sm:$0xff]
        %v2432 = vld [vmem:[#allocation3 + $0xd9] sm:$0xff]
        %v2433 = vld [vmem:[#allocation3 + $0xe1] sm:$0xff]
        %v2434 = vld [vmem:[#allocation3 + $0xf1] sm:$0xff]
        %v2435 = vld [vmem:[#allocation3 + $0xf9] sm:$0xff]
        %v2436 = vld [vmem:[#allocation3 + $0x109] sm:$0xff]
        %v2437 = vld [vmem:[#allocation3 + $0x111] sm:$0xff]
        %v2438 = vld [vmem:[#allocation3 + $0x121] sm:$0xff]
        %v2439 = vld [vmem:[#allocation3 + $0x129] sm:$0xff]
        %v2440 = vld [vmem:[#allocation3 + $0x139] sm:$0xff]
        %v2441 = vld [vmem:[#allocation3 + $0x141] sm:$0xff]
        %v2442 = vld [vmem:[#allocation3 + $0x151] sm:$0xff]
        %v2443 = vld [vmem:[#allocation3 + $0x159] sm:$0xff]
        %v2444 = vld [vmem:[#allocation3 + $0x169] sm:$0xff]
        %v2445 = vld [vmem:[#allocation3 + $0x171] sm:$0xff]
        %v2446 = vld [vmem:[#allocation3 + $0x2] sm:$0xff]
        %v2447 = vld [vmem:[#allocation3 + $0xa] sm:$0xff]
        %v2448 = vld [vmem:[#allocation3 + $0x1a] sm:$0xff]
        %v2449 = vld [vmem:[#allocation3 + $0x22] sm:$0xff]
        %v2450 = vld [vmem:[#allocation3 + $0x32] sm:$0xff]
        %v2451 = vld [vmem:[#allocation3 + $0x3a] sm:$0xff]
        %v2452 = vld [vmem:[#allocation3 + $0x4a] sm:$0xff]
        %v2453 = vld [vmem:[#allocation3 + $0x52] sm:$0xff]
        %v2454 = vld [vmem:[#allocation3 + $0x62] sm:$0xff]
        %v2455 = vld [vmem:[#allocation3 + $0x6a] sm:$0xff]
        %v2456 = vld [vmem:[#allocation3 + $0x7a] sm:$0xff]
        %v2457 = vld [vmem:[#allocation3 + $0x82] sm:$0xff]
        %v2458 = vld [vmem:[#allocation3 + $0x92] sm:$0xff]
        %v2459 = vld [vmem:[#allocation3 + $0x9a] sm:$0xff]
        %v2460 = vld [vmem:[#allocation3 + $0xaa] sm:$0xff]
        %v2461 = vld [vmem:[#allocation3 + $0xb2] sm:$0xff]
        %v2462 = vld [vmem:[#allocation3 + $0xc2] sm:$0xff]
        %v2463 = vld [vmem:[#allocation3 + $0xca] sm:$0xff]
        %v2464 = vld [vmem:[#allocation3 + $0xda] sm:$0xff]
        %v2465 = vld [vmem:[#allocation3 + $0xe2] sm:$0xff]
        %v2466 = vld [vmem:[#allocation3 + $0xf2] sm:$0xff]
        %v2467 = vld [vmem:[#allocation3 + $0xfa] sm:$0xff]
        %v2468 = vld [vmem:[#allocation3 + $0x10a] sm:$0xff]
        %v2469 = vld [vmem:[#allocation3 + $0x112] sm:$0xff]
        %v2470 = vld [vmem:[#allocation3 + $0x122] sm:$0xff]
        %v2471 = vld [vmem:[#allocation3 + $0x12a] sm:$0xff]
        %v2472 = vld [vmem:[#allocation3 + $0x13a] sm:$0xff]
        %v2473 = vld [vmem:[#allocation3 + $0x142] sm:$0xff]
        %v2474 = vld [vmem:[#allocation3 + $0x152] sm:$0xff]
        %v2475 = vld [vmem:[#allocation3 + $0x15a] sm:$0xff]
        %v2476 = vld [vmem:[#allocation3 + $0x16a] sm:$0xff]
        %v2477 = vld [vmem:[#allocation3 + $0x172] sm:$0xff]
        %v2478 = vld [vmem:[%s2349] sm:$0xff]
        %v2479 = vld [vmem:[%s2349 + $0x8] sm:$0xff]
        %v2480 = vld [vmem:[%s2349 + $0x18] sm:$0xff]
        %v2481 = vld [vmem:[%s2349 + $0x20] sm:$0xff]
        %v2482 = vld [vmem:[%s2349 + $0x30] sm:$0xff]
        %v2483 = vld [vmem:[%s2349 + $0x38] sm:$0xff]
        %v2484 = vld [vmem:[%s2349 + $0x48] sm:$0xff]
        %v2485 = vld [vmem:[%s2349 + $0x50] sm:$0xff]
        %v2486 = vld [vmem:[%s2349 + $0x60] sm:$0xff]
        %v2487 = vld [vmem:[%s2349 + $0x68] sm:$0xff]
        %v2488 = vld [vmem:[%s2349 + $0x78] sm:$0xff]
        %v2489 = vld [vmem:[%s2349 + $0x80] sm:$0xff]
        %v2490 = vld [vmem:[%s2349 + $0x90] sm:$0xff]
        %v2491 = vld [vmem:[%s2349 + $0x98] sm:$0xff]
        %v2492 = vld [vmem:[%s2349 + $0xa8] sm:$0xff]
        %v2493 = vld [vmem:[%s2349 + $0xb0] sm:$0xff]
        %v2494 = vld [vmem:[%s2349 + $0xc0] sm:$0xff]
        %v2495 = vld [vmem:[%s2349 + $0xc8] sm:$0xff]
        %v2496 = vld [vmem:[%s2349 + $0xd8] sm:$0xff]
        %v2497 = vld [vmem:[%s2349 + $0xe0] sm:$0xff]
        %v2498 = vld [vmem:[%s2349 + $0xf0] sm:$0xff]
        %v2499 = vld [vmem:[%s2349 + $0xf8] sm:$0xff]
        %v2500 = vld [vmem:[%s2349 + $0x108] sm:$0xff]
        %v2501 = vld [vmem:[%s2349 + $0x110] sm:$0xff]
        %v2502 = vld [vmem:[%s2349 + $0x120] sm:$0xff]
        %v2503 = vld [vmem:[%s2349 + $0x128] sm:$0xff]
        %v2504 = vld [vmem:[%s2349 + $0x138] sm:$0xff]
        %v2505 = vld [vmem:[%s2349 + $0x140] sm:$0xff]
        %v2506 = vld [vmem:[%s2349 + $0x150] sm:$0xff]
        %v2507 = vld [vmem:[%s2349 + $0x158] sm:$0xff]
        %v2508 = vld [vmem:[%s2349 + $0x168] sm:$0xff]
        %v2509 = vld [vmem:[%s2349 + $0x170] sm:$0xff]
        %v2510 = vld [vmem:[%s2349 + $0x1] sm:$0xff]
        %v2511 = vld [vmem:[%s2349 + $0x9] sm:$0xff]
        %v2512 = vld [vmem:[%s2349 + $0x19] sm:$0xff]
        %v2513 = vld [vmem:[%s2349 + $0x21] sm:$0xff]
        %v2514 = vld [vmem:[%s2349 + $0x31] sm:$0xff]
        %v2515 = vld [vmem:[%s2349 + $0x39] sm:$0xff]
        %v2516 = vld [vmem:[%s2349 + $0x49] sm:$0xff]
        %v2517 = vld [vmem:[%s2349 + $0x51] sm:$0xff]
        %v2518 = vld [vmem:[%s2349 + $0x61] sm:$0xff]
        %v2519 = vld [vmem:[%s2349 + $0x69] sm:$0xff]
        %v2520 = vld [vmem:[%s2349 + $0x79] sm:$0xff]
        %v2521 = vld [vmem:[%s2349 + $0x81] sm:$0xff]
        %v2522 = vld [vmem:[%s2349 + $0x91] sm:$0xff]
        %v2523 = vld [vmem:[%s2349 + $0x99] sm:$0xff]
        %v2524 = vld [vmem:[%s2349 + $0xa9] sm:$0xff]
        %v2525 = vld [vmem:[%s2349 + $0xb1] sm:$0xff]
        %v2526 = vld [vmem:[%s2349 + $0xc1] sm:$0xff]
        %v2527 = vld [vmem:[%s2349 + $0xc9] sm:$0xff]
        %v2528 = vld [vmem:[%s2349 + $0xd9] sm:$0xff]
        %v2529 = vld [vmem:[%s2349 + $0xe1] sm:$0xff]
        %v2530 = vld [vmem:[%s2349 + $0xf1] sm:$0xff]
        %v2531 = vld [vmem:[%s2349 + $0xf9] sm:$0xff]
        %v2532 = vld [vmem:[%s2349 + $0x109] sm:$0xff]
        %v2533 = vld [vmem:[%s2349 + $0x111] sm:$0xff]
        %v2534 = vld [vmem:[%s2349 + $0x121] sm:$0xff]
        %v2535 = vld [vmem:[%s2349 + $0x129] sm:$0xff]
        %v2536 = vld [vmem:[%s2349 + $0x139] sm:$0xff]
        %v2537 = vld [vmem:[%s2349 + $0x141] sm:$0xff]
        %v2538 = vld [vmem:[%s2349 + $0x151] sm:$0xff]
        %v2539 = vld [vmem:[%s2349 + $0x159] sm:$0xff]
        %v2540 = vld [vmem:[%s2349 + $0x169] sm:$0xff]
        %v2541 = vld [vmem:[%s2349 + $0x171] sm:$0xff]
        %v2542 = vld [vmem:[%s2349 + $0x2] sm:$0xff]
        %v2543 = vld [vmem:[%s2349 + $0xa] sm:$0xff]
        %v2544 = vld [vmem:[%s2349 + $0x1a] sm:$0xff]
        %v2545 = vld [vmem:[%s2349 + $0x22] sm:$0xff]
        %v2546 = vld [vmem:[%s2349 + $0x32] sm:$0xff]
        %v2547 = vld [vmem:[%s2349 + $0x3a] sm:$0xff]
        %v2548 = vld [vmem:[%s2349 + $0x4a] sm:$0xff]
        %v2549 = vld [vmem:[%s2349 + $0x52] sm:$0xff]
        %v2550 = vld [vmem:[%s2349 + $0x62] sm:$0xff]
        %v2551 = vld [vmem:[%s2349 + $0x6a] sm:$0xff]
        %v2552 = vld [vmem:[%s2349 + $0x7a] sm:$0xff]
        %v2553 = vld [vmem:[%s2349 + $0x82] sm:$0xff]
        %v2554 = vld [vmem:[%s2349 + $0x92] sm:$0xff]
        %v2555 = vld [vmem:[%s2349 + $0x9a] sm:$0xff]
        %v2556 = vld [vmem:[%s2349 + $0xaa] sm:$0xff]
        %v2557 = vld [vmem:[%s2349 + $0xb2] sm:$0xff]
        %v2558 = vld [vmem:[%s2349 + $0xc2] sm:$0xff]
        %v2559 = vld [vmem:[%s2349 + $0xca] sm:$0xff]
        %v2560 = vld [vmem:[%s2349 + $0xda] sm:$0xff]
        %v2561 = vld [vmem:[%s2349 + $0xe2] sm:$0xff]
        %v2562 = vld [vmem:[%s2349 + $0xf2] sm:$0xff]
        %v2563 = vld [vmem:[%s2349 + $0xfa] sm:$0xff]
        %v2564 = vld [vmem:[%s2349 + $0x10a] sm:$0xff]
        %v2565 = vld [vmem:[%s2349 + $0x112] sm:$0xff]
        %v2566 = vld [vmem:[%s2349 + $0x122] sm:$0xff]
        %v2567 = vld [vmem:[%s2349 + $0x12a] sm:$0xff]
        %v2568 = vld [vmem:[%s2349 + $0x13a] sm:$0xff]
        %v2569 = vld [vmem:[%s2349 + $0x142] sm:$0xff]
        %v2570 = vld [vmem:[%s2349 + $0x152] sm:$0xff]
        %v2571 = vld [vmem:[%s2349 + $0x15a] sm:$0xff]
        %v2572 = vld [vmem:[%s2349 + $0x16a] sm:$0xff]
        %v2573 = vld [vmem:[%s2349 + $0x172] sm:$0xff]
        %s2574 = scalar_lea.vmem [#allocation3], 48
        %v2575 = vld [vmem:[%s2574] sm:$0xff]
        %v2576 = vld [vmem:[%s2574 + $0x8] sm:$0xff]
        %v2577 = vld [vmem:[%s2574 + $0x18] sm:$0xff]
        %v2578 = vld [vmem:[%s2574 + $0x20] sm:$0xff]
        %v2579 = vld [vmem:[%s2574 + $0x30] sm:$0xff]
        %v2580 = vld [vmem:[%s2574 + $0x38] sm:$0xff]
        %v2581 = vld [vmem:[%s2574 + $0x48] sm:$0xff]
        %v2582 = vld [vmem:[%s2574 + $0x50] sm:$0xff]
        %v2583 = vld [vmem:[%s2574 + $0x60] sm:$0xff]
        %v2584 = vld [vmem:[%s2574 + $0x68] sm:$0xff]
        %v2585 = vld [vmem:[%s2574 + $0x78] sm:$0xff]
        %v2586 = vld [vmem:[%s2574 + $0x80] sm:$0xff]
        %v2587 = vld [vmem:[%s2574 + $0x90] sm:$0xff]
        %v2588 = vld [vmem:[%s2574 + $0x98] sm:$0xff]
        %v2589 = vld [vmem:[%s2574 + $0xa8] sm:$0xff]
        %v2590 = vld [vmem:[%s2574 + $0xb0] sm:$0xff]
        %v2591 = vld [vmem:[%s2574 + $0xc0] sm:$0xff]
        %v2592 = vld [vmem:[%s2574 + $0xc8] sm:$0xff]
        %v2593 = vld [vmem:[%s2574 + $0xd8] sm:$0xff]
        %v2594 = vld [vmem:[%s2574 + $0xe0] sm:$0xff]
        %v2595 = vld [vmem:[%s2574 + $0xf0] sm:$0xff]
        %v2596 = vld [vmem:[%s2574 + $0xf8] sm:$0xff]
        %v2597 = vld [vmem:[%s2574 + $0x108] sm:$0xff]
        %v2598 = vld [vmem:[%s2574 + $0x110] sm:$0xff]
        %v2599 = vld [vmem:[%s2574 + $0x120] sm:$0xff]
        %v2600 = vld [vmem:[%s2574 + $0x128] sm:$0xff]
        %v2601 = vld [vmem:[%s2574 + $0x138] sm:$0xff]
        %v2602 = vld [vmem:[%s2574 + $0x140] sm:$0xff]
        %v2603 = vld [vmem:[%s2574 + $0x150] sm:$0xff]
        %v2604 = vld [vmem:[%s2574 + $0x158] sm:$0xff]
        %v2605 = vld [vmem:[%s2574 + $0x168] sm:$0xff]
        %v2606 = vld [vmem:[%s2574 + $0x170] sm:$0xff]
        %v2607 = vld [vmem:[%s2574 + $0x1] sm:$0xff]
        %v2608 = vld [vmem:[%s2574 + $0x9] sm:$0xff]
        %v2609 = vld [vmem:[%s2574 + $0x19] sm:$0xff]
        %v2610 = vld [vmem:[%s2574 + $0x21] sm:$0xff]
        %v2611 = vld [vmem:[%s2574 + $0x31] sm:$0xff]
        %v2612 = vld [vmem:[%s2574 + $0x39] sm:$0xff]
        %v2613 = vld [vmem:[%s2574 + $0x49] sm:$0xff]
        %v2614 = vld [vmem:[%s2574 + $0x51] sm:$0xff]
        %v2615 = vld [vmem:[%s2574 + $0x61] sm:$0xff]
        %v2616 = vld [vmem:[%s2574 + $0x69] sm:$0xff]
        %v2617 = vld [vmem:[%s2574 + $0x79] sm:$0xff]
        %v2618 = vld [vmem:[%s2574 + $0x81] sm:$0xff]
        %v2619 = vld [vmem:[%s2574 + $0x91] sm:$0xff]
        %v2620 = vld [vmem:[%s2574 + $0x99] sm:$0xff]
        %v2621 = vld [vmem:[%s2574 + $0xa9] sm:$0xff]
        %v2622 = vld [vmem:[%s2574 + $0xb1] sm:$0xff]
        %v2623 = vld [vmem:[%s2574 + $0xc1] sm:$0xff]
        %v2624 = vld [vmem:[%s2574 + $0xc9] sm:$0xff]
        %v2625 = vld [vmem:[%s2574 + $0xd9] sm:$0xff]
        %v2626 = vld [vmem:[%s2574 + $0xe1] sm:$0xff]
        %v2627 = vld [vmem:[%s2574 + $0xf1] sm:$0xff]
        %v2628 = vld [vmem:[%s2574 + $0xf9] sm:$0xff]
        %v2629 = vld [vmem:[%s2574 + $0x109] sm:$0xff]
        %v2630 = vld [vmem:[%s2574 + $0x111] sm:$0xff]
        %v2631 = vld [vmem:[%s2574 + $0x121] sm:$0xff]
        %v2632 = vld [vmem:[%s2574 + $0x129] sm:$0xff]
        %v2633 = vld [vmem:[%s2574 + $0x139] sm:$0xff]
        %v2634 = vld [vmem:[%s2574 + $0x141] sm:$0xff]
        %v2635 = vld [vmem:[%s2574 + $0x151] sm:$0xff]
        %v2636 = vld [vmem:[%s2574 + $0x159] sm:$0xff]
        %v2637 = vld [vmem:[%s2574 + $0x169] sm:$0xff]
        %v2638 = vld [vmem:[%s2574 + $0x171] sm:$0xff]
        %v2639 = vld [vmem:[%s2574 + $0x2] sm:$0xff]
        %v2640 = vld [vmem:[%s2574 + $0xa] sm:$0xff]
        %v2641 = vld [vmem:[%s2574 + $0x1a] sm:$0xff]
        %v2642 = vld [vmem:[%s2574 + $0x22] sm:$0xff]
        %v2643 = vld [vmem:[%s2574 + $0x32] sm:$0xff]
        %v2644 = vld [vmem:[%s2574 + $0x3a] sm:$0xff]
        %v2645 = vld [vmem:[%s2574 + $0x4a] sm:$0xff]
        %v2646 = vld [vmem:[%s2574 + $0x52] sm:$0xff]
        %v2647 = vld [vmem:[%s2574 + $0x62] sm:$0xff]
        %v2648 = vld [vmem:[%s2574 + $0x6a] sm:$0xff]
        %v2649 = vld [vmem:[%s2574 + $0x7a] sm:$0xff]
        %v2650 = vld [vmem:[%s2574 + $0x82] sm:$0xff]
        %v2651 = vld [vmem:[%s2574 + $0x92] sm:$0xff]
        %v2652 = vld [vmem:[%s2574 + $0x9a] sm:$0xff]
        %v2653 = vld [vmem:[%s2574 + $0xaa] sm:$0xff]
        %v2654 = vld [vmem:[%s2574 + $0xb2] sm:$0xff]
        %v2655 = vld [vmem:[%s2574 + $0xc2] sm:$0xff]
        %v2656 = vld [vmem:[%s2574 + $0xca] sm:$0xff]
        %v2657 = vld [vmem:[%s2574 + $0xda] sm:$0xff]
        %v2658 = vld [vmem:[%s2574 + $0xe2] sm:$0xff]
        %v2659 = vld [vmem:[%s2574 + $0xf2] sm:$0xff]
        %v2660 = vld [vmem:[%s2574 + $0xfa] sm:$0xff]
        %v2661 = vld [vmem:[%s2574 + $0x10a] sm:$0xff]
        %v2662 = vld [vmem:[%s2574 + $0x112] sm:$0xff]
        %v2663 = vld [vmem:[%s2574 + $0x122] sm:$0xff]
        %v2664 = vld [vmem:[%s2574 + $0x12a] sm:$0xff]
        %v2665 = vld [vmem:[%s2574 + $0x13a] sm:$0xff]
        %v2666 = vld [vmem:[%s2574 + $0x142] sm:$0xff]
        %v2667 = vld [vmem:[%s2574 + $0x152] sm:$0xff]
        %v2668 = vld [vmem:[%s2574 + $0x15a] sm:$0xff]
        %v2669 = vld [vmem:[%s2574 + $0x16a] sm:$0xff]
        %v2670 = vld [vmem:[%s2574 + $0x172] sm:$0xff]
        %v2671 = vpack.c.bf16 %v2383, %v2382
        %v2672 = vpack.c.bf16 %v2415, %v2414
        %v2673 = vpack.c.bf16 %v2447, %v2446
        %v2674 = vpack.c.bf16 %v2479, %v2478
        %v2675 = vpack.c.bf16 %v2511, %v2510
        %v2676 = vpack.c.bf16 %v2543, %v2542
        %v2677 = vpack.c.bf16 %v2576, %v2575
        %v2678 = vpack.c.bf16 %v2608, %v2607
        %v2679 = vpack.c.bf16 %v2640, %v2639
        %v2680 = vpack.c.bf16 %v2385, %v2384
        %v2681 = vpack.c.bf16 %v2417, %v2416
        %v2682 = vpack.c.bf16 %v2449, %v2448
        %v2683 = vpack.c.bf16 %v2481, %v2480
        %v2684 = vpack.c.bf16 %v2513, %v2512
        %v2685 = vpack.c.bf16 %v2545, %v2544
        %v2686 = vpack.c.bf16 %v2578, %v2577
        %v2687 = vpack.c.bf16 %v2610, %v2609
        %v2688 = vpack.c.bf16 %v2642, %v2641
        %v2689 = vpack.c.bf16 %v2387, %v2386
        %v2690 = vpack.c.bf16 %v2419, %v2418
        %v2691 = vpack.c.bf16 %v2451, %v2450
        %v2692 = vpack.c.bf16 %v2483, %v2482
        %v2693 = vpack.c.bf16 %v2515, %v2514
        %v2694 = vpack.c.bf16 %v2547, %v2546
        %v2695 = vpack.c.bf16 %v2580, %v2579
        %v2696 = vpack.c.bf16 %v2612, %v2611
        %v2697 = vpack.c.bf16 %v2644, %v2643
        %v2698 = vpack.c.bf16 %v2389, %v2388
        %v2699 = vpack.c.bf16 %v2421, %v2420
        %v2700 = vpack.c.bf16 %v2453, %v2452
        %v2701 = vpack.c.bf16 %v2485, %v2484
        %v2702 = vpack.c.bf16 %v2517, %v2516
        %v2703 = vpack.c.bf16 %v2549, %v2548
        %v2704 = vpack.c.bf16 %v2582, %v2581
        %v2705 = vpack.c.bf16 %v2614, %v2613
        %v2706 = vpack.c.bf16 %v2646, %v2645
        %v2707 = vpack.c.bf16 %v2391, %v2390
        %v2708 = vpack.c.bf16 %v2423, %v2422
        %v2709 = vpack.c.bf16 %v2455, %v2454
        %v2710 = vpack.c.bf16 %v2487, %v2486
        %v2711 = vpack.c.bf16 %v2519, %v2518
        %v2712 = vpack.c.bf16 %v2551, %v2550
        %v2713 = vpack.c.bf16 %v2584, %v2583
        %v2714 = vpack.c.bf16 %v2616, %v2615
        %v2715 = vpack.c.bf16 %v2648, %v2647
        %v2716 = vpack.c.bf16 %v2393, %v2392
        %v2717 = vpack.c.bf16 %v2425, %v2424
        %v2718 = vpack.c.bf16 %v2457, %v2456
        %v2719 = vpack.c.bf16 %v2489, %v2488
        %v2720 = vpack.c.bf16 %v2521, %v2520
        %v2721 = vpack.c.bf16 %v2553, %v2552
        %v2722 = vpack.c.bf16 %v2586, %v2585
        %v2723 = vpack.c.bf16 %v2618, %v2617
        %v2724 = vpack.c.bf16 %v2650, %v2649
        %v2725 = vpack.c.bf16 %v2395, %v2394
        %v2726 = vpack.c.bf16 %v2427, %v2426
        %v2727 = vpack.c.bf16 %v2459, %v2458
        %v2728 = vpack.c.bf16 %v2491, %v2490
        %v2729 = vpack.c.bf16 %v2523, %v2522
        %v2730 = vpack.c.bf16 %v2555, %v2554
        %v2731 = vpack.c.bf16 %v2588, %v2587
        %v2732 = vpack.c.bf16 %v2620, %v2619
        %v2733 = vpack.c.bf16 %v2652, %v2651
        %v2734 = vpack.c.bf16 %v2397, %v2396
        %v2735 = vpack.c.bf16 %v2429, %v2428
        %v2736 = vpack.c.bf16 %v2461, %v2460
        %v2737 = vpack.c.bf16 %v2493, %v2492
        %v2738 = vpack.c.bf16 %v2525, %v2524
        %v2739 = vpack.c.bf16 %v2557, %v2556
        %v2740 = vpack.c.bf16 %v2590, %v2589
        %v2741 = vpack.c.bf16 %v2622, %v2621
        %v2742 = vpack.c.bf16 %v2654, %v2653
        %v2743 = vpack.c.bf16 %v2399, %v2398
        %v2744 = vpack.c.bf16 %v2431, %v2430
        %v2745 = vpack.c.bf16 %v2463, %v2462
        %v2746 = vpack.c.bf16 %v2495, %v2494
        %v2747 = vpack.c.bf16 %v2527, %v2526
        %v2748 = vpack.c.bf16 %v2559, %v2558
        %v2749 = vpack.c.bf16 %v2592, %v2591
        %v2750 = vpack.c.bf16 %v2624, %v2623
        %v2751 = vpack.c.bf16 %v2656, %v2655
        %v2752 = vpack.c.bf16 %v2401, %v2400
        %v2753 = vpack.c.bf16 %v2433, %v2432
        %v2754 = vpack.c.bf16 %v2465, %v2464
        %v2755 = vpack.c.bf16 %v2497, %v2496
        %v2756 = vpack.c.bf16 %v2529, %v2528
        %v2757 = vpack.c.bf16 %v2561, %v2560
        %v2758 = vpack.c.bf16 %v2594, %v2593
        %v2759 = vpack.c.bf16 %v2626, %v2625
        %v2760 = vpack.c.bf16 %v2658, %v2657
        %v2761 = vpack.c.bf16 %v2403, %v2402
        %v2762 = vpack.c.bf16 %v2435, %v2434
        %v2763 = vpack.c.bf16 %v2467, %v2466
        %v2764 = vpack.c.bf16 %v2499, %v2498
        %v2765 = vpack.c.bf16 %v2531, %v2530
        %v2766 = vpack.c.bf16 %v2563, %v2562
        %v2767 = vpack.c.bf16 %v2596, %v2595
        %v2768 = vpack.c.bf16 %v2628, %v2627
        %v2769 = vpack.c.bf16 %v2660, %v2659
        %v2770 = vpack.c.bf16 %v2405, %v2404
        %v2771 = vpack.c.bf16 %v2437, %v2436
        %v2772 = vpack.c.bf16 %v2469, %v2468
        %v2773 = vpack.c.bf16 %v2501, %v2500
        %v2774 = vpack.c.bf16 %v2533, %v2532
        %v2775 = vpack.c.bf16 %v2565, %v2564
        %v2776 = vpack.c.bf16 %v2598, %v2597
        %v2777 = vpack.c.bf16 %v2630, %v2629
        %v2778 = vpack.c.bf16 %v2662, %v2661
        %v2779 = vpack.c.bf16 %v2407, %v2406
        %v2780 = vpack.c.bf16 %v2439, %v2438
        %v2781 = vpack.c.bf16 %v2471, %v2470
        %v2782 = vpack.c.bf16 %v2503, %v2502
        %v2783 = vpack.c.bf16 %v2535, %v2534
        %v2784 = vpack.c.bf16 %v2567, %v2566
        %v2785 = vpack.c.bf16 %v2600, %v2599
        %v2786 = vpack.c.bf16 %v2632, %v2631
        %v2787 = vpack.c.bf16 %v2664, %v2663
        %v2788 = vpack.c.bf16 %v2409, %v2408
        %v2789 = vpack.c.bf16 %v2441, %v2440
        %v2790 = vpack.c.bf16 %v2473, %v2472
        %v2791 = vpack.c.bf16 %v2505, %v2504
        %v2792 = vpack.c.bf16 %v2537, %v2536
        %v2793 = vpack.c.bf16 %v2569, %v2568
        %v2794 = vpack.c.bf16 %v2602, %v2601
        %v2795 = vpack.c.bf16 %v2634, %v2633
        %v2796 = vpack.c.bf16 %v2666, %v2665
        %v2797 = vpack.c.bf16 %v2411, %v2410
        %v2798 = vpack.c.bf16 %v2443, %v2442
        %v2799 = vpack.c.bf16 %v2475, %v2474
        %v2800 = vpack.c.bf16 %v2507, %v2506
        %v2801 = vpack.c.bf16 %v2539, %v2538
        %v2802 = vpack.c.bf16 %v2571, %v2570
        %v2803 = vpack.c.bf16 %v2604, %v2603
        %v2804 = vpack.c.bf16 %v2636, %v2635
        %v2805 = vpack.c.bf16 %v2668, %v2667
        %v2806 = vpack.c.bf16 %v2413, %v2412
        %v2807 = vpack.c.bf16 %v2445, %v2444
        %v2808 = vpack.c.bf16 %v2477, %v2476
        %v2809 = vpack.c.bf16 %v2509, %v2508
        %v2810 = vpack.c.bf16 %v2541, %v2540
        %v2811 = vpack.c.bf16 %v2573, %v2572
        %v2812 = vpack.c.bf16 %v2606, %v2605
        %v2813 = vpack.c.bf16 %v2638, %v2637
        %v2814 = vpack.c.bf16 %v2670, %v2669
        %v2815 = vld [vmem:[#allocation11] sm:$0xf]
        %v2816 = vld [vmem:[#allocation11 + $0x4] sm:$0xf]
        %v2817 = vld [vmem:[#allocation11 + $0x8] sm:$0xf]
        %v2818 = vld [vmem:[#allocation11 + $0xc] sm:$0xf]
        %v2819 = vld [vmem:[#allocation11 + $0x10] sm:$0xf]
        %v2820 = vld [vmem:[#allocation11 + $0x14] sm:$0xf]
        %v2821 = vld [vmem:[#allocation11 + $0x18] sm:$0xf]
        %v2822 = vld [vmem:[#allocation11 + $0x1c] sm:$0xf]
        %v2823 = vld [vmem:[#allocation11 + $0x20] sm:$0xf]
        %v2824 = vld [vmem:[#allocation11 + $0x24] sm:$0xf]
        %v2825 = vld [vmem:[#allocation11 + $0x28] sm:$0xf]
        %v2826 = vld [vmem:[#allocation11 + $0x2c] sm:$0xf]
        %v2827 = vld [vmem:[#allocation11 + $0x30] sm:$0xf]
        %v2828 = vld [vmem:[#allocation11 + $0x34] sm:$0xf]
        %v2829 = vld [vmem:[#allocation11 + $0x38] sm:$0xf]
        %v2830 = vld [vmem:[#allocation11 + $0x3c] sm:$0xf]
        %v2831 = vld [vmem:[#allocation11 + $0x40] sm:$0xf]
        %v2832 = vld [vmem:[#allocation11 + $0x44] sm:$0xf]
        %v2833 = vld [vmem:[#allocation11 + $0x48] sm:$0xf]
        %v2834 = vld [vmem:[#allocation11 + $0x4c] sm:$0xf]
        %v2835 = vld [vmem:[#allocation11 + $0x50] sm:$0xf]
        %v2836 = vld [vmem:[#allocation11 + $0x54] sm:$0xf]
        %v2837 = vld [vmem:[#allocation11 + $0x58] sm:$0xf]
        %v2838 = vld [vmem:[#allocation11 + $0x5c] sm:$0xf]
        %v2839 = vld [vmem:[#allocation11 + $0x60] sm:$0xf]
        %v2840 = vld [vmem:[#allocation11 + $0x64] sm:$0xf]
        %v2841 = vld [vmem:[#allocation11 + $0x68] sm:$0xf]
        %v2842 = vld [vmem:[#allocation11 + $0x6c] sm:$0xf]
        %v2843 = vld [vmem:[#allocation11 + $0x70] sm:$0xf]
        %v2844 = vld [vmem:[#allocation11 + $0x74] sm:$0xf]
        %v2845 = vld [vmem:[#allocation11 + $0x78] sm:$0xf]
        %v2846 = vld [vmem:[#allocation11 + $0x7c] sm:$0xf]
        %v2847 = vld [vmem:[#allocation11 + $0x80] sm:$0xf]
        %v2848 = vld [vmem:[#allocation11 + $0x84] sm:$0xf]
        %v2849 = vld [vmem:[#allocation11 + $0x88] sm:$0xf]
        %v2850 = vld [vmem:[#allocation11 + $0x8c] sm:$0xf]
        %v2851 = vld [vmem:[#allocation11 + $0x90] sm:$0xf]
        %v2852 = vld [vmem:[#allocation11 + $0x94] sm:$0xf]
        %v2853 = vld [vmem:[#allocation11 + $0x98] sm:$0xf]
        %v2854 = vld [vmem:[#allocation11 + $0x9c] sm:$0xf]
        %v2855 = vld [vmem:[#allocation11 + $0xa0] sm:$0xf]
        %v2856 = vld [vmem:[#allocation11 + $0xa4] sm:$0xf]
        %v2857 = vld [vmem:[#allocation11 + $0xa8] sm:$0xf]
        %v2858 = vld [vmem:[#allocation11 + $0xac] sm:$0xf]
        %v2859 = vld [vmem:[#allocation11 + $0xb0] sm:$0xf]
        %v2860 = vld [vmem:[#allocation11 + $0xb4] sm:$0xf]
        %v2861 = vld [vmem:[#allocation11 + $0xb8] sm:$0xf]
        %v2862 = vld [vmem:[#allocation11 + $0xbc] sm:$0xf]
        %v2863 = vld [vmem:[#allocation11 + $0xc0] sm:$0xf]
        %v2864 = vld [vmem:[#allocation11 + $0xc4] sm:$0xf]
        %v2865 = vld [vmem:[#allocation11 + $0xc8] sm:$0xf]
        %v2866 = vld [vmem:[#allocation11 + $0xcc] sm:$0xf]
        %v2867 = vld [vmem:[#allocation11 + $0xd0] sm:$0xf]
        %v2868 = vld [vmem:[#allocation11 + $0xd4] sm:$0xf]
        %v2869 = vld [vmem:[#allocation11 + $0xd8] sm:$0xf]
        %v2870 = vld [vmem:[#allocation11 + $0xdc] sm:$0xf]
        %v2871 = vld [vmem:[#allocation11 + $0xe0] sm:$0xf]
        %v2872 = vld [vmem:[#allocation11 + $0xe4] sm:$0xf]
        %v2873 = vld [vmem:[#allocation11 + $0xe8] sm:$0xf]
        %v2874 = vld [vmem:[#allocation11 + $0xec] sm:$0xf]
        %v2875 = vld [vmem:[#allocation11 + $0xf0] sm:$0xf]
        %v2876 = vld [vmem:[#allocation11 + $0xf4] sm:$0xf]
        %v2877 = vld [vmem:[#allocation11 + $0xf8] sm:$0xf]
        %v2878 = vld [vmem:[#allocation11 + $0xfc] sm:$0xf]
        %v2879 = vld [vmem:[#allocation11 + $0x100] sm:$0xf]
        %v2880 = vld [vmem:[#allocation11 + $0x104] sm:$0xf]
        %v2881 = vld [vmem:[#allocation11 + $0x108] sm:$0xf]
        %v2882 = vld [vmem:[#allocation11 + $0x10c] sm:$0xf]
        %v2883 = vld [vmem:[#allocation11 + $0x110] sm:$0xf]
        %v2884 = vld [vmem:[#allocation11 + $0x114] sm:$0xf]
        %v2885 = vld [vmem:[#allocation11 + $0x118] sm:$0xf]
        %v2886 = vld [vmem:[#allocation11 + $0x11c] sm:$0xf]
        %v2887 = vld [vmem:[#allocation11 + $0x120] sm:$0xf]
        %v2888 = vld [vmem:[#allocation11 + $0x124] sm:$0xf]
        %v2889 = vld [vmem:[#allocation11 + $0x128] sm:$0xf]
        %v2890 = vld [vmem:[#allocation11 + $0x12c] sm:$0xf]
        %v2891 = vld [vmem:[#allocation11 + $0x130] sm:$0xf]
        %v2892 = vld [vmem:[#allocation11 + $0x134] sm:$0xf]
        %v2893 = vld [vmem:[#allocation11 + $0x138] sm:$0xf]
        %v2894 = vld [vmem:[#allocation11 + $0x13c] sm:$0xf]
        %v2895 = vld [vmem:[#allocation11 + $0x140] sm:$0xf]
        %v2896 = vld [vmem:[#allocation11 + $0x144] sm:$0xf]
        %v2897 = vld [vmem:[#allocation11 + $0x148] sm:$0xf]
        %v2898 = vld [vmem:[#allocation11 + $0x14c] sm:$0xf]
        %v2899 = vld [vmem:[#allocation11 + $0x150] sm:$0xf]
        %v2900 = vld [vmem:[#allocation11 + $0x154] sm:$0xf]
        %v2901 = vld [vmem:[#allocation11 + $0x158] sm:$0xf]
        %v2902 = vld [vmem:[#allocation11 + $0x15c] sm:$0xf]
        %v2903 = vld [vmem:[#allocation11 + $0x160] sm:$0xf]
        %v2904 = vld [vmem:[#allocation11 + $0x164] sm:$0xf]
        %v2905 = vld [vmem:[#allocation11 + $0x168] sm:$0xf]
        %v2906 = vld [vmem:[#allocation11 + $0x16c] sm:$0xf]
        %v2907 = vld [vmem:[#allocation11 + $0x170] sm:$0xf]
        %v2908 = vld [vmem:[#allocation11 + $0x174] sm:$0xf]
        %v2909 = vld [vmem:[#allocation11 + $0x178] sm:$0xf]
        %v2910 = vld [vmem:[#allocation11 + $0x17c] sm:$0xf]
        %v2911 = vld [vmem:[#allocation11 + $0x180] sm:$0xf]
        %v2912 = vld [vmem:[#allocation11 + $0x184] sm:$0xf]
        %v2913 = vld [vmem:[#allocation11 + $0x188] sm:$0xf]
        %v2914 = vld [vmem:[#allocation11 + $0x18c] sm:$0xf]
        %v2915 = vld [vmem:[#allocation11 + $0x190] sm:$0xf]
        %v2916 = vld [vmem:[#allocation11 + $0x194] sm:$0xf]
        %v2917 = vld [vmem:[#allocation11 + $0x198] sm:$0xf]
        %v2918 = vld [vmem:[#allocation11 + $0x19c] sm:$0xf]
        %v2919 = vld [vmem:[#allocation11 + $0x1a0] sm:$0xf]
        %v2920 = vld [vmem:[#allocation11 + $0x1a4] sm:$0xf]
        %v2921 = vld [vmem:[#allocation11 + $0x1a8] sm:$0xf]
        %v2922 = vld [vmem:[#allocation11 + $0x1ac] sm:$0xf]
        %v2923 = vld [vmem:[#allocation11 + $0x1b0] sm:$0xf]
        %v2924 = vld [vmem:[#allocation11 + $0x1b4] sm:$0xf]
        %v2925 = vld [vmem:[#allocation11 + $0x1b8] sm:$0xf]
        %v2926 = vld [vmem:[#allocation11 + $0x1bc] sm:$0xf]
        %v2927 = vld [vmem:[#allocation11 + $0x1c0] sm:$0xf]
        %v2928 = vld [vmem:[#allocation11 + $0x1c4] sm:$0xf]
        %v2929 = vld [vmem:[#allocation11 + $0x1c8] sm:$0xf]
        %v2930 = vld [vmem:[#allocation11 + $0x1cc] sm:$0xf]
        %v2931 = vld [vmem:[#allocation11 + $0x1d0] sm:$0xf]
        %v2932 = vld [vmem:[#allocation11 + $0x1d4] sm:$0xf]
        %v2933 = vld [vmem:[#allocation11 + $0x1d8] sm:$0xf]
        %v2934 = vld [vmem:[#allocation11 + $0x1dc] sm:$0xf]
        %v2935 = vld [vmem:[#allocation11 + $0x1e0] sm:$0xf]
        %v2936 = vld [vmem:[#allocation11 + $0x1e4] sm:$0xf]
        %v2937 = vld [vmem:[#allocation11 + $0x1e8] sm:$0xf]
        %v2938 = vld [vmem:[#allocation11 + $0x1ec] sm:$0xf]
        %v2939 = vld [vmem:[#allocation11 + $0x1f0] sm:$0xf]
        %v2940 = vld [vmem:[#allocation11 + $0x1f4] sm:$0xf]
        %v2941 = vld [vmem:[#allocation11 + $0x1f8] sm:$0xf]
        %v2942 = vld [vmem:[#allocation11 + $0x1fc] sm:$0xf]
        %v2943 = vld [vmem:[#allocation11 + $0x200] sm:$0xf]
        %v2944 = vld [vmem:[#allocation11 + $0x204] sm:$0xf]
        %v2945 = vld [vmem:[#allocation11 + $0x208] sm:$0xf]
        %v2946 = vld [vmem:[#allocation11 + $0x20c] sm:$0xf]
        %v2947 = vld [vmem:[#allocation11 + $0x210] sm:$0xf]
        %v2948 = vld [vmem:[#allocation11 + $0x214] sm:$0xf]
        %v2949 = vld [vmem:[#allocation11 + $0x218] sm:$0xf]
        %v2950 = vld [vmem:[#allocation11 + $0x21c] sm:$0xf]
        %v2951 = vld [vmem:[#allocation11 + $0x220] sm:$0xf]
        %v2952 = vld [vmem:[#allocation11 + $0x224] sm:$0xf]
        %v2953 = vld [vmem:[#allocation11 + $0x228] sm:$0xf]
        %v2954 = vld [vmem:[#allocation11 + $0x22c] sm:$0xf]
        %v2955 = vld [vmem:[#allocation11 + $0x230] sm:$0xf]
        %v2956 = vld [vmem:[#allocation11 + $0x234] sm:$0xf]
        %v2957 = vld [vmem:[#allocation11 + $0x238] sm:$0xf]
        %v2958 = vld [vmem:[#allocation11 + $0x23c] sm:$0xf]
        %v3103 = vunpack.c.l.b16 %v2815
        %v3104 = vunpack.c.l.b16 %v2816
        %v3105 = vunpack.c.l.b16 %v2817
        %v3106 = vunpack.c.l.b16 %v2818
        %v3107 = vunpack.c.l.b16 %v2819
        %v3108 = vunpack.c.l.b16 %v2820
        %v3109 = vunpack.c.l.b16 %v2821
        %v3110 = vunpack.c.l.b16 %v2822
        %v3111 = vunpack.c.l.b16 %v2823
        %v3112 = vunpack.c.l.b16 %v2824
        %v3113 = vunpack.c.l.b16 %v2825
        %v3114 = vunpack.c.l.b16 %v2826
        %v3115 = vunpack.c.l.b16 %v2827
        %v3116 = vunpack.c.l.b16 %v2828
        %v3117 = vunpack.c.l.b16 %v2829
        %v3118 = vunpack.c.l.b16 %v2830
        %v3119 = vunpack.c.l.b16 %v2831
        %v3120 = vunpack.c.l.b16 %v2832
        %v3121 = vunpack.c.l.b16 %v2833
        %v3122 = vunpack.c.l.b16 %v2834
        %v3123 = vunpack.c.l.b16 %v2835
        %v3124 = vunpack.c.l.b16 %v2836
        %v3125 = vunpack.c.l.b16 %v2837
        %v3126 = vunpack.c.l.b16 %v2838
        %v3127 = vunpack.c.l.b16 %v2839
        %v3128 = vunpack.c.l.b16 %v2840
        %v3129 = vunpack.c.l.b16 %v2841
        %v3130 = vunpack.c.l.b16 %v2842
        %v3131 = vunpack.c.l.b16 %v2843
        %v3132 = vunpack.c.l.b16 %v2844
        %v3133 = vunpack.c.l.b16 %v2845
        %v3134 = vunpack.c.l.b16 %v2846
        %v3135 = vunpack.c.l.b16 %v2847
        %v3136 = vunpack.c.l.b16 %v2848
        %v3137 = vunpack.c.l.b16 %v2849
        %v3138 = vunpack.c.l.b16 %v2850
        %v3139 = vunpack.c.l.b16 %v2851
        %v3140 = vunpack.c.l.b16 %v2852
        %v3141 = vunpack.c.l.b16 %v2853
        %v3142 = vunpack.c.l.b16 %v2854
        %v3143 = vunpack.c.l.b16 %v2855
        %v3144 = vunpack.c.l.b16 %v2856
        %v3145 = vunpack.c.l.b16 %v2857
        %v3146 = vunpack.c.l.b16 %v2858
        %v3147 = vunpack.c.l.b16 %v2859
        %v3148 = vunpack.c.l.b16 %v2860
        %v3149 = vunpack.c.l.b16 %v2861
        %v3150 = vunpack.c.l.b16 %v2862
        %v3151 = vunpack.c.l.b16 %v2863
        %v3152 = vunpack.c.l.b16 %v2864
        %v3153 = vunpack.c.l.b16 %v2865
        %v3154 = vunpack.c.l.b16 %v2866
        %v3155 = vunpack.c.l.b16 %v2867
        %v3156 = vunpack.c.l.b16 %v2868
        %v3157 = vunpack.c.l.b16 %v2869
        %v3158 = vunpack.c.l.b16 %v2870
        %v3159 = vunpack.c.l.b16 %v2871
        %v3160 = vunpack.c.l.b16 %v2872
        %v3161 = vunpack.c.l.b16 %v2873
        %v3162 = vunpack.c.l.b16 %v2874
        %v3163 = vunpack.c.l.b16 %v2875
        %v3164 = vunpack.c.l.b16 %v2876
        %v3165 = vunpack.c.l.b16 %v2877
        %v3166 = vunpack.c.l.b16 %v2878
        %v3167 = vunpack.c.l.b16 %v2879
        %v3168 = vunpack.c.l.b16 %v2880
        %v3169 = vunpack.c.l.b16 %v2881
        %v3170 = vunpack.c.l.b16 %v2882
        %v3171 = vunpack.c.l.b16 %v2883
        %v3172 = vunpack.c.l.b16 %v2884
        %v3173 = vunpack.c.l.b16 %v2885
        %v3174 = vunpack.c.l.b16 %v2886
        %v3175 = vunpack.c.l.b16 %v2887
        %v3176 = vunpack.c.l.b16 %v2888
        %v3177 = vunpack.c.l.b16 %v2889
        %v3178 = vunpack.c.l.b16 %v2890
        %v3179 = vunpack.c.l.b16 %v2891
        %v3180 = vunpack.c.l.b16 %v2892
        %v3181 = vunpack.c.l.b16 %v2893
        %v3182 = vunpack.c.l.b16 %v2894
        %v3183 = vunpack.c.l.b16 %v2895
        %v3184 = vunpack.c.l.b16 %v2896
        %v3185 = vunpack.c.l.b16 %v2897
        %v3186 = vunpack.c.l.b16 %v2898
        %v3187 = vunpack.c.l.b16 %v2899
        %v3188 = vunpack.c.l.b16 %v2900
        %v3189 = vunpack.c.l.b16 %v2901
        %v3190 = vunpack.c.l.b16 %v2902
        %v3191 = vunpack.c.l.b16 %v2903
        %v3192 = vunpack.c.l.b16 %v2904
        %v3193 = vunpack.c.l.b16 %v2905
        %v3194 = vunpack.c.l.b16 %v2906
        %v3195 = vunpack.c.l.b16 %v2907
        %v3196 = vunpack.c.l.b16 %v2908
        %v3197 = vunpack.c.l.b16 %v2909
        %v3198 = vunpack.c.l.b16 %v2910
        %v3199 = vunpack.c.l.b16 %v2911
        %v3200 = vunpack.c.l.b16 %v2912
        %v3201 = vunpack.c.l.b16 %v2913
        %v3202 = vunpack.c.l.b16 %v2914
        %v3203 = vunpack.c.l.b16 %v2915
        %v3204 = vunpack.c.l.b16 %v2916
        %v3205 = vunpack.c.l.b16 %v2917
        %v3206 = vunpack.c.l.b16 %v2918
        %v3207 = vunpack.c.l.b16 %v2919
        %v3208 = vunpack.c.l.b16 %v2920
        %v3209 = vunpack.c.l.b16 %v2921
        %v3210 = vunpack.c.l.b16 %v2922
        %v3211 = vunpack.c.l.b16 %v2923
        %v3212 = vunpack.c.l.b16 %v2924
        %v3213 = vunpack.c.l.b16 %v2925
        %v3214 = vunpack.c.l.b16 %v2926
        %v3215 = vunpack.c.l.b16 %v2927
        %v3216 = vunpack.c.l.b16 %v2928
        %v3217 = vunpack.c.l.b16 %v2929
        %v3218 = vunpack.c.l.b16 %v2930
        %v3219 = vunpack.c.l.b16 %v2931
        %v3220 = vunpack.c.l.b16 %v2932
        %v3221 = vunpack.c.l.b16 %v2933
        %v3222 = vunpack.c.l.b16 %v2934
        %v3223 = vunpack.c.l.b16 %v2935
        %v3224 = vunpack.c.l.b16 %v2936
        %v3225 = vunpack.c.l.b16 %v2937
        %v3226 = vunpack.c.l.b16 %v2938
        %v3227 = vunpack.c.l.b16 %v2939
        %v3228 = vunpack.c.l.b16 %v2940
        %v3229 = vunpack.c.l.b16 %v2941
        %v3230 = vunpack.c.l.b16 %v2942
        %v3231 = vunpack.c.l.b16 %v2943
        %v3232 = vunpack.c.l.b16 %v2944
        %v3233 = vunpack.c.l.b16 %v2945
        %v3234 = vunpack.c.l.b16 %v2946
        %v3235 = vunpack.c.l.b16 %v2947
        %v3236 = vunpack.c.l.b16 %v2948
        %v3237 = vunpack.c.l.b16 %v2949
        %v3238 = vunpack.c.l.b16 %v2950
        %v3239 = vunpack.c.l.b16 %v2951
        %v3240 = vunpack.c.l.b16 %v2952
        %v3241 = vunpack.c.l.b16 %v2953
        %v3242 = vunpack.c.l.b16 %v2954
        %v3243 = vunpack.c.l.b16 %v2955
        %v3244 = vunpack.c.l.b16 %v2956
        %v3245 = vunpack.c.l.b16 %v2957
        %v3246 = vunpack.c.l.b16 %v2958
        %v3247 = vpack.c.b16 %v3104, %v3103
        %v3248 = vpack.c.b16 %v3106, %v3105
        %v3249 = vpack.c.b16 %v3108, %v3107
        %v3250 = vpack.c.b16 %v3110, %v3109
        %v3251 = vpack.c.b16 %v3112, %v3111
        %v3252 = vpack.c.b16 %v3114, %v3113
        %v3253 = vpack.c.b16 %v3116, %v3115
        %v3254 = vpack.c.b16 %v3118, %v3117
        %v3255 = vpack.c.b16 %v3120, %v3119
        %v3256 = vpack.c.b16 %v3122, %v3121
        %v3257 = vpack.c.b16 %v3124, %v3123
        %v3258 = vpack.c.b16 %v3126, %v3125
        %v3259 = vpack.c.b16 %v3128, %v3127
        %v3260 = vpack.c.b16 %v3130, %v3129
        %v3261 = vpack.c.b16 %v3132, %v3131
        %v3262 = vpack.c.b16 %v3134, %v3133
        %v3263 = vpack.c.b16 %v3136, %v3135
        %v3264 = vpack.c.b16 %v3138, %v3137
        %v3265 = vpack.c.b16 %v3140, %v3139
        %v3266 = vpack.c.b16 %v3142, %v3141
        %v3267 = vpack.c.b16 %v3144, %v3143
        %v3268 = vpack.c.b16 %v3146, %v3145
        %v3269 = vpack.c.b16 %v3148, %v3147
        %v3270 = vpack.c.b16 %v3150, %v3149
        %v3271 = vpack.c.b16 %v3152, %v3151
        %v3272 = vpack.c.b16 %v3154, %v3153
        %v3273 = vpack.c.b16 %v3156, %v3155
        %v3274 = vpack.c.b16 %v3158, %v3157
        %v3275 = vpack.c.b16 %v3160, %v3159
        %v3276 = vpack.c.b16 %v3162, %v3161
        %v3277 = vpack.c.b16 %v3164, %v3163
        %v3278 = vpack.c.b16 %v3166, %v3165
        %v3279 = vpack.c.b16 %v3168, %v3167
        %v3280 = vpack.c.b16 %v3170, %v3169
        %v3281 = vpack.c.b16 %v3172, %v3171
        %v3282 = vpack.c.b16 %v3174, %v3173
        %v3283 = vpack.c.b16 %v3176, %v3175
        %v3284 = vpack.c.b16 %v3178, %v3177
        %v3285 = vpack.c.b16 %v3180, %v3179
        %v3286 = vpack.c.b16 %v3182, %v3181
        %v3287 = vpack.c.b16 %v3184, %v3183
        %v3288 = vpack.c.b16 %v3186, %v3185
        %v3289 = vpack.c.b16 %v3188, %v3187
        %v3290 = vpack.c.b16 %v3190, %v3189
        %v3291 = vpack.c.b16 %v3192, %v3191
        %v3292 = vpack.c.b16 %v3194, %v3193
        %v3293 = vpack.c.b16 %v3196, %v3195
        %v3294 = vpack.c.b16 %v3198, %v3197
        %v3295 = vpack.c.b16 %v3200, %v3199
        %v3296 = vpack.c.b16 %v3202, %v3201
        %v3297 = vpack.c.b16 %v3204, %v3203
        %v3298 = vpack.c.b16 %v3206, %v3205
        %v3299 = vpack.c.b16 %v3208, %v3207
        %v3300 = vpack.c.b16 %v3210, %v3209
        %v3301 = vpack.c.b16 %v3212, %v3211
        %v3302 = vpack.c.b16 %v3214, %v3213
        %v3303 = vpack.c.b16 %v3216, %v3215
        %v3304 = vpack.c.b16 %v3218, %v3217
        %v3305 = vpack.c.b16 %v3220, %v3219
        %v3306 = vpack.c.b16 %v3222, %v3221
        %v3307 = vpack.c.b16 %v3224, %v3223
        %v3308 = vpack.c.b16 %v3226, %v3225
        %v3309 = vpack.c.b16 %v3228, %v3227
        %v3310 = vpack.c.b16 %v3230, %v3229
        %v3311 = vpack.c.b16 %v3232, %v3231
        %v3312 = vpack.c.b16 %v3234, %v3233
        %v3313 = vpack.c.b16 %v3236, %v3235
        %v3314 = vpack.c.b16 %v3238, %v3237
        %v3315 = vpack.c.b16 %v3240, %v3239
        %v3316 = vpack.c.b16 %v3242, %v3241
        %v3317 = vpack.c.b16 %v3244, %v3243
        %v3318 = vpack.c.b16 %v3246, %v3245
        %3391 = vmatprep.subr.bf16.mxu0 0
        %3392 = vmatpush1.bf16.msra.mxu0 %v3254
        %3393 = vmatprep.subr.bf16.mxu0 0
        %3394 = vmatpush1.bf16.msra.mxu0 %v3253
        %3395 = vmatprep.subr.bf16.mxu0 0
        %3396 = vmatpush1.bf16.msra.mxu0 %v3252
        %3397 = vmatprep.subr.bf16.mxu0 0
        %3398 = vmatpush1.bf16.msra.mxu0 %v3251
        %3399 = vmatprep.subr.bf16.mxu0 0
        %3400 = vmatpush1.bf16.msra.mxu0 %v3250
        %3401 = vmatprep.subr.bf16.mxu0 0
        %3402 = vmatpush1.bf16.msra.mxu0 %v3249
        %3403 = vmatprep.subr.bf16.mxu0 0
        %3404 = vmatpush1.bf16.msra.mxu0 %v3248
        %3405 = vmatprep.subr.bf16.mxu0 0
        %3406 = vmatpush1.bf16.msra.mxu0 %v3247
        %3407 = vmatprep.subr.bf16.mxu0 0
        %3408 = vmatpush2.bf16.msra.mxu0 %v3262
        %3409 = vmatprep.subr.bf16.mxu0 0
        %3410 = vmatpush2.bf16.msra.mxu0 %v3261
        %3411 = vmatprep.subr.bf16.mxu0 0
        %3412 = vmatpush2.bf16.msra.mxu0 %v3260
        %3413 = vmatprep.subr.bf16.mxu0 0
        %3414 = vmatpush2.bf16.msra.mxu0 %v3259
        %3415 = vmatprep.subr.bf16.mxu0 0
        %3416 = vmatpush2.bf16.msra.mxu0 %v3258
        %3417 = vmatprep.subr.bf16.mxu0 0
        %3418 = vmatpush2.bf16.msra.mxu0 %v3257
        %3419 = vmatprep.subr.bf16.mxu0 0
        %3420 = vmatpush2.bf16.msra.mxu0 %v3256
        %3421 = vmatprep.subr.bf16.mxu0 0
        %3422 = vmatpush2.bf16.msra.mxu0 %v3255
        %3423 = vmatprep.mubr.bf16.mxu0 %v2672
        %3424 = vmatmul.mubr.bf16.gmra.mxu0 %v2671
        %v3425 = vpop.f32.mrf.mxu0
        %v3426 = vadd.f32 0.0, %v3425
        %v3427 = vpop.f32.mrf.mxu0
        %v3428 = vpop.f32.mrf.mxu0
        %v3429 = vadd.f32 0.0, %v3428
        %v3430 = vpop.f32.mrf.mxu0
        %3431 = vmatprep.mubr.bf16.mxu0 %v2681
        %3432 = vmatmul.mubr.bf16.gmra.mxu0 %v2680
        %v3433 = vpop.f32.mrf.mxu0
        %v3434 = vadd.f32 0.0, %v3433
        %v3435 = vpop.f32.mrf.mxu0
        %v3436 = vpop.f32.mrf.mxu0
        %v3437 = vadd.f32 0.0, %v3436
        %v3438 = vpop.f32.mrf.mxu0
        %3439 = vmatprep.mubr.bf16.mxu0 %v2690
        %3440 = vmatmul.mubr.bf16.gmra.mxu0 %v2689
        %v3441 = vpop.f32.mrf.mxu0
        %v3442 = vadd.f32 0.0, %v3441
        %v3443 = vpop.f32.mrf.mxu0
        %v3444 = vpop.f32.mrf.mxu0
        %v3445 = vadd.f32 0.0, %v3444
        %v3446 = vpop.f32.mrf.mxu0
        %3447 = vmatprep.mubr.bf16.mxu0 %v2699
        %3448 = vmatmul.mubr.bf16.gmra.mxu0 %v2698
        %v3449 = vpop.f32.mrf.mxu0
        %v3450 = vadd.f32 0.0, %v3449
        %v3451 = vpop.f32.mrf.mxu0
        %v3452 = vpop.f32.mrf.mxu0
        %v3453 = vadd.f32 0.0, %v3452
        %v3454 = vpop.f32.mrf.mxu0
        %3455 = vmatprep.mubr.bf16.mxu0 %v2708
        %3456 = vmatmul.mubr.bf16.gmra.mxu0 %v2707
        %v3457 = vpop.f32.mrf.mxu0
        %v3458 = vadd.f32 0.0, %v3457
        %v3459 = vpop.f32.mrf.mxu0
        %v3460 = vpop.f32.mrf.mxu0
        %v3461 = vadd.f32 0.0, %v3460
        %v3462 = vpop.f32.mrf.mxu0
        %3463 = vmatprep.mubr.bf16.mxu0 %v2717
        %3464 = vmatmul.mubr.bf16.gmra.mxu0 %v2716
        %v3465 = vpop.f32.mrf.mxu0
        %v3466 = vadd.f32 0.0, %v3465
        %v3467 = vpop.f32.mrf.mxu0
        %v3468 = vpop.f32.mrf.mxu0
        %v3469 = vadd.f32 0.0, %v3468
        %v3470 = vpop.f32.mrf.mxu0
        %3471 = vmatprep.mubr.bf16.mxu0 %v2726
        %3472 = vmatmul.mubr.bf16.gmra.mxu0 %v2725
        %v3473 = vpop.f32.mrf.mxu0
        %v3474 = vadd.f32 0.0, %v3473
        %v3475 = vpop.f32.mrf.mxu0
        %v3476 = vpop.f32.mrf.mxu0
        %v3477 = vadd.f32 0.0, %v3476
        %v3478 = vpop.f32.mrf.mxu0
        %3479 = vmatprep.mubr.bf16.mxu0 %v2735
        %3480 = vmatmul.mubr.bf16.gmra.mxu0 %v2734
        %v3481 = vpop.f32.mrf.mxu0
        %v3482 = vadd.f32 0.0, %v3481
        %v3483 = vpop.f32.mrf.mxu0
        %v3484 = vpop.f32.mrf.mxu0
        %v3485 = vadd.f32 0.0, %v3484
        %v3486 = vpop.f32.mrf.mxu0
        %3487 = vmatprep.mubr.bf16.mxu0 %v2744
        %3488 = vmatmul.mubr.bf16.gmra.mxu0 %v2743
        %v3489 = vpop.f32.mrf.mxu0
        %v3490 = vadd.f32 0.0, %v3489
        %v3491 = vpop.f32.mrf.mxu0
        %v3492 = vpop.f32.mrf.mxu0
        %v3493 = vadd.f32 0.0, %v3492
        %v3494 = vpop.f32.mrf.mxu0
        %3495 = vmatprep.mubr.bf16.mxu0 %v2753
        %3496 = vmatmul.mubr.bf16.gmra.mxu0 %v2752
        %v3497 = vpop.f32.mrf.mxu0
        %v3498 = vadd.f32 0.0, %v3497
        %v3499 = vpop.f32.mrf.mxu0
        %v3500 = vpop.f32.mrf.mxu0
        %v3501 = vadd.f32 0.0, %v3500
        %v3502 = vpop.f32.mrf.mxu0
        %3503 = vmatprep.mubr.bf16.mxu0 %v2762
        %3504 = vmatmul.mubr.bf16.gmra.mxu0 %v2761
        %v3505 = vpop.f32.mrf.mxu0
        %v3506 = vadd.f32 0.0, %v3505
        %v3507 = vpop.f32.mrf.mxu0
        %v3508 = vpop.f32.mrf.mxu0
        %v3509 = vadd.f32 0.0, %v3508
        %v3510 = vpop.f32.mrf.mxu0
        %3511 = vmatprep.mubr.bf16.mxu0 %v2771
        %3512 = vmatmul.mubr.bf16.gmra.mxu0 %v2770
        %v3513 = vpop.f32.mrf.mxu0
        %v3514 = vadd.f32 0.0, %v3513
        %v3515 = vpop.f32.mrf.mxu0
        %v3516 = vpop.f32.mrf.mxu0
        %v3517 = vadd.f32 0.0, %v3516
        %v3518 = vpop.f32.mrf.mxu0
        %3519 = vmatprep.mubr.bf16.mxu0 %v2780
        %3520 = vmatmul.mubr.bf16.gmra.mxu0 %v2779
        %v3521 = vpop.f32.mrf.mxu0
        %v3522 = vadd.f32 0.0, %v3521
        %v3523 = vpop.f32.mrf.mxu0
        %v3524 = vpop.f32.mrf.mxu0
        %v3525 = vadd.f32 0.0, %v3524
        %v3526 = vpop.f32.mrf.mxu0
        %3527 = vmatprep.mubr.bf16.mxu0 %v2789
        %3528 = vmatmul.mubr.bf16.gmra.mxu0 %v2788
        %v3529 = vpop.f32.mrf.mxu0
        %v3530 = vadd.f32 0.0, %v3529
        %v3531 = vpop.f32.mrf.mxu0
        %v3532 = vpop.f32.mrf.mxu0
        %v3533 = vadd.f32 0.0, %v3532
        %v3534 = vpop.f32.mrf.mxu0
        %3535 = vmatprep.mubr.bf16.mxu0 %v2798
        %3536 = vmatmul.mubr.bf16.gmra.mxu0 %v2797
        %v3537 = vpop.f32.mrf.mxu0
        %v3538 = vadd.f32 0.0, %v3537
        %v3539 = vpop.f32.mrf.mxu0
        %v3540 = vpop.f32.mrf.mxu0
        %v3541 = vadd.f32 0.0, %v3540
        %v3542 = vpop.f32.mrf.mxu0
        %3543 = vmatprep.mubr.bf16.mxu0 %v2807
        %3544 = vmatmul.mubr.bf16.gmra.mxu0 %v2806
        %v3545 = vpop.f32.mrf.mxu0
        %v3546 = vadd.f32 0.0, %v3545
        %v3547 = vpop.f32.mrf.mxu0
        %v3548 = vpop.f32.mrf.mxu0
        %v3549 = vadd.f32 0.0, %v3548
        %v3550 = vpop.f32.mrf.mxu0
        %3551 = vdwg.mxu0
        %3552 = vmatprep.subr.bf16.mxu0 0
        %3553 = vmatpush1.bf16.msra.mxu0 %v3270
        %3554 = vmatprep.subr.bf16.mxu0 0
        %3555 = vmatpush1.bf16.msra.mxu0 %v3269
        %3556 = vmatprep.subr.bf16.mxu0 0
        %3557 = vmatpush1.bf16.msra.mxu0 %v3268
        %3558 = vmatprep.subr.bf16.mxu0 0
        %3559 = vmatpush1.bf16.msra.mxu0 %v3267
        %3560 = vmatprep.subr.bf16.mxu0 0
        %3561 = vmatpush1.bf16.msra.mxu0 %v3266
        %3562 = vmatprep.subr.bf16.mxu0 0
        %3563 = vmatpush1.bf16.msra.mxu0 %v3265
        %3564 = vmatprep.subr.bf16.mxu0 0
        %3565 = vmatpush1.bf16.msra.mxu0 %v3264
        %3566 = vmatprep.subr.bf16.mxu0 0
        %3567 = vmatpush1.bf16.msra.mxu0 %v3263
        %3568 = vmatprep.subr.bf16.mxu0 0
        %3569 = vmatpush2.bf16.msra.mxu0 %v3278
        %3570 = vmatprep.subr.bf16.mxu0 0
        %3571 = vmatpush2.bf16.msra.mxu0 %v3277
        %3572 = vmatprep.subr.bf16.mxu0 0
        %3573 = vmatpush2.bf16.msra.mxu0 %v3276
        %3574 = vmatprep.subr.bf16.mxu0 0
        %3575 = vmatpush2.bf16.msra.mxu0 %v3275
        %3576 = vmatprep.subr.bf16.mxu0 0
        %3577 = vmatpush2.bf16.msra.mxu0 %v3274
        %3578 = vmatprep.subr.bf16.mxu0 0
        %3579 = vmatpush2.bf16.msra.mxu0 %v3273
        %3580 = vmatprep.subr.bf16.mxu0 0
        %3581 = vmatpush2.bf16.msra.mxu0 %v3272
        %3582 = vmatprep.subr.bf16.mxu0 0
        %3583 = vmatpush2.bf16.msra.mxu0 %v3271
        %3584 = vmatprep.mubr.bf16.mxu0 %v2674
        %3585 = vmatmul.mubr.bf16.gmra.mxu0 %v2673
        %v3586 = vpop.f32.mrf.mxu0
        %v3587 = vadd.f32 %v3426, %v3586
        %v3588 = vpop.f32.mrf.mxu0
        %v3589 = vpop.f32.mrf.mxu0
        %v3590 = vadd.f32 %v3429, %v3589
        %v3591 = vpop.f32.mrf.mxu0
        %3592 = vmatprep.mubr.bf16.mxu0 %v2683
        %3593 = vmatmul.mubr.bf16.gmra.mxu0 %v2682
        %v3594 = vpop.f32.mrf.mxu0
        %v3595 = vadd.f32 %v3434, %v3594
        %v3596 = vpop.f32.mrf.mxu0
        %v3597 = vpop.f32.mrf.mxu0
        %v3598 = vadd.f32 %v3437, %v3597
        %v3599 = vpop.f32.mrf.mxu0
        %3600 = vmatprep.mubr.bf16.mxu0 %v2692
        %3601 = vmatmul.mubr.bf16.gmra.mxu0 %v2691
        %v3602 = vpop.f32.mrf.mxu0
        %v3603 = vadd.f32 %v3442, %v3602
        %v3604 = vpop.f32.mrf.mxu0
        %v3605 = vpop.f32.mrf.mxu0
        %v3606 = vadd.f32 %v3445, %v3605
        %v3607 = vpop.f32.mrf.mxu0
        %3608 = vmatprep.mubr.bf16.mxu0 %v2701
        %3609 = vmatmul.mubr.bf16.gmra.mxu0 %v2700
        %v3610 = vpop.f32.mrf.mxu0
        %v3611 = vadd.f32 %v3450, %v3610
        %v3612 = vpop.f32.mrf.mxu0
        %v3613 = vpop.f32.mrf.mxu0
        %v3614 = vadd.f32 %v3453, %v3613
        %v3615 = vpop.f32.mrf.mxu0
        %3616 = vmatprep.mubr.bf16.mxu0 %v2710
        %3617 = vmatmul.mubr.bf16.gmra.mxu0 %v2709
        %v3618 = vpop.f32.mrf.mxu0
        %v3619 = vadd.f32 %v3458, %v3618
        %v3620 = vpop.f32.mrf.mxu0
        %v3621 = vpop.f32.mrf.mxu0
        %v3622 = vadd.f32 %v3461, %v3621
        %v3623 = vpop.f32.mrf.mxu0
        %3624 = vmatprep.mubr.bf16.mxu0 %v2719
        %3625 = vmatmul.mubr.bf16.gmra.mxu0 %v2718
        %v3626 = vpop.f32.mrf.mxu0
        %v3627 = vadd.f32 %v3466, %v3626
        %v3628 = vpop.f32.mrf.mxu0
        %v3629 = vpop.f32.mrf.mxu0
        %v3630 = vadd.f32 %v3469, %v3629
        %v3631 = vpop.f32.mrf.mxu0
        %3632 = vmatprep.mubr.bf16.mxu0 %v2728
        %3633 = vmatmul.mubr.bf16.gmra.mxu0 %v2727
        %v3634 = vpop.f32.mrf.mxu0
        %v3635 = vadd.f32 %v3474, %v3634
        %v3636 = vpop.f32.mrf.mxu0
        %v3637 = vpop.f32.mrf.mxu0
        %v3638 = vadd.f32 %v3477, %v3637
        %v3639 = vpop.f32.mrf.mxu0
        %3640 = vmatprep.mubr.bf16.mxu0 %v2737
        %3641 = vmatmul.mubr.bf16.gmra.mxu0 %v2736
        %v3642 = vpop.f32.mrf.mxu0
        %v3643 = vadd.f32 %v3482, %v3642
        %v3644 = vpop.f32.mrf.mxu0
        %v3645 = vpop.f32.mrf.mxu0
        %v3646 = vadd.f32 %v3485, %v3645
        %v3647 = vpop.f32.mrf.mxu0
        %3648 = vmatprep.mubr.bf16.mxu0 %v2746
        %3649 = vmatmul.mubr.bf16.gmra.mxu0 %v2745
        %v3650 = vpop.f32.mrf.mxu0
        %v3651 = vadd.f32 %v3490, %v3650
        %v3652 = vpop.f32.mrf.mxu0
        %v3653 = vpop.f32.mrf.mxu0
        %v3654 = vadd.f32 %v3493, %v3653
        %v3655 = vpop.f32.mrf.mxu0
        %3656 = vmatprep.mubr.bf16.mxu0 %v2755
        %3657 = vmatmul.mubr.bf16.gmra.mxu0 %v2754
        %v3658 = vpop.f32.mrf.mxu0
        %v3659 = vadd.f32 %v3498, %v3658
        %v3660 = vpop.f32.mrf.mxu0
        %v3661 = vpop.f32.mrf.mxu0
        %v3662 = vadd.f32 %v3501, %v3661
        %v3663 = vpop.f32.mrf.mxu0
        %3664 = vmatprep.mubr.bf16.mxu0 %v2764
        %3665 = vmatmul.mubr.bf16.gmra.mxu0 %v2763
        %v3666 = vpop.f32.mrf.mxu0
        %v3667 = vadd.f32 %v3506, %v3666
        %v3668 = vpop.f32.mrf.mxu0
        %v3669 = vpop.f32.mrf.mxu0
        %v3670 = vadd.f32 %v3509, %v3669
        %v3671 = vpop.f32.mrf.mxu0
        %3672 = vmatprep.mubr.bf16.mxu0 %v2773
        %3673 = vmatmul.mubr.bf16.gmra.mxu0 %v2772
        %v3674 = vpop.f32.mrf.mxu0
        %v3675 = vadd.f32 %v3514, %v3674
        %v3676 = vpop.f32.mrf.mxu0
        %v3677 = vpop.f32.mrf.mxu0
        %v3678 = vadd.f32 %v3517, %v3677
        %v3679 = vpop.f32.mrf.mxu0
        %3680 = vmatprep.mubr.bf16.mxu0 %v2782
        %3681 = vmatmul.mubr.bf16.gmra.mxu0 %v2781
        %v3682 = vpop.f32.mrf.mxu0
        %v3683 = vadd.f32 %v3522, %v3682
        %v3684 = vpop.f32.mrf.mxu0
        %v3685 = vpop.f32.mrf.mxu0
        %v3686 = vadd.f32 %v3525, %v3685
        %v3687 = vpop.f32.mrf.mxu0
        %3688 = vmatprep.mubr.bf16.mxu0 %v2791
        %3689 = vmatmul.mubr.bf16.gmra.mxu0 %v2790
        %v3690 = vpop.f32.mrf.mxu0
        %v3691 = vadd.f32 %v3530, %v3690
        %v3692 = vpop.f32.mrf.mxu0
        %v3693 = vpop.f32.mrf.mxu0
        %v3694 = vadd.f32 %v3533, %v3693
        %v3695 = vpop.f32.mrf.mxu0
        %3696 = vmatprep.mubr.bf16.mxu0 %v2800
        %3697 = vmatmul.mubr.bf16.gmra.mxu0 %v2799
        %v3698 = vpop.f32.mrf.mxu0
        %v3699 = vadd.f32 %v3538, %v3698
        %v3700 = vpop.f32.mrf.mxu0
        %v3701 = vpop.f32.mrf.mxu0
        %v3702 = vadd.f32 %v3541, %v3701
        %v3703 = vpop.f32.mrf.mxu0
        %3704 = vmatprep.mubr.bf16.mxu0 %v2809
        %3705 = vmatmul.mubr.bf16.gmra.mxu0 %v2808
        %v3706 = vpop.f32.mrf.mxu0
        %v3707 = vadd.f32 %v3546, %v3706
        %v3708 = vpop.f32.mrf.mxu0
        %v3709 = vpop.f32.mrf.mxu0
        %v3710 = vadd.f32 %v3549, %v3709
        %v3711 = vpop.f32.mrf.mxu0
        %3712 = vdwg.mxu0
        %3713 = vmatprep.subr.bf16.mxu0 0
        %3714 = vmatpush1.bf16.msra.mxu0 %v3286
        %3715 = vmatprep.subr.bf16.mxu0 0
        %3716 = vmatpush1.bf16.msra.mxu0 %v3285
        %3717 = vmatprep.subr.bf16.mxu0 0
        %3718 = vmatpush1.bf16.msra.mxu0 %v3284
        %3719 = vmatprep.subr.bf16.mxu0 0
        %3720 = vmatpush1.bf16.msra.mxu0 %v3283
        %3721 = vmatprep.subr.bf16.mxu0 0
        %3722 = vmatpush1.bf16.msra.mxu0 %v3282
        %3723 = vmatprep.subr.bf16.mxu0 0
        %3724 = vmatpush1.bf16.msra.mxu0 %v3281
        %3725 = vmatprep.subr.bf16.mxu0 0
        %3726 = vmatpush1.bf16.msra.mxu0 %v3280
        %3727 = vmatprep.subr.bf16.mxu0 0
        %3728 = vmatpush1.bf16.msra.mxu0 %v3279
        %3729 = vmatprep.subr.bf16.mxu0 0
        %3730 = vmatpush2.bf16.msra.mxu0 %v3294
        %3731 = vmatprep.subr.bf16.mxu0 0
        %3732 = vmatpush2.bf16.msra.mxu0 %v3293
        %3733 = vmatprep.subr.bf16.mxu0 0
        %3734 = vmatpush2.bf16.msra.mxu0 %v3292
        %3735 = vmatprep.subr.bf16.mxu0 0
        %3736 = vmatpush2.bf16.msra.mxu0 %v3291
        %3737 = vmatprep.subr.bf16.mxu0 0
        %3738 = vmatpush2.bf16.msra.mxu0 %v3290
        %3739 = vmatprep.subr.bf16.mxu0 0
        %3740 = vmatpush2.bf16.msra.mxu0 %v3289
        %3741 = vmatprep.subr.bf16.mxu0 0
        %3742 = vmatpush2.bf16.msra.mxu0 %v3288
        %3743 = vmatprep.subr.bf16.mxu0 0
        %3744 = vmatpush2.bf16.msra.mxu0 %v3287
        %3745 = vmatprep.mubr.bf16.mxu0 %v2676
        %3746 = vmatmul.mubr.bf16.gmra.mxu0 %v2675
        %v3747 = vpop.f32.mrf.mxu0
        %v3748 = vadd.f32 %v3587, %v3747
        %v3749 = vpop.f32.mrf.mxu0
        %v3750 = vpop.f32.mrf.mxu0
        %v3751 = vadd.f32 %v3590, %v3750
        %v3752 = vpop.f32.mrf.mxu0
        %3753 = vmatprep.mubr.bf16.mxu0 %v2685
        %3754 = vmatmul.mubr.bf16.gmra.mxu0 %v2684
        %v3755 = vpop.f32.mrf.mxu0
        %v3756 = vadd.f32 %v3595, %v3755
        %v3757 = vpop.f32.mrf.mxu0
        %v3758 = vpop.f32.mrf.mxu0
        %v3759 = vadd.f32 %v3598, %v3758
        %v3760 = vpop.f32.mrf.mxu0
        %3761 = vmatprep.mubr.bf16.mxu0 %v2694
        %3762 = vmatmul.mubr.bf16.gmra.mxu0 %v2693
        %v3763 = vpop.f32.mrf.mxu0
        %v3764 = vadd.f32 %v3603, %v3763
        %v3765 = vpop.f32.mrf.mxu0
        %v3766 = vpop.f32.mrf.mxu0
        %v3767 = vadd.f32 %v3606, %v3766
        %v3768 = vpop.f32.mrf.mxu0
        %3769 = vmatprep.mubr.bf16.mxu0 %v2703
        %3770 = vmatmul.mubr.bf16.gmra.mxu0 %v2702
        %v3771 = vpop.f32.mrf.mxu0
        %v3772 = vadd.f32 %v3611, %v3771
        %v3773 = vpop.f32.mrf.mxu0
        %v3774 = vpop.f32.mrf.mxu0
        %v3775 = vadd.f32 %v3614, %v3774
        %v3776 = vpop.f32.mrf.mxu0
        %3777 = vmatprep.mubr.bf16.mxu0 %v2712
        %3778 = vmatmul.mubr.bf16.gmra.mxu0 %v2711
        %v3779 = vpop.f32.mrf.mxu0
        %v3780 = vadd.f32 %v3619, %v3779
        %v3781 = vpop.f32.mrf.mxu0
        %v3782 = vpop.f32.mrf.mxu0
        %v3783 = vadd.f32 %v3622, %v3782
        %v3784 = vpop.f32.mrf.mxu0
        %3785 = vmatprep.mubr.bf16.mxu0 %v2721
        %3786 = vmatmul.mubr.bf16.gmra.mxu0 %v2720
        %v3787 = vpop.f32.mrf.mxu0
        %v3788 = vadd.f32 %v3627, %v3787
        %v3789 = vpop.f32.mrf.mxu0
        %v3790 = vpop.f32.mrf.mxu0
        %v3791 = vadd.f32 %v3630, %v3790
        %v3792 = vpop.f32.mrf.mxu0
        %3793 = vmatprep.mubr.bf16.mxu0 %v2730
        %3794 = vmatmul.mubr.bf16.gmra.mxu0 %v2729
        %v3795 = vpop.f32.mrf.mxu0
        %v3796 = vadd.f32 %v3635, %v3795
        %v3797 = vpop.f32.mrf.mxu0
        %v3798 = vpop.f32.mrf.mxu0
        %v3799 = vadd.f32 %v3638, %v3798
        %v3800 = vpop.f32.mrf.mxu0
        %3801 = vmatprep.mubr.bf16.mxu0 %v2739
        %3802 = vmatmul.mubr.bf16.gmra.mxu0 %v2738
        %v3803 = vpop.f32.mrf.mxu0
        %v3804 = vadd.f32 %v3643, %v3803
        %v3805 = vpop.f32.mrf.mxu0
        %v3806 = vpop.f32.mrf.mxu0
        %v3807 = vadd.f32 %v3646, %v3806
        %v3808 = vpop.f32.mrf.mxu0
        %3809 = vmatprep.mubr.bf16.mxu0 %v2748
        %3810 = vmatmul.mubr.bf16.gmra.mxu0 %v2747
        %v3811 = vpop.f32.mrf.mxu0
        %v3812 = vadd.f32 %v3651, %v3811
        %v3813 = vpop.f32.mrf.mxu0
        %v3814 = vpop.f32.mrf.mxu0
        %v3815 = vadd.f32 %v3654, %v3814
        %v3816 = vpop.f32.mrf.mxu0
        %3817 = vmatprep.mubr.bf16.mxu0 %v2757
        %3818 = vmatmul.mubr.bf16.gmra.mxu0 %v2756
        %v3819 = vpop.f32.mrf.mxu0
        %v3820 = vadd.f32 %v3659, %v3819
        %v3821 = vpop.f32.mrf.mxu0
        %v3822 = vpop.f32.mrf.mxu0
        %v3823 = vadd.f32 %v3662, %v3822
        %v3824 = vpop.f32.mrf.mxu0
        %3825 = vmatprep.mubr.bf16.mxu0 %v2766
        %3826 = vmatmul.mubr.bf16.gmra.mxu0 %v2765
        %v3827 = vpop.f32.mrf.mxu0
        %v3828 = vadd.f32 %v3667, %v3827
        %v3829 = vpop.f32.mrf.mxu0
        %v3830 = vpop.f32.mrf.mxu0
        %v3831 = vadd.f32 %v3670, %v3830
        %v3832 = vpop.f32.mrf.mxu0
        %3833 = vmatprep.mubr.bf16.mxu0 %v2775
        %3834 = vmatmul.mubr.bf16.gmra.mxu0 %v2774
        %v3835 = vpop.f32.mrf.mxu0
        %v3836 = vadd.f32 %v3675, %v3835
        %v3837 = vpop.f32.mrf.mxu0
        %v3838 = vpop.f32.mrf.mxu0
        %v3839 = vadd.f32 %v3678, %v3838
        %v3840 = vpop.f32.mrf.mxu0
        %3841 = vmatprep.mubr.bf16.mxu0 %v2784
        %3842 = vmatmul.mubr.bf16.gmra.mxu0 %v2783
        %v3843 = vpop.f32.mrf.mxu0
        %v3844 = vadd.f32 %v3683, %v3843
        %v3845 = vpop.f32.mrf.mxu0
        %v3846 = vpop.f32.mrf.mxu0
        %v3847 = vadd.f32 %v3686, %v3846
        %v3848 = vpop.f32.mrf.mxu0
        %3849 = vmatprep.mubr.bf16.mxu0 %v2793
        %3850 = vmatmul.mubr.bf16.gmra.mxu0 %v2792
        %v3851 = vpop.f32.mrf.mxu0
        %v3852 = vadd.f32 %v3691, %v3851
        %v3853 = vpop.f32.mrf.mxu0
        %v3854 = vpop.f32.mrf.mxu0
        %v3855 = vadd.f32 %v3694, %v3854
        %v3856 = vpop.f32.mrf.mxu0
        %3857 = vmatprep.mubr.bf16.mxu0 %v2802
        %3858 = vmatmul.mubr.bf16.gmra.mxu0 %v2801
        %v3859 = vpop.f32.mrf.mxu0
        %v3860 = vadd.f32 %v3699, %v3859
        %v3861 = vpop.f32.mrf.mxu0
        %v3862 = vpop.f32.mrf.mxu0
        %v3863 = vadd.f32 %v3702, %v3862
        %v3864 = vpop.f32.mrf.mxu0
        %3865 = vmatprep.mubr.bf16.mxu0 %v2811
        %3866 = vmatmul.mubr.bf16.gmra.mxu0 %v2810
        %v3867 = vpop.f32.mrf.mxu0
        %v3868 = vadd.f32 %v3707, %v3867
        %v3869 = vpop.f32.mrf.mxu0
        %v3870 = vpop.f32.mrf.mxu0
        %v3871 = vadd.f32 %v3710, %v3870
        %v3872 = vpop.f32.mrf.mxu0
        %3873 = vdwg.mxu0
        %3874 = vmatprep.subr.bf16.mxu0 0
        %3875 = vmatpush1.bf16.msra.mxu0 %v3302
        %3876 = vmatprep.subr.bf16.mxu0 0
        %3877 = vmatpush1.bf16.msra.mxu0 %v3301
        %3878 = vmatprep.subr.bf16.mxu0 0
        %3879 = vmatpush1.bf16.msra.mxu0 %v3300
        %3880 = vmatprep.subr.bf16.mxu0 0
        %3881 = vmatpush1.bf16.msra.mxu0 %v3299
        %3882 = vmatprep.subr.bf16.mxu0 0
        %3883 = vmatpush1.bf16.msra.mxu0 %v3298
        %3884 = vmatprep.subr.bf16.mxu0 0
        %3885 = vmatpush1.bf16.msra.mxu0 %v3297
        %3886 = vmatprep.subr.bf16.mxu0 0
        %3887 = vmatpush1.bf16.msra.mxu0 %v3296
        %3888 = vmatprep.subr.bf16.mxu0 0
        %3889 = vmatpush1.bf16.msra.mxu0 %v3295
        %3890 = vmatprep.subr.bf16.mxu0 0
        %3891 = vmatpush2.bf16.msra.mxu0 %v3310
        %3892 = vmatprep.subr.bf16.mxu0 0
        %3893 = vmatpush2.bf16.msra.mxu0 %v3309
        %3894 = vmatprep.subr.bf16.mxu0 0
        %3895 = vmatpush2.bf16.msra.mxu0 %v3308
        %3896 = vmatprep.subr.bf16.mxu0 0
        %3897 = vmatpush2.bf16.msra.mxu0 %v3307
        %3898 = vmatprep.subr.bf16.mxu0 0
        %3899 = vmatpush2.bf16.msra.mxu0 %v3306
        %3900 = vmatprep.subr.bf16.mxu0 0
        %3901 = vmatpush2.bf16.msra.mxu0 %v3305
        %3902 = vmatprep.subr.bf16.mxu0 0
        %3903 = vmatpush2.bf16.msra.mxu0 %v3304
        %3904 = vmatprep.subr.bf16.mxu0 0
        %3905 = vmatpush2.bf16.msra.mxu0 %v3303
        %3906 = vmatprep.mubr.bf16.mxu0 %v2678
        %3907 = vmatmul.mubr.bf16.gmra.mxu0 %v2677
        %v3908 = vpop.f32.mrf.mxu0
        %v3909 = vadd.f32 %v3748, %v3908
        %v3910 = vpop.f32.mrf.mxu0
        %v3911 = vpop.f32.mrf.mxu0
        %v3912 = vadd.f32 %v3751, %v3911
        %v3913 = vpop.f32.mrf.mxu0
        %3914 = vmatprep.mubr.bf16.mxu0 %v2687
        %3915 = vmatmul.mubr.bf16.gmra.mxu0 %v2686
        %v3916 = vpop.f32.mrf.mxu0
        %v3917 = vadd.f32 %v3756, %v3916
        %v3918 = vpop.f32.mrf.mxu0
        %v3919 = vpop.f32.mrf.mxu0
        %v3920 = vadd.f32 %v3759, %v3919
        %v3921 = vpop.f32.mrf.mxu0
        %3922 = vmatprep.mubr.bf16.mxu0 %v2696
        %3923 = vmatmul.mubr.bf16.gmra.mxu0 %v2695
        %v3924 = vpop.f32.mrf.mxu0
        %v3925 = vadd.f32 %v3764, %v3924
        %v3926 = vpop.f32.mrf.mxu0
        %v3927 = vpop.f32.mrf.mxu0
        %v3928 = vadd.f32 %v3767, %v3927
        %v3929 = vpop.f32.mrf.mxu0
        %3930 = vmatprep.mubr.bf16.mxu0 %v2705
        %3931 = vmatmul.mubr.bf16.gmra.mxu0 %v2704
        %v3932 = vpop.f32.mrf.mxu0
        %v3933 = vadd.f32 %v3772, %v3932
        %v3934 = vpop.f32.mrf.mxu0
        %v3935 = vpop.f32.mrf.mxu0
        %v3936 = vadd.f32 %v3775, %v3935
        %v3937 = vpop.f32.mrf.mxu0
        %3938 = vmatprep.mubr.bf16.mxu0 %v2714
        %3939 = vmatmul.mubr.bf16.gmra.mxu0 %v2713
        %v3940 = vpop.f32.mrf.mxu0
        %v3941 = vadd.f32 %v3780, %v3940
        %v3942 = vpop.f32.mrf.mxu0
        %v3943 = vpop.f32.mrf.mxu0
        %v3944 = vadd.f32 %v3783, %v3943
        %v3945 = vpop.f32.mrf.mxu0
        %3946 = vmatprep.mubr.bf16.mxu0 %v2723
        %3947 = vmatmul.mubr.bf16.gmra.mxu0 %v2722
        %v3948 = vpop.f32.mrf.mxu0
        %v3949 = vadd.f32 %v3788, %v3948
        %v3950 = vpop.f32.mrf.mxu0
        %v3951 = vpop.f32.mrf.mxu0
        %v3952 = vadd.f32 %v3791, %v3951
        %v3953 = vpop.f32.mrf.mxu0
        %3954 = vmatprep.mubr.bf16.mxu0 %v2732
        %3955 = vmatmul.mubr.bf16.gmra.mxu0 %v2731
        %v3956 = vpop.f32.mrf.mxu0
        %v3957 = vadd.f32 %v3796, %v3956
        %v3958 = vpop.f32.mrf.mxu0
        %v3959 = vpop.f32.mrf.mxu0
        %v3960 = vadd.f32 %v3799, %v3959
        %v3961 = vpop.f32.mrf.mxu0
        %3962 = vmatprep.mubr.bf16.mxu0 %v2741
        %3963 = vmatmul.mubr.bf16.gmra.mxu0 %v2740
        %v3964 = vpop.f32.mrf.mxu0
        %v3965 = vadd.f32 %v3804, %v3964
        %v3966 = vpop.f32.mrf.mxu0
        %v3967 = vpop.f32.mrf.mxu0
        %v3968 = vadd.f32 %v3807, %v3967
        %v3969 = vpop.f32.mrf.mxu0
        %3970 = vmatprep.mubr.bf16.mxu0 %v2750
        %3971 = vmatmul.mubr.bf16.gmra.mxu0 %v2749
        %v3972 = vpop.f32.mrf.mxu0
        %v3973 = vadd.f32 %v3812, %v3972
        %v3974 = vpop.f32.mrf.mxu0
        %v3975 = vpop.f32.mrf.mxu0
        %v3976 = vadd.f32 %v3815, %v3975
        %v3977 = vpop.f32.mrf.mxu0
        %3978 = vmatprep.mubr.bf16.mxu0 %v2759
        %3979 = vmatmul.mubr.bf16.gmra.mxu0 %v2758
        %v3980 = vpop.f32.mrf.mxu0
        %v3981 = vadd.f32 %v3820, %v3980
        %v3982 = vpop.f32.mrf.mxu0
        %v3983 = vpop.f32.mrf.mxu0
        %v3984 = vadd.f32 %v3823, %v3983
        %v3985 = vpop.f32.mrf.mxu0
        %3986 = vmatprep.mubr.bf16.mxu0 %v2768
        %3987 = vmatmul.mubr.bf16.gmra.mxu0 %v2767
        %v3988 = vpop.f32.mrf.mxu0
        %v3989 = vadd.f32 %v3828, %v3988
        %v3990 = vpop.f32.mrf.mxu0
        %v3991 = vpop.f32.mrf.mxu0
        %v3992 = vadd.f32 %v3831, %v3991
        %v3993 = vpop.f32.mrf.mxu0
        %3994 = vmatprep.mubr.bf16.mxu0 %v2777
        %3995 = vmatmul.mubr.bf16.gmra.mxu0 %v2776
        %v3996 = vpop.f32.mrf.mxu0
        %v3997 = vadd.f32 %v3836, %v3996
        %v3998 = vpop.f32.mrf.mxu0
        %v3999 = vpop.f32.mrf.mxu0
        %v4000 = vadd.f32 %v3839, %v3999
        %v4001 = vpop.f32.mrf.mxu0
        %4002 = vmatprep.mubr.bf16.mxu0 %v2786
        %4003 = vmatmul.mubr.bf16.gmra.mxu0 %v2785
        %v4004 = vpop.f32.mrf.mxu0
        %v4005 = vadd.f32 %v3844, %v4004
        %v4006 = vpop.f32.mrf.mxu0
        %v4007 = vpop.f32.mrf.mxu0
        %v4008 = vadd.f32 %v3847, %v4007
        %v4009 = vpop.f32.mrf.mxu0
        %4010 = vmatprep.mubr.bf16.mxu0 %v2795
        %4011 = vmatmul.mubr.bf16.gmra.mxu0 %v2794
        %v4012 = vpop.f32.mrf.mxu0
        %v4013 = vadd.f32 %v3852, %v4012
        %v4014 = vpop.f32.mrf.mxu0
        %v4015 = vpop.f32.mrf.mxu0
        %v4016 = vadd.f32 %v3855, %v4015
        %v4017 = vpop.f32.mrf.mxu0
        %4018 = vmatprep.mubr.bf16.mxu0 %v2804
        %4019 = vmatmul.mubr.bf16.gmra.mxu0 %v2803
        %v4020 = vpop.f32.mrf.mxu0
        %v4021 = vadd.f32 %v3860, %v4020
        %v4022 = vpop.f32.mrf.mxu0
        %v4023 = vpop.f32.mrf.mxu0
        %v4024 = vadd.f32 %v3863, %v4023
        %v4025 = vpop.f32.mrf.mxu0
        %4026 = vmatprep.mubr.bf16.mxu0 %v2813
        %4027 = vmatmul.mubr.bf16.gmra.mxu0 %v2812
        %v4028 = vpop.f32.mrf.mxu0
        %v4029 = vadd.f32 %v3868, %v4028
        %v4030 = vpop.f32.mrf.mxu0
        %v4031 = vpop.f32.mrf.mxu0
        %v4032 = vadd.f32 %v3871, %v4031
        %v4033 = vpop.f32.mrf.mxu0
        %4034 = vdwg.mxu0
        %4035 = vmatprep.subr.bf16.mxu0 0
        %4036 = vmatpush1.bf16.msra.mxu0 %v3318
        %4037 = vmatprep.subr.bf16.mxu0 0
        %4038 = vmatpush1.bf16.msra.mxu0 %v3317
        %4039 = vmatprep.subr.bf16.mxu0 0
        %4040 = vmatpush1.bf16.msra.mxu0 %v3316
        %4041 = vmatprep.subr.bf16.mxu0 0
        %4042 = vmatpush1.bf16.msra.mxu0 %v3315
        %4043 = vmatprep.subr.bf16.mxu0 0
        %4044 = vmatpush1.bf16.msra.mxu0 %v3314
        %4045 = vmatprep.subr.bf16.mxu0 0
        %4046 = vmatpush1.bf16.msra.mxu0 %v3313
        %4047 = vmatprep.subr.bf16.mxu0 0
        %4048 = vmatpush1.bf16.msra.mxu0 %v3312
        %4049 = vmatprep.subr.bf16.mxu0 0
        %4050 = vmatpush1.bf16.msra.mxu0 %v3311
        %4051 = vmatprep.subr.bf16.mxu0 0
        %4052 = vmatpush2.bf16.msra.mxu0 0
        %4053 = vmatprep.subr.bf16.mxu0 0
        %4054 = vmatpush2.bf16.msra.mxu0 0
        %4055 = vmatprep.subr.bf16.mxu0 0
        %4056 = vmatpush2.bf16.msra.mxu0 0
        %4057 = vmatprep.subr.bf16.mxu0 0
        %4058 = vmatpush2.bf16.msra.mxu0 0
        %4059 = vmatprep.subr.bf16.mxu0 0
        %4060 = vmatpush2.bf16.msra.mxu0 0
        %4061 = vmatprep.subr.bf16.mxu0 0
        %4062 = vmatpush2.bf16.msra.mxu0 0
        %4063 = vmatprep.subr.bf16.mxu0 0
        %4064 = vmatpush2.bf16.msra.mxu0 0
        %4065 = vmatprep.subr.bf16.mxu0 0
        %4066 = vmatpush2.bf16.msra.mxu0 0
        %4067 = vmatprep.mubr.bf16.mxu0 0
        %4068 = vmatmul.mubr.bf16.gmra.mxu0 %v2679
        %v4069 = vpop.f32.mrf.mxu0
        %v4070 = vadd.f32 %v3909, %v4069
        %v4071 = vpop.f32.mrf.mxu0
        %v4072 = vpop.f32.mrf.mxu0
        %v4073 = vadd.f32 %v3912, %v4072
        %v4074 = vpop.f32.mrf.mxu0
        %4075 = vmatprep.mubr.bf16.mxu0 0
        %4076 = vmatmul.mubr.bf16.gmra.mxu0 %v2688
        %v4077 = vpop.f32.mrf.mxu0
        %v4078 = vadd.f32 %v3917, %v4077
        %v4079 = vpop.f32.mrf.mxu0
        %v4080 = vpop.f32.mrf.mxu0
        %v4081 = vadd.f32 %v3920, %v4080
        %v4082 = vpop.f32.mrf.mxu0
        %4083 = vmatprep.mubr.bf16.mxu0 0
        %4084 = vmatmul.mubr.bf16.gmra.mxu0 %v2697
        %v4085 = vpop.f32.mrf.mxu0
        %v4086 = vadd.f32 %v3925, %v4085
        %v4087 = vpop.f32.mrf.mxu0
        %v4088 = vpop.f32.mrf.mxu0
        %v4089 = vadd.f32 %v3928, %v4088
        %v4090 = vpop.f32.mrf.mxu0
        %4091 = vmatprep.mubr.bf16.mxu0 0
        %4092 = vmatmul.mubr.bf16.gmra.mxu0 %v2706
        %v4093 = vpop.f32.mrf.mxu0
        %v4094 = vadd.f32 %v3933, %v4093
        %v4095 = vpop.f32.mrf.mxu0
        %v4096 = vpop.f32.mrf.mxu0
        %v4097 = vadd.f32 %v3936, %v4096
        %v4098 = vpop.f32.mrf.mxu0
        %4099 = vmatprep.mubr.bf16.mxu0 0
        %4100 = vmatmul.mubr.bf16.gmra.mxu0 %v2715
        %v4101 = vpop.f32.mrf.mxu0
        %v4102 = vadd.f32 %v3941, %v4101
        %v4103 = vpop.f32.mrf.mxu0
        %v4104 = vpop.f32.mrf.mxu0
        %v4105 = vadd.f32 %v3944, %v4104
        %v4106 = vpop.f32.mrf.mxu0
        %4107 = vmatprep.mubr.bf16.mxu0 0
        %4108 = vmatmul.mubr.bf16.gmra.mxu0 %v2724
        %v4109 = vpop.f32.mrf.mxu0
        %v4110 = vadd.f32 %v3949, %v4109
        %v4111 = vpop.f32.mrf.mxu0
        %v4112 = vpop.f32.mrf.mxu0
        %v4113 = vadd.f32 %v3952, %v4112
        %v4114 = vpop.f32.mrf.mxu0
        %4115 = vmatprep.mubr.bf16.mxu0 0
        %4116 = vmatmul.mubr.bf16.gmra.mxu0 %v2733
        %v4117 = vpop.f32.mrf.mxu0
        %v4118 = vadd.f32 %v3957, %v4117
        %v4119 = vpop.f32.mrf.mxu0
        %v4120 = vpop.f32.mrf.mxu0
        %v4121 = vadd.f32 %v3960, %v4120
        %v4122 = vpop.f32.mrf.mxu0
        %4123 = vmatprep.mubr.bf16.mxu0 0
        %4124 = vmatmul.mubr.bf16.gmra.mxu0 %v2742
        %v4125 = vpop.f32.mrf.mxu0
        %v4126 = vadd.f32 %v3965, %v4125
        %v4127 = vpop.f32.mrf.mxu0
        %v4128 = vpop.f32.mrf.mxu0
        %v4129 = vadd.f32 %v3968, %v4128
        %v4130 = vpop.f32.mrf.mxu0
        %4131 = vmatprep.mubr.bf16.mxu0 0
        %4132 = vmatmul.mubr.bf16.gmra.mxu0 %v2751
        %v4133 = vpop.f32.mrf.mxu0
        %v4134 = vadd.f32 %v3973, %v4133
        %v4135 = vpop.f32.mrf.mxu0
        %v4136 = vpop.f32.mrf.mxu0
        %v4137 = vadd.f32 %v3976, %v4136
        %v4138 = vpop.f32.mrf.mxu0
        %4139 = vmatprep.mubr.bf16.mxu0 0
        %4140 = vmatmul.mubr.bf16.gmra.mxu0 %v2760
        %v4141 = vpop.f32.mrf.mxu0
        %v4142 = vadd.f32 %v3981, %v4141
        %v4143 = vpop.f32.mrf.mxu0
        %v4144 = vpop.f32.mrf.mxu0
        %v4145 = vadd.f32 %v3984, %v4144
        %v4146 = vpop.f32.mrf.mxu0
        %4147 = vmatprep.mubr.bf16.mxu0 0
        %4148 = vmatmul.mubr.bf16.gmra.mxu0 %v2769
        %v4149 = vpop.f32.mrf.mxu0
        %v4150 = vadd.f32 %v3989, %v4149
        %v4151 = vpop.f32.mrf.mxu0
        %v4152 = vpop.f32.mrf.mxu0
        %v4153 = vadd.f32 %v3992, %v4152
        %v4154 = vpop.f32.mrf.mxu0
        %4155 = vmatprep.mubr.bf16.mxu0 0
        %4156 = vmatmul.mubr.bf16.gmra.mxu0 %v2778
        %v4157 = vpop.f32.mrf.mxu0
        %v4158 = vadd.f32 %v3997, %v4157
        %v4159 = vpop.f32.mrf.mxu0
        %v4160 = vpop.f32.mrf.mxu0
        %v4161 = vadd.f32 %v4000, %v4160
        %v4162 = vpop.f32.mrf.mxu0
        %4163 = vmatprep.mubr.bf16.mxu0 0
        %4164 = vmatmul.mubr.bf16.gmra.mxu0 %v2787
        %v4165 = vpop.f32.mrf.mxu0
        %v4166 = vadd.f32 %v4005, %v4165
        %v4167 = vpop.f32.mrf.mxu0
        %v4168 = vpop.f32.mrf.mxu0
        %v4169 = vadd.f32 %v4008, %v4168
        %v4170 = vpop.f32.mrf.mxu0
        %4171 = vmatprep.mubr.bf16.mxu0 0
        %4172 = vmatmul.mubr.bf16.gmra.mxu0 %v2796
        %v4173 = vpop.f32.mrf.mxu0
        %v4174 = vadd.f32 %v4013, %v4173
        %v4175 = vpop.f32.mrf.mxu0
        %v4176 = vpop.f32.mrf.mxu0
        %v4177 = vadd.f32 %v4016, %v4176
        %v4178 = vpop.f32.mrf.mxu0
        %4179 = vmatprep.mubr.bf16.mxu0 0
        %4180 = vmatmul.mubr.bf16.gmra.mxu0 %v2805
        %v4181 = vpop.f32.mrf.mxu0
        %v4182 = vadd.f32 %v4021, %v4181
        %v4183 = vpop.f32.mrf.mxu0
        %v4184 = vpop.f32.mrf.mxu0
        %v4185 = vadd.f32 %v4024, %v4184
        %v4186 = vpop.f32.mrf.mxu0
        %4187 = vmatprep.mubr.bf16.mxu0 0
        %4188 = vmatmul.mubr.bf16.gmra.mxu0 %v2814
        %v4189 = vpop.f32.mrf.mxu0
        %v4190 = vadd.f32 %v4029, %v4189
        %v4191 = vpop.f32.mrf.mxu0
        %v4192 = vpop.f32.mrf.mxu0
        %v4193 = vadd.f32 %v4032, %v4192
        %v4194 = vpop.f32.mrf.mxu0
        %4195 = vdwg.mxu0
        %v4196 = vstv %s262
        %v4197 = vmul.f32 %v4070, %v4196
        %v4198 = vmul.f32 %v4073, %v4196
        %v4199 = vmul.f32 %v4078, %v4196
        %v4200 = vmul.f32 %v4081, %v4196
        %v4201 = vmul.f32 %v4086, %v4196
        %v4202 = vmul.f32 %v4089, %v4196
        %v4203 = vmul.f32 %v4094, %v4196
        %v4204 = vmul.f32 %v4097, %v4196
        %v4205 = vmul.f32 %v4102, %v4196
        %v4206 = vmul.f32 %v4105, %v4196
        %v4207 = vmul.f32 %v4110, %v4196
        %v4208 = vmul.f32 %v4113, %v4196
        %v4209 = vmul.f32 %v4118, %v4196
        %v4210 = vmul.f32 %v4121, %v4196
        %v4211 = vmul.f32 %v4126, %v4196
        %v4212 = vmul.f32 %v4129, %v4196
        %v4213 = vmul.f32 %v4134, %v4196
        %v4214 = vmul.f32 %v4137, %v4196
        %v4215 = vmul.f32 %v4142, %v4196
        %v4216 = vmul.f32 %v4145, %v4196
        %v4217 = vmul.f32 %v4150, %v4196
        %v4218 = vmul.f32 %v4153, %v4196
        %v4219 = vmul.f32 %v4158, %v4196
        %v4220 = vmul.f32 %v4161, %v4196
        %v4221 = vmul.f32 %v4166, %v4196
        %v4222 = vmul.f32 %v4169, %v4196
        %v4223 = vmul.f32 %v4174, %v4196
        %v4224 = vmul.f32 %v4177, %v4196
        %v4225 = vmul.f32 %v4182, %v4196
        %v4226 = vmul.f32 %v4185, %v4196
        %v4227 = vmul.f32 %v4190, %v4196
        %v4228 = vmul.f32 %v4193, %v4196
        %v4229 = vstv %s261
        %v4230 = vadd.f32 %v4197, %v4229
        %v4231 = vadd.f32 %v4198, %v4229
        %v4232 = vadd.f32 %v4199, %v4229
        %v4233 = vadd.f32 %v4200, %v4229
        %v4234 = vadd.f32 %v4201, %v4229
        %v4235 = vadd.f32 %v4202, %v4229
        %v4236 = vadd.f32 %v4203, %v4229
        %v4237 = vadd.f32 %v4204, %v4229
        %v4238 = vadd.f32 %v4205, %v4229
        %v4239 = vadd.f32 %v4206, %v4229
        %v4240 = vadd.f32 %v4207, %v4229
        %v4241 = vadd.f32 %v4208, %v4229
        %v4242 = vadd.f32 %v4209, %v4229
        %v4243 = vadd.f32 %v4210, %v4229
        %v4244 = vadd.f32 %v4211, %v4229
        %v4245 = vadd.f32 %v4212, %v4229
        %v4246 = vadd.f32 %v4213, %v4229
        %v4247 = vadd.f32 %v4214, %v4229
        %v4248 = vadd.f32 %v4215, %v4229
        %v4249 = vadd.f32 %v4216, %v4229
        %v4250 = vadd.f32 %v4217, %v4229
        %v4251 = vadd.f32 %v4218, %v4229
        %v4252 = vadd.f32 %v4219, %v4229
        %v4253 = vadd.f32 %v4220, %v4229
        %v4254 = vadd.f32 %v4221, %v4229
        %v4255 = vadd.f32 %v4222, %v4229
        %v4256 = vadd.f32 %v4223, %v4229
        %v4257 = vadd.f32 %v4224, %v4229
        %v4258 = vadd.f32 %v4225, %v4229
        %v4259 = vadd.f32 %v4226, %v4229
        %v4260 = vadd.f32 %v4227, %v4229
        %v4261 = vadd.f32 %v4228, %v4229
        %v4262 = vadd.f32 %v4230, %v371
        %v4263 = vadd.f32 %v4231, %v372
        %v4264 = vadd.f32 %v4232, %v373
        %v4265 = vadd.f32 %v4233, %v374
        %v4266 = vadd.f32 %v4234, %v375
        %v4267 = vadd.f32 %v4235, %v376
        %v4268 = vadd.f32 %v4236, %v377
        %v4269 = vadd.f32 %v4237, %v378
        %v4270 = vadd.f32 %v4238, %v379
        %v4271 = vadd.f32 %v4239, %v380
        %v4272 = vadd.f32 %v4240, %v381
        %v4273 = vadd.f32 %v4241, %v382
        %v4274 = vadd.f32 %v4242, %v383
        %v4275 = vadd.f32 %v4243, %v384
        %v4276 = vadd.f32 %v4244, %v385
        %v4277 = vadd.f32 %v4245, %v386
        %v4278 = vadd.f32 %v4246, %v387
        %v4279 = vadd.f32 %v4247, %v388
        %v4280 = vadd.f32 %v4248, %v389
        %v4281 = vadd.f32 %v4249, %v390
        %v4282 = vadd.f32 %v4250, %v391
        %v4283 = vadd.f32 %v4251, %v392
        %v4284 = vadd.f32 %v4252, %v393
        %v4285 = vadd.f32 %v4253, %v394
        %v4286 = vadd.f32 %v4254, %v395
        %v4287 = vadd.f32 %v4255, %v396
        %v4288 = vadd.f32 %v4256, %v397
        %v4289 = vadd.f32 %v4257, %v398
        %v4290 = vadd.f32 %v4258, %v399
        %v4291 = vadd.f32 %v4259, %v400
        %v4292 = vadd.f32 %v4260, %v401
        %v4293 = vadd.f32 %v4261, %v402
        %v4294 = vmax.f32 %v4262, 0.0
        %v4295 = vmax.f32 %v4263, 0.0
        %v4296 = vmax.f32 %v4264, 0.0
        %v4297 = vmax.f32 %v4265, 0.0
        %v4298 = vmax.f32 %v4266, 0.0
        %v4299 = vmax.f32 %v4267, 0.0
        %v4300 = vmax.f32 %v4268, 0.0
        %v4301 = vmax.f32 %v4269, 0.0
        %v4302 = vmax.f32 %v4270, 0.0
        %v4303 = vmax.f32 %v4271, 0.0
        %v4304 = vmax.f32 %v4272, 0.0
        %v4305 = vmax.f32 %v4273, 0.0
        %v4306 = vmax.f32 %v4274, 0.0
        %v4307 = vmax.f32 %v4275, 0.0
        %v4308 = vmax.f32 %v4276, 0.0
        %v4309 = vmax.f32 %v4277, 0.0
        %v4310 = vmax.f32 %v4278, 0.0
        %v4311 = vmax.f32 %v4279, 0.0
        %v4312 = vmax.f32 %v4280, 0.0
        %v4313 = vmax.f32 %v4281, 0.0
        %v4314 = vmax.f32 %v4282, 0.0
        %v4315 = vmax.f32 %v4283, 0.0
        %v4316 = vmax.f32 %v4284, 0.0
        %v4317 = vmax.f32 %v4285, 0.0
        %v4318 = vmax.f32 %v4286, 0.0
        %v4319 = vmax.f32 %v4287, 0.0
        %v4320 = vmax.f32 %v4288, 0.0
        %v4321 = vmax.f32 %v4289, 0.0
        %v4322 = vmax.f32 %v4290, 0.0
        %v4323 = vmax.f32 %v4291, 0.0
        %v4324 = vmax.f32 %v4292, 0.0
        %v4325 = vmax.f32 %v4293, 0.0
        %4326 = vst [vmem:[%s256] sm:$0xff] %v4294
        %4327 = vst [vmem:[%s256 + $0x8] sm:$0xff] %v4295
        %4328 = vst [vmem:[%s256 + $0x10] sm:$0xff] %v4296
        %4329 = vst [vmem:[%s256 + $0x18] sm:$0xff] %v4297
        %4330 = vst [vmem:[%s256 + $0x20] sm:$0xff] %v4298
        %4331 = vst [vmem:[%s256 + $0x28] sm:$0xff] %v4299
        %4332 = vst [vmem:[%s256 + $0x30] sm:$0xff] %v4300
        %4333 = vst [vmem:[%s256 + $0x38] sm:$0xff] %v4301
        %4334 = vst [vmem:[%s256 + $0x40] sm:$0xff] %v4302
        %4335 = vst [vmem:[%s256 + $0x48] sm:$0xff] %v4303
        %4336 = vst [vmem:[%s256 + $0x50] sm:$0xff] %v4304
        %4337 = vst [vmem:[%s256 + $0x58] sm:$0xff] %v4305
        %4338 = vst [vmem:[%s256 + $0x60] sm:$0xff] %v4306
        %4339 = vst [vmem:[%s256 + $0x68] sm:$0xff] %v4307
        %4340 = vst [vmem:[%s256 + $0x70] sm:$0xff] %v4308
        %4341 = vst [vmem:[%s256 + $0x78] sm:$0xff] %v4309
        %4342 = vst [vmem:[%s256 + $0x80] sm:$0xff] %v4310
        %4343 = vst [vmem:[%s256 + $0x88] sm:$0xff] %v4311
        %4344 = vst [vmem:[%s256 + $0x90] sm:$0xff] %v4312
        %4345 = vst [vmem:[%s256 + $0x98] sm:$0xff] %v4313
        %4346 = vst [vmem:[%s256 + $0xa0] sm:$0xff] %v4314
        %4347 = vst [vmem:[%s256 + $0xa8] sm:$0xff] %v4315
        %4348 = vst [vmem:[%s256 + $0xb0] sm:$0xff] %v4316
        %4349 = vst [vmem:[%s256 + $0xb8] sm:$0xff] %v4317
        %4350 = vst [vmem:[%s256 + $0xc0] sm:$0xff] %v4318
        %4351 = vst [vmem:[%s256 + $0xc8] sm:$0xff] %v4319
        %4352 = vst [vmem:[%s256 + $0xd0] sm:$0xff] %v4320
        %4353 = vst [vmem:[%s256 + $0xd8] sm:$0xff] %v4321
        %4354 = vst [vmem:[%s256 + $0xe0] sm:$0xff] %v4322
        %4355 = vst [vmem:[%s256 + $0xe8] sm:$0xff] %v4323
        %4356 = vst [vmem:[%s256 + $0xf0] sm:$0xff] %v4324
        %4357 = vst [vmem:[%s256 + $0xf8] sm:$0xff] %v4325
        %s4358 = sand.u32 %s120, 1
        %s4359 = scalar_lea.sflag [#allocation6], %s4358
        %s4360 = sand.u32 %s120, 1
        %s4361 = smul.addr %s4360, 256
        %s4362 = scalar_lea.vmem [#allocation12], %s4361
        // Predicated region
        $region53: #{tpu_custom_call.1} parent=35 // pred_check
          %p4363 = pneg %p130
        $region54: #{tpu_custom_call.1} parent=35 // pred_check_branch
          %4365 = sbr.rel (%p4363) target = $region56
        $region55: #{tpu_custom_call.1} parent=35 // pred_region
          %s4367 = ssub.s32 4096, 4096
          %4368 = vsyncadd %s4359, %s4367
          %s4369 = smul.addr %s23, 32
          %s4370 = smul.addr %s4369, 128
          %s4371 = scalar_lea.hbm %s4, %s4370
          %s4372 = sshll.u32 %s4362, 4
          %s4373 = int_to_ptr.vmem [resolvable:$true] %s4372
          %4378 = dma.vmem_to_hbm [thread:$0]  %s4373, 4096, %s4371, %s4359, 128, 128, 8
        $region56: #{tpu_custom_call.1} parent=35 // pred_fallthru
          _
      $region36: #{tpu_custom_call.1} parent=5 // pred_fallthru
        _
      %p4379 = scmp.le.s32.totalorder 2, %s18
      // Predicated region
      $region57: #{tpu_custom_call.1} parent=5 // pred_check
        %p4380 = pneg %p4379
      $region58: #{tpu_custom_call.1} parent=5 // pred_check_branch
        %4382 = sbr.rel (%p4380) target = $region60
      $region59: #{tpu_custom_call.1} parent=5 // pred_region
        %s4383 = ssub.s32 %s18, 2
        // Predicated region
        $region61: #{tpu_custom_call.1} parent=59 // pred_check
          %p4384 = pneg %p136
        $region62: #{tpu_custom_call.1} parent=59 // pred_check_branch
          %4386 = sbr.rel (%p4384) target = $region64
        $region63: #{tpu_custom_call.1} parent=59 // pred_region
          %s4387 = sand.u32 %s121, 1
          %s4388 = scalar_lea.sflag [#allocation6], %s4387
          %s4389 = sand.u32 %s121, 1
          %s4390 = smul.addr %s4389, 256
          %s4391 = scalar_lea.vmem [#allocation12], %s4390
          %4392 = dma.done %s4388, 4096
        $region64: #{tpu_custom_call.1} parent=59 // pred_fallthru
          _
      $region60: #{tpu_custom_call.1} parent=5 // pred_fallthru
        _
    $region6: #{tpu_custom_call.1} parent=1 // loop_footer
      %s22 = sadd.s32 1, %s18
    $region7: #{tpu_custom_call.1} parent=1 // loop_footer_branch
      %17 = sbr.rel target = $region3
    $region8: #{tpu_custom_call.1} parent=1 // loop_exit
      _
    %4393 = vsyncpa [#allocation5], 1
    %s4394 = scalar_lea.sflag [#allocation5], 1
    %4395 = vsyncpa %s4394, 1
    %4396 = vsyncpa [#allocation10], 1
    %4397 = vsyncpa [#allocation6], 1
    %s4398 = scalar_lea.sflag [#allocation6], 1
    %4399 = vsyncpa %s4398, 1
    %4400 = vsyncpa [#allocation7], 1
    %s4401 = scalar_lea.sflag [#allocation7], 1
    %4402 = vsyncpa %s4401, 1

</llo_original>
